<compile_context>
chip_gen: v6e
topology: v6e:2x2x1
jax: 0.10.0
libtpu: 0.0.40
codegen_flags: <defaults>
</compile_context>

<pallas_src>
import jax
import jax.numpy as jnp
from jax.experimental import pallas as pl
from jax.experimental.pallas import tpu as pltpu

_LANE_PAD = 128  # per-branch padded Cout -> lane-dense accumulator/output


def _gated_conv_glu_kernel(x_ref, w_ref, b_ref, o_ref):
    # x_ref: [1, Hp, Wp, Cin]    bf16 padded NHWC image (whole image; block index
    #                            depends only on the batch axis, so it stays
    #                            resident across all H-blocks of that image)
    # w_ref: [KH, KW, Cin, 2*CP] bf16 fused weights = [linear | gate], each
    #                            branch zero-padded to CP (=128) output lanes
    # b_ref: [1, 2*CP]           f32 fused bias
    # o_ref: [1, TH, W, CP]      f32 gated output block (lane-dense)
    i = pl.program_id(1)                      # H-block index
    _, th, w_out, cp = o_ref.shape
    kh, kw, cin, _ = w_ref.shape
    m = th * w_out
    h0 = i * th

    # Convolution as kh*kw shifted [M, Cin] x [Cin, 2*CP] matmuls, accumulated
    # in f32.  Both branches share the same LHS (fused wide RHS).
    acc = jnp.zeros((m, 2 * cp), jnp.float32)
    for dh in range(kh):
        for dw in range(kw):
            slab = x_ref[0, pl.ds(h0 + dh, th), pl.ds(dw, w_out), :]  # [TH, W, Cin]
            acc += jnp.dot(slab.reshape(m, cin), w_ref[dh, dw],
                           preferred_element_type=jnp.float32)

    acc += b_ref[...]                          # single fused bias add
    lin = acc[:, :cp]                          # split at the 128-lane boundary
    gate = acc[:, cp:]
    gated = lin * jax.nn.sigmoid(gate)         # f32 VPU mul + EUP sigmoid
    o_ref[...] = gated.reshape(1, th, w_out, cp)


def gated_conv2d_glu(x, w_lin, b_lin, w_gate, b_gate, *, max_rows_per_block=2048):
    """x: [N, Cin, H, W]; w_*: [Cout, Cin, kh, kw]; b_*: [Cout] -> [N, Cout, H, W]."""
    n, cin, h, w = x.shape
    cout, cin_w, kh, kw = w_lin.shape
    assert cin_w == cin
    cp = _LANE_PAD
    assert cout <= cp, "Cout > 128 would need tiling over output channels"

    ph, pw = kh // 2, kw // 2                   # "same" padding, stride 1, odd kernel
    hp, wp = h + 2 * ph, w + 2 * pw

    # --- plain-JAX data prep (no 9x im2col expansion, just a pad + layout) ---
    x_nhwc = jnp.transpose(x, (0, 2, 3, 1))
    x_pad = jnp.pad(x_nhwc, ((0, 0), (ph, ph), (pw, pw), (0, 0))).astype(jnp.bfloat16)

    def _prep_w(wt):                            # [Cout,Cin,KH,KW] -> [KH,KW,Cin,CP]
        wt = jnp.transpose(wt, (2, 3, 1, 0))
        return jnp.pad(wt, ((0, 0), (0, 0), (0, 0), (0, cp - cout)))

    w_fused = jnp.concatenate([_prep_w(w_lin), _prep_w(w_gate)],
                              axis=-1).astype(jnp.bfloat16)           # [KH,KW,Cin,2CP]
    b_fused = jnp.concatenate([jnp.pad(b_lin, (0, cp - cout)),
                               jnp.pad(b_gate, (0, cp - cout))]
                              ).reshape(1, 2 * cp).astype(jnp.float32)

    # H-tile: largest divisor of H with TH*W <= max_rows_per_block rows.
    # Keeps the f32 [TH*W, 128] output block ~<=1 MiB so double-buffering fits
    # comfortably within v7x's smaller (64 MiB / 32 MiB scoped) VMEM as well as
    # v5e/v6e, while still amortizing per-grid-step overhead.
    th = 1
    for cand in range(1, h + 1):
        if h % cand == 0 and cand * w <= max_rows_per_block:
            th = cand
    grid = (n, h // th)

    m_total = n * h * w
    cost = pl.CostEstimate(
        flops=2 * m_total * (cin * kh * kw) * (2 * cp) + 3 * m_total * cp,
        transcendentals=m_total * cp,
        bytes_accessed=(x_pad.size * 2 + w_fused.size * 2 + b_fused.size * 4
                        + m_total * cp * 4),
    )

    out_nhwc = pl.pallas_call(
        _gated_conv_glu_kernel,
        out_shape=jax.ShapeDtypeStruct((n, h, w, cp), jnp.float32),
        grid=grid,
        in_specs=[
            # whole padded image per batch index (resident across H-blocks)
            pl.BlockSpec((1, hp, wp, cin), lambda nb, ib: (nb, 0, 0, 0)),
            # fused weights / bias: resident across the whole grid
            pl.BlockSpec((kh, kw, cin, 2 * cp), lambda nb, ib: (0, 0, 0, 0)),
            pl.BlockSpec((1, 2 * cp), lambda nb, ib: (0, 0)),
        ],
        out_specs=pl.BlockSpec((1, th, w, cp), lambda nb, ib: (nb, ib, 0, 0)),
        compiler_params=pltpu.CompilerParams(
            dimension_semantics=("parallel", "parallel")),
        cost_estimate=cost,
    )(x_pad, w_fused, b_fused)

    out = out_nhwc[:, :, :, :cout]              # drop lane padding
    return jnp.transpose(out, (0, 3, 1, 2))     # NHWC -> NCHW


def _reference(x, w_lin, b_lin, w_gate, b_gate):
    dn = jax.lax.conv_dimension_numbers(x.shape, w_lin.shape, ("NCHW", "OIHW", "NCHW"))
    lin = jax.lax.conv_general_dilated(x, w_lin, (1, 1), "SAME", dimension_numbers=dn)
    lin = lin + b_lin.reshape(1, -1, 1, 1)
    gate = jax.lax.conv_general_dilated(x, w_gate, (1, 1), "SAME", dimension_numbers=dn)
    gate = gate + b_gate.reshape(1, -1, 1, 1)
    return lin * jax.nn.sigmoid(gate)


if __name__ == "__main__":
    key = jax.random.PRNGKey(0)
    k_x, k_wl, k_bl, k_wg, k_bg = jax.random.split(key, 5)

    N, Cin, H, W = 2, 4, 16, 16
    Cout, KH, KW = 8, 3, 3

    x = jax.random.normal(k_x, (N, Cin, H, W), dtype=jnp.float32)
    fan_in = Cin * KH * KW
    bound = 1.0 / (fan_in ** 0.5)
    w_lin = jax.random.uniform(k_wl, (Cout, Cin, KH, KW), jnp.float32, -bound, bound)
    b_lin = jax.random.uniform(k_bl, (Cout,), jnp.float32, -bound, bound)
    w_gate = jax.random.uniform(k_wg, (Cout, Cin, KH, KW), jnp.float32, -bound, bound)
    b_gate = jax.random.uniform(k_bg, (Cout,), jnp.float32, -bound, bound)

    out = gated_conv2d_glu(x, w_lin, b_lin, w_gate, b_gate)
    out = jax.block_until_ready(out)

    ref = _reference(x, w_lin, b_lin, w_gate, b_gate)
    assert out.shape == (N, Cout, H, W)
    # bf16 MXU inputs -> loosened tolerance vs f32 reference.
    assert jnp.max(jnp.abs(out - ref)) < 5e-2, "mismatch vs reference conv GLU"

    print("KERNEL_OK")
</pallas_src>

<mosaic_0001>
module attributes {stable_mosaic.version = 11 : i64} {
  func.func @_gated_conv_glu_kernel(%arg0: i32, %arg1: i32, %arg2: memref<1x18x18x4xbf16, #tpu.memory_space<vmem>>, %arg3: memref<3x3x4x256xbf16, #tpu.memory_space<vmem>>, %arg4: memref<1x256xf32, #tpu.memory_space<vmem>>, %arg5: memref<1x16x16x128xf32, #tpu.memory_space<vmem>>) attributes {dimension_semantics = [#tpu.dimension_semantics<parallel>, #tpu.dimension_semantics<parallel>], iteration_bounds = array<i64: 2, 1>, scalar_prefetch = 0 : i64, scratch_operands = 0 : i64, tpu.core_type = #tpu.core_type<tc>, window_params = [{transform_indices = @transform_0, window_bounds = array<i64: 1, 18, 18, 4>}, {pipeline_mode = #tpu.pipeline_mode<synchronous>, transform_indices = @transform_1, window_bounds = array<i64: 3, 3, 4, 256>}, {pipeline_mode = #tpu.pipeline_mode<synchronous>, transform_indices = @transform_2, window_bounds = array<i64: 1, 256>}, {transform_indices = @transform_3, window_bounds = array<i64: 1, 16, 16, 128>}]} {
    %c16_i32 = arith.constant 16 : i32
    %0 = arith.muli %arg1, %c16_i32 : i32
    %cst = arith.constant 0.000000e+00 : f32
    %1 = vector.broadcast %cst : f32 to vector<256x256xf32>
    %c0_i32 = arith.constant 0 : i32
    %2 = arith.addi %0, %c0_i32 : i32
    %c0 = arith.constant 0 : index
    %3 = arith.index_cast %2 : i32 to index
    %c0_0 = arith.constant 0 : index
    %c0_1 = arith.constant 0 : index
    %4 = vector.load %arg2[%c0, %3, %c0_0, %c0_1] : memref<1x18x18x4xbf16, #tpu.memory_space<vmem>>, vector<1x16x16x4xbf16>
    %5 = vector.shape_cast %4 : vector<1x16x16x4xbf16> to vector<16x16x4xbf16>
    %6 = vector.shape_cast %5 : vector<16x16x4xbf16> to vector<256x4xbf16>
    %c0_2 = arith.constant 0 : index
    %c0_3 = arith.constant 0 : index
    %c0_4 = arith.constant 0 : index
    %c0_5 = arith.constant 0 : index
    %7 = vector.load %arg3[%c0_2, %c0_3, %c0_4, %c0_5] : memref<3x3x4x256xbf16, #tpu.memory_space<vmem>>, vector<1x1x4x256xbf16>
    %8 = vector.shape_cast %7 : vector<1x1x4x256xbf16> to vector<4x256xbf16>
    %cst_6 = arith.constant dense<0.000000e+00> : vector<256x256xf32>
    %9 = tpu.matmul %6, %8, %cst_6 {dimension_numbers = #tpu.dot_dimension_numbers<[1], [0], [0], [1], [0, 0, 1, 1], [], []>} : vector<256x4xbf16>, vector<4x256xbf16>, vector<256x256xf32> -> vector<256x256xf32>
    %10 = arith.addf %1, %9 : vector<256x256xf32>
    %c0_i32_7 = arith.constant 0 : i32
    %11 = arith.addi %0, %c0_i32_7 : i32
    %c0_8 = arith.constant 0 : index
    %12 = arith.index_cast %11 : i32 to index
    %c1 = arith.constant 1 : index
    %c0_9 = arith.constant 0 : index
    %13 = vector.load %arg2[%c0_8, %12, %c1, %c0_9] : memref<1x18x18x4xbf16, #tpu.memory_space<vmem>>, vector<1x16x16x4xbf16>
    %14 = vector.shape_cast %13 : vector<1x16x16x4xbf16> to vector<16x16x4xbf16>
    %15 = vector.shape_cast %14 : vector<16x16x4xbf16> to vector<256x4xbf16>
    %c0_10 = arith.constant 0 : index
    %c1_11 = arith.constant 1 : index
    %c0_12 = arith.constant 0 : index
    %c0_13 = arith.constant 0 : index
    %16 = vector.load %arg3[%c0_10, %c1_11, %c0_12, %c0_13] : memref<3x3x4x256xbf16, #tpu.memory_space<vmem>>, vector<1x1x4x256xbf16>
    %17 = vector.shape_cast %16 : vector<1x1x4x256xbf16> to vector<4x256xbf16>
    %cst_14 = arith.constant dense<0.000000e+00> : vector<256x256xf32>
    %18 = tpu.matmul %15, %17, %cst_14 {dimension_numbers = #tpu.dot_dimension_numbers<[1], [0], [0], [1], [0, 0, 1, 1], [], []>} : vector<256x4xbf16>, vector<4x256xbf16>, vector<256x256xf32> -> vector<256x256xf32>
    %19 = arith.addf %10, %18 : vector<256x256xf32>
    %c0_i32_15 = arith.constant 0 : i32
    %20 = arith.addi %0, %c0_i32_15 : i32
    %c0_16 = arith.constant 0 : index
    %21 = arith.index_cast %20 : i32 to index
    %c2 = arith.constant 2 : index
    %c0_17 = arith.constant 0 : index
    %22 = vector.load %arg2[%c0_16, %21, %c2, %c0_17] : memref<1x18x18x4xbf16, #tpu.memory_space<vmem>>, vector<1x16x16x4xbf16>
    %23 = vector.shape_cast %22 : vector<1x16x16x4xbf16> to vector<16x16x4xbf16>
    %24 = vector.shape_cast %23 : vector<16x16x4xbf16> to vector<256x4xbf16>
    %c0_18 = arith.constant 0 : index
    %c2_19 = arith.constant 2 : index
    %c0_20 = arith.constant 0 : index
    %c0_21 = arith.constant 0 : index
    %25 = vector.load %arg3[%c0_18, %c2_19, %c0_20, %c0_21] : memref<3x3x4x256xbf16, #tpu.memory_space<vmem>>, vector<1x1x4x256xbf16>
    %26 = vector.shape_cast %25 : vector<1x1x4x256xbf16> to vector<4x256xbf16>
    %cst_22 = arith.constant dense<0.000000e+00> : vector<256x256xf32>
    %27 = tpu.matmul %24, %26, %cst_22 {dimension_numbers = #tpu.dot_dimension_numbers<[1], [0], [0], [1], [0, 0, 1, 1], [], []>} : vector<256x4xbf16>, vector<4x256xbf16>, vector<256x256xf32> -> vector<256x256xf32>
    %28 = arith.addf %19, %27 : vector<256x256xf32>
    %c1_i32 = arith.constant 1 : i32
    %29 = arith.addi %0, %c1_i32 : i32
    %c0_23 = arith.constant 0 : index
    %30 = arith.index_cast %29 : i32 to index
    %c0_24 = arith.constant 0 : index
    %c0_25 = arith.constant 0 : index
    %31 = vector.load %arg2[%c0_23, %30, %c0_24, %c0_25] : memref<1x18x18x4xbf16, #tpu.memory_space<vmem>>, vector<1x16x16x4xbf16>
    %32 = vector.shape_cast %31 : vector<1x16x16x4xbf16> to vector<16x16x4xbf16>
    %33 = vector.shape_cast %32 : vector<16x16x4xbf16> to vector<256x4xbf16>
    %c1_26 = arith.constant 1 : index
    %c0_27 = arith.constant 0 : index
    %c0_28 = arith.constant 0 : index
    %c0_29 = arith.constant 0 : index
    %34 = vector.load %arg3[%c1_26, %c0_27, %c0_28, %c0_29] : memref<3x3x4x256xbf16, #tpu.memory_space<vmem>>, vector<1x1x4x256xbf16>
    %35 = vector.shape_cast %34 : vector<1x1x4x256xbf16> to vector<4x256xbf16>
    %cst_30 = arith.constant dense<0.000000e+00> : vector<256x256xf32>
    %36 = tpu.matmul %33, %35, %cst_30 {dimension_numbers = #tpu.dot_dimension_numbers<[1], [0], [0], [1], [0, 0, 1, 1], [], []>} : vector<256x4xbf16>, vector<4x256xbf16>, vector<256x256xf32> -> vector<256x256xf32>
    %37 = arith.addf %28, %36 : vector<256x256xf32>
    %c1_i32_31 = arith.constant 1 : i32
    %38 = arith.addi %0, %c1_i32_31 : i32
    %c0_32 = arith.constant 0 : index
    %39 = arith.index_cast %38 : i32 to index
    %c1_33 = arith.constant 1 : index
    %c0_34 = arith.constant 0 : index
    %40 = vector.load %arg2[%c0_32, %39, %c1_33, %c0_34] : memref<1x18x18x4xbf16, #tpu.memory_space<vmem>>, vector<1x16x16x4xbf16>
    %41 = vector.shape_cast %40 : vector<1x16x16x4xbf16> to vector<16x16x4xbf16>
    %42 = vector.shape_cast %41 : vector<16x16x4xbf16> to vector<256x4xbf16>
    %c1_35 = arith.constant 1 : index
    %c1_36 = arith.constant 1 : index
    %c0_37 = arith.constant 0 : index
    %c0_38 = arith.constant 0 : index
    %43 = vector.load %arg3[%c1_35, %c1_36, %c0_37, %c0_38] : memref<3x3x4x256xbf16, #tpu.memory_space<vmem>>, vector<1x1x4x256xbf16>
    %44 = vector.shape_cast %43 : vector<1x1x4x256xbf16> to vector<4x256xbf16>
    %cst_39 = arith.constant dense<0.000000e+00> : vector<256x256xf32>
    %45 = tpu.matmul %42, %44, %cst_39 {dimension_numbers = #tpu.dot_dimension_numbers<[1], [0], [0], [1], [0, 0, 1, 1], [], []>} : vector<256x4xbf16>, vector<4x256xbf16>, vector<256x256xf32> -> vector<256x256xf32>
    %46 = arith.addf %37, %45 : vector<256x256xf32>
    %c1_i32_40 = arith.constant 1 : i32
    %47 = arith.addi %0, %c1_i32_40 : i32
    %c0_41 = arith.constant 0 : index
    %48 = arith.index_cast %47 : i32 to index
    %c2_42 = arith.constant 2 : index
    %c0_43 = arith.constant 0 : index
    %49 = vector.load %arg2[%c0_41, %48, %c2_42, %c0_43] : memref<1x18x18x4xbf16, #tpu.memory_space<vmem>>, vector<1x16x16x4xbf16>
    %50 = vector.shape_cast %49 : vector<1x16x16x4xbf16> to vector<16x16x4xbf16>
    %51 = vector.shape_cast %50 : vector<16x16x4xbf16> to vector<256x4xbf16>
    %c1_44 = arith.constant 1 : index
    %c2_45 = arith.constant 2 : index
    %c0_46 = arith.constant 0 : index
    %c0_47 = arith.constant 0 : index
    %52 = vector.load %arg3[%c1_44, %c2_45, %c0_46, %c0_47] : memref<3x3x4x256xbf16, #tpu.memory_space<vmem>>, vector<1x1x4x256xbf16>
    %53 = vector.shape_cast %52 : vector<1x1x4x256xbf16> to vector<4x256xbf16>
    %cst_48 = arith.constant dense<0.000000e+00> : vector<256x256xf32>
    %54 = tpu.matmul %51, %53, %cst_48 {dimension_numbers = #tpu.dot_dimension_numbers<[1], [0], [0], [1], [0, 0, 1, 1], [], []>} : vector<256x4xbf16>, vector<4x256xbf16>, vector<256x256xf32> -> vector<256x256xf32>
    %55 = arith.addf %46, %54 : vector<256x256xf32>
    %c2_i32 = arith.constant 2 : i32
    %56 = arith.addi %0, %c2_i32 : i32
    %c0_49 = arith.constant 0 : index
    %57 = arith.index_cast %56 : i32 to index
    %c0_50 = arith.constant 0 : index
    %c0_51 = arith.constant 0 : index
    %58 = vector.load %arg2[%c0_49, %57, %c0_50, %c0_51] : memref<1x18x18x4xbf16, #tpu.memory_space<vmem>>, vector<1x16x16x4xbf16>
    %59 = vector.shape_cast %58 : vector<1x16x16x4xbf16> to vector<16x16x4xbf16>
    %60 = vector.shape_cast %59 : vector<16x16x4xbf16> to vector<256x4xbf16>
    %c2_52 = arith.constant 2 : index
    %c0_53 = arith.constant 0 : index
    %c0_54 = arith.constant 0 : index
    %c0_55 = arith.constant 0 : index
    %61 = vector.load %arg3[%c2_52, %c0_53, %c0_54, %c0_55] : memref<3x3x4x256xbf16, #tpu.memory_space<vmem>>, vector<1x1x4x256xbf16>
    %62 = vector.shape_cast %61 : vector<1x1x4x256xbf16> to vector<4x256xbf16>
    %cst_56 = arith.constant dense<0.000000e+00> : vector<256x256xf32>
    %63 = tpu.matmul %60, %62, %cst_56 {dimension_numbers = #tpu.dot_dimension_numbers<[1], [0], [0], [1], [0, 0, 1, 1], [], []>} : vector<256x4xbf16>, vector<4x256xbf16>, vector<256x256xf32> -> vector<256x256xf32>
    %64 = arith.addf %55, %63 : vector<256x256xf32>
    %c2_i32_57 = arith.constant 2 : i32
    %65 = arith.addi %0, %c2_i32_57 : i32
    %c0_58 = arith.constant 0 : index
    %66 = arith.index_cast %65 : i32 to index
    %c1_59 = arith.constant 1 : index
    %c0_60 = arith.constant 0 : index
    %67 = vector.load %arg2[%c0_58, %66, %c1_59, %c0_60] : memref<1x18x18x4xbf16, #tpu.memory_space<vmem>>, vector<1x16x16x4xbf16>
    %68 = vector.shape_cast %67 : vector<1x16x16x4xbf16> to vector<16x16x4xbf16>
    %69 = vector.shape_cast %68 : vector<16x16x4xbf16> to vector<256x4xbf16>
    %c2_61 = arith.constant 2 : index
    %c1_62 = arith.constant 1 : index
    %c0_63 = arith.constant 0 : index
    %c0_64 = arith.constant 0 : index
    %70 = vector.load %arg3[%c2_61, %c1_62, %c0_63, %c0_64] : memref<3x3x4x256xbf16, #tpu.memory_space<vmem>>, vector<1x1x4x256xbf16>
    %71 = vector.shape_cast %70 : vector<1x1x4x256xbf16> to vector<4x256xbf16>
    %cst_65 = arith.constant dense<0.000000e+00> : vector<256x256xf32>
    %72 = tpu.matmul %69, %71, %cst_65 {dimension_numbers = #tpu.dot_dimension_numbers<[1], [0], [0], [1], [0, 0, 1, 1], [], []>} : vector<256x4xbf16>, vector<4x256xbf16>, vector<256x256xf32> -> vector<256x256xf32>
    %73 = arith.addf %64, %72 : vector<256x256xf32>
    %c2_i32_66 = arith.constant 2 : i32
    %74 = arith.addi %0, %c2_i32_66 : i32
    %c0_67 = arith.constant 0 : index
    %75 = arith.index_cast %74 : i32 to index
    %c2_68 = arith.constant 2 : index
    %c0_69 = arith.constant 0 : index
    %76 = vector.load %arg2[%c0_67, %75, %c2_68, %c0_69] : memref<1x18x18x4xbf16, #tpu.memory_space<vmem>>, vector<1x16x16x4xbf16>
    %77 = vector.shape_cast %76 : vector<1x16x16x4xbf16> to vector<16x16x4xbf16>
    %78 = vector.shape_cast %77 : vector<16x16x4xbf16> to vector<256x4xbf16>
    %c2_70 = arith.constant 2 : index
    %c2_71 = arith.constant 2 : index
    %c0_72 = arith.constant 0 : index
    %c0_73 = arith.constant 0 : index
    %79 = vector.load %arg3[%c2_70, %c2_71, %c0_72, %c0_73] : memref<3x3x4x256xbf16, #tpu.memory_space<vmem>>, vector<1x1x4x256xbf16>
    %80 = vector.shape_cast %79 : vector<1x1x4x256xbf16> to vector<4x256xbf16>
    %cst_74 = arith.constant dense<0.000000e+00> : vector<256x256xf32>
    %81 = tpu.matmul %78, %80, %cst_74 {dimension_numbers = #tpu.dot_dimension_numbers<[1], [0], [0], [1], [0, 0, 1, 1], [], []>} : vector<256x4xbf16>, vector<4x256xbf16>, vector<256x256xf32> -> vector<256x256xf32>
    %82 = arith.addf %73, %81 : vector<256x256xf32>
    %c0_75 = arith.constant 0 : index
    %c0_76 = arith.constant 0 : index
    %83 = vector.load %arg4[%c0_75, %c0_76] : memref<1x256xf32, #tpu.memory_space<vmem>>, vector<1x256xf32>
    %84 = vector.broadcast %83 : vector<1x256xf32> to vector<256x256xf32>
    %85 = arith.addf %82, %84 : vector<256x256xf32>
    %86 = vector.extract_strided_slice %85 {offsets = [0, 0], sizes = [256, 128], strides = [1, 1]} : vector<256x256xf32> to vector<256x128xf32>
    %87 = vector.extract_strided_slice %85 {offsets = [0, 128], sizes = [256, 128], strides = [1, 1]} : vector<256x256xf32> to vector<256x128xf32>
    %88 = arith.negf %87 : vector<256x128xf32>
    %89 = math.exp %88 : vector<256x128xf32>
    %cst_77 = arith.constant 1.000000e+00 : f32
    %90 = vector.broadcast %cst_77 : f32 to vector<256x128xf32>
    %91 = arith.addf %90, %89 : vector<256x128xf32>
    %92 = arith.divf %90, %91 : vector<256x128xf32>
    %93 = arith.mulf %86, %92 : vector<256x128xf32>
    %94 = vector.shape_cast %93 : vector<256x128xf32> to vector<1x16x16x128xf32>
    %c0_78 = arith.constant 0 : index
    %c0_79 = arith.constant 0 : index
    %c0_80 = arith.constant 0 : index
    %c0_81 = arith.constant 0 : index
    %95 = vector.load %arg5[%c0_78, %c0_79, %c0_80, %c0_81] : memref<1x16x16x128xf32, #tpu.memory_space<vmem>>, vector<1x16x16x128xf32>
    tpu.vector_store %arg5[%c0_78, %c0_79, %c0_80, %c0_81], %94 {strides = array<i32>} : memref<1x16x16x128xf32, #tpu.memory_space<vmem>>, vector<1x16x16x128xf32>,
    return
  }
  func.func @transform_0(%arg0: i32, %arg1: i32) -> (i32, i32, i32, i32) {
    %c0_i32 = arith.constant 0 : i32
    %c0_i32_0 = arith.constant 0 : i32
    %c0_i32_1 = arith.constant 0 : i32
    %c0_i32_2 = arith.constant 0 : i32
    return %arg0, %c0_i32, %c0_i32_0, %c0_i32_1 : i32, i32, i32, i32
  }
  func.func @transform_1(%arg0: i32, %arg1: i32) -> (i32, i32, i32, i32) {
    %c0_i32 = arith.constant 0 : i32
    %c0_i32_0 = arith.constant 0 : i32
    %c0_i32_1 = arith.constant 0 : i32
    %c0_i32_2 = arith.constant 0 : i32
    %c0_i32_3 = arith.constant 0 : i32
    return %c0_i32, %c0_i32_0, %c0_i32_1, %c0_i32_2 : i32, i32, i32, i32
  }
  func.func @transform_2(%arg0: i32, %arg1: i32) -> (i32, i32) {
    %c0_i32 = arith.constant 0 : i32
    %c0_i32_0 = arith.constant 0 : i32
    %c0_i32_1 = arith.constant 0 : i32
    return %c0_i32, %c0_i32_0 : i32, i32
  }
  func.func @transform_3(%arg0: i32, %arg1: i32) -> (i32, i32, i32, i32) {
    %c0_i32 = arith.constant 0 : i32
    %c0_i32_0 = arith.constant 0 : i32
    %c0_i32_1 = arith.constant 0 : i32
    return %arg0, %arg1, %c0_i32, %c0_i32_0 : i32, i32, i32, i32
  }
}

</mosaic_0001>

<llo_original>
// kernel: tpu_custom_call.1
$region0: #{tpu_custom_call.1}
  #allocation0 [shape = 'u32[]', space=smem, size = 0x4, offset = 0x4, fixed_abs, tag = 'smem constant byte address 0x4 - core index']
  #allocation1 [shape = 'u32[144,128]{1,0:T(1,128)}', space=vmem, size = 0x12000, scoped, tag = 'internal scratch']
  %s0 = inlined_call_operand.vmem [shape: bf16[2,18,18,4], index: 0, kind: input, shape index: {}]
  %s1 = inlined_call_operand.vmem [shape: bf16[3,3,4,256], index: 1, kind: input, shape index: {}]
  %s2 = inlined_call_operand.vmem [shape: f32[1,256], index: 2, kind: input, shape index: {}]
  %s3 = inlined_call_operand.hbm [shape: f32[2,16,16,128], index: 3, kind: output, shape index: {}]
  %s4 = sld [smem:[#allocation0]]
  $region45: #{tpu_custom_call.1} parent=0
    _
  %s6 = ssub.s32 1, %s4
  %s7 = scalar_select 0, %s6, %s4
  $region1: #{tpu_custom_call.1} parent=0
    #allocation2 [shape = 'u8[262144]{0}', space=vmem, size = 0x40000, scoped, tag = 'output window, operand 0']
    #allocation3 [shape = 's32[2]{0}', space=sflag, size = 0x8, scoped, tag = 'scoped memory for tpu_custom_call.1']
    %8 = vsyncpa [#allocation3], 0
    %s9 = scalar_lea.sflag [#allocation3], 1
    %10 = vsyncpa %s9, 0
    loop: start=0, step=1, limit=4
    $region2: #{tpu_custom_call.1} parent=1 // loop_pre_header
      _
    $region3: #{tpu_custom_call.1} parent=1 // loop_header
      %s12 = sphi 0, %s16
      %p13 = scmp.ge.s32.totalorder %s12, 4
      %s19 = sphi 0, %s31
      %s20 = sphi 0, %s27
      %s21 = sphi 0, %s19
      %s22 = sphi 0, %s20
      %s23 = sphi 0, %s21
      %s24 = sphi 0, %s22
      %s34 = sphi 0, %s36
      %s37 = sphi 0, %s34
      %s38 = sphi 0, %s37
      %s54 = sphi 0, %s38
      %s58 = sphi 0, %s58
      %s60 = sphi 0, %s58
      %s61 = sphi 0, %s60
      %s75 = sphi 0, %s61
      %s79 = sphi 0, %s79
      %s81 = sphi 0, %s79
      %s82 = sphi 0, %s81
      %s96 = sphi 0, %s82
      %s104 = sphi 0, %s106
      %s107 = sphi 0, %s104
      %s108 = sphi 0, %s107
      %s124 = sphi 0, %s108
    $region4: #{tpu_custom_call.1} parent=1 // loop_header_branch
      %15 = sbr.rel (%p13) target = $region8
    $region5: #{tpu_custom_call.1} parent=1 // loop_body
      %s17 = ssub.s32 %s12, 1
      %s18 = ssub.s32 %s12, 2
      %s25 = sadd.s32 1, %s20
      %p26 = scmp.ge.s32.totalorder %s25, 1
      %s27 = scalar_select %p26, 0, %s25
      %s28 = sadd.s32 1, %s19
      %s29 = scalar_select %p26, %s28, %s19
      %p30 = scmp.ge.s32.totalorder %s29, 2
      %s31 = scalar_select %p30, 0, %s29
      %s32 = ssub.s32 %s19, %s31
      %p33 = scmp.eq.s32.totalorder %s32, 0
      %s35 = sadd.s32 %s34, 1
      %s36 = scalar_select %p33, %s34, %s35
      %p39 = pneg %p33
      %p40 = scmp.eq.s32.totalorder %s12, 1
      %p41 = por %p39, %p40
      %p42 = scmp.ne.s32.totalorder %s34, %s37
      %p43 = scmp.eq.s32.totalorder %s12, 0
      %p44 = por %p42, %p43
      %p45 = scmp.ne.s32.totalorder %s34, %s37
      %p46 = scmp.eq.s32.totalorder %s17, 1
      %p47 = por %p45, %p46
      %p48 = scmp.ne.s32.totalorder %s37, %s38
      %p49 = scmp.eq.s32.totalorder %s17, 0
      %p50 = por %p48, %p49
      %p51 = scmp.ne.s32.totalorder %s37, %s38
      %p52 = scmp.eq.s32.totalorder %s18, 1
      %p53 = por %p51, %p52
      %p55 = scmp.ne.s32.totalorder %s38, %s54
      %p56 = scmp.eq.s32.totalorder %s18, 0
      %p57 = por %p55, %p56
      %s59 = sadd.s32 %s58, 1
      %p62 = scmp.eq.s32.totalorder %s12, 1
      %p63 = scmp.ne.s32.totalorder %s58, %s60
      %p64 = scmp.eq.s32.totalorder %s12, 0
      %p65 = por %p63, %p64
      %p66 = scmp.ne.s32.totalorder %s58, %s60
      %p67 = scmp.eq.s32.totalorder %s17, 1
      %p68 = por %p66, %p67
      %p69 = scmp.ne.s32.totalorder %s60, %s61
      %p70 = scmp.eq.s32.totalorder %s17, 0
      %p71 = por %p69, %p70
      %p72 = scmp.ne.s32.totalorder %s60, %s61
      %p73 = scmp.eq.s32.totalorder %s18, 1
      %p74 = por %p72, %p73
      %p76 = scmp.ne.s32.totalorder %s61, %s75
      %p77 = scmp.eq.s32.totalorder %s18, 0
      %p78 = por %p76, %p77
      %s80 = sadd.s32 %s79, 1
      %p83 = scmp.eq.s32.totalorder %s12, 1
      %p84 = scmp.ne.s32.totalorder %s79, %s81
      %p85 = scmp.eq.s32.totalorder %s12, 0
      %p86 = por %p84, %p85
      %p87 = scmp.ne.s32.totalorder %s79, %s81
      %p88 = scmp.eq.s32.totalorder %s17, 1
      %p89 = por %p87, %p88
      %p90 = scmp.ne.s32.totalorder %s81, %s82
      %p91 = scmp.eq.s32.totalorder %s17, 0
      %p92 = por %p90, %p91
      %p93 = scmp.ne.s32.totalorder %s81, %s82
      %p94 = scmp.eq.s32.totalorder %s18, 1
      %p95 = por %p93, %p94
      %p97 = scmp.ne.s32.totalorder %s82, %s96
      %p98 = scmp.eq.s32.totalorder %s18, 0
      %p99 = por %p97, %p98
      %s100 = ssub.s32 %s19, %s31
      %s101 = ssub.s32 %s20, %s27
      %s102 = sor.u32 %s100, %s101
      %p103 = scmp.eq.s32.totalorder %s102, 0
      %s105 = sadd.s32 %s104, 1
      %s106 = scalar_select %p103, %s104, %s105
      %p109 = pneg %p103
      %p110 = scmp.eq.s32.totalorder %s12, 1
      %p111 = por %p109, %p110
      %p112 = scmp.ne.s32.totalorder %s104, %s107
      %p113 = scmp.eq.s32.totalorder %s12, 0
      %p114 = por %p112, %p113
      %p115 = scmp.ne.s32.totalorder %s104, %s107
      %p116 = scmp.eq.s32.totalorder %s17, 1
      %p117 = por %p115, %p116
      %p118 = scmp.ne.s32.totalorder %s107, %s108
      %p119 = scmp.eq.s32.totalorder %s17, 0
      %p120 = por %p118, %p119
      %p121 = scmp.ne.s32.totalorder %s107, %s108
      %p122 = scmp.eq.s32.totalorder %s18, 1
      %p123 = por %p121, %p122
      %p125 = scmp.ne.s32.totalorder %s108, %s124
      %p126 = scmp.eq.s32.totalorder %s18, 0
      %p127 = por %p125, %p126
      %p128 = scmp.le.s32.totalorder 1, %s12
      %p129 = scmp.lt.s32.totalorder %s12, 3
      %p130 = pnand %p128, %p129
      %p131 = pneg %p130
      // Predicated region
      $region9: #{tpu_custom_call.1} parent=5 // pred_check
        _
      $region10: #{tpu_custom_call.1} parent=5 // pred_check_branch
        %133 = sbr.rel (%p130) target = $region12
      $region11: #{tpu_custom_call.1} parent=5 // pred_region
        %s134 = ssub.s32 %s12, 1
        // Predicated region
        $region13: #{tpu_custom_call.1} parent=11 // pred_check
          %p135 = pneg %p71
        $region14: #{tpu_custom_call.1} parent=11 // pred_check_branch
          %137 = sbr.rel (%p135) target = $region16
        $region15: #{tpu_custom_call.1} parent=11 // pred_region
          _
        $region16: #{tpu_custom_call.1} parent=11 // pred_fallthru
          _
        // Predicated region
        $region17: #{tpu_custom_call.1} parent=11 // pred_check
          %p138 = pneg %p92
        $region18: #{tpu_custom_call.1} parent=11 // pred_check_branch
          %140 = sbr.rel (%p138) target = $region20
        $region19: #{tpu_custom_call.1} parent=11 // pred_region
          _
        $region20: #{tpu_custom_call.1} parent=11 // pred_fallthru
          _
      $region12: #{tpu_custom_call.1} parent=5 // pred_fallthru
        _
      %p141 = scmp.lt.s32.totalorder %s12, 2
      // Predicated region
      $region21: #{tpu_custom_call.1} parent=5 // pred_check
        %p142 = pneg %p141
      $region22: #{tpu_custom_call.1} parent=5 // pred_check_branch
        %144 = sbr.rel (%p142) target = $region24
      $region23: #{tpu_custom_call.1} parent=5 // pred_region
        // Predicated region
        $region25: #{tpu_custom_call.1} parent=23 // pred_check
          %p145 = pneg %p44
        $region26: #{tpu_custom_call.1} parent=23 // pred_check_branch
          %147 = sbr.rel (%p145) target = $region28
        $region27: #{tpu_custom_call.1} parent=23 // pred_region
          %p148 = scmp.lt.s32.totalorder %s19, 1
          %s149 = scalar_select %p148, %s19, 1
          %s150 = smul.addr %s149, 54
          %s151 = smul.addr %s150, 4
          %s152 = scalar_lea.vmem %s0, %s151
        $region28: #{tpu_custom_call.1} parent=23 // pred_fallthru
          _
      $region24: #{tpu_custom_call.1} parent=5 // pred_fallthru
        _
      %p153 = scmp.le.s32.totalorder 1, %s12
      %p154 = scmp.lt.s32.totalorder %s12, 3
      %p155 = pnand %p153, %p154
      %p156 = pneg %p155
      // Predicated region
      $region29: #{tpu_custom_call.1} parent=5 // pred_check
        _
      $region30: #{tpu_custom_call.1} parent=5 // pred_check_branch
        %158 = sbr.rel (%p155) target = $region32
      $region31: #{tpu_custom_call.1} parent=5 // pred_region
        %s159 = ssub.s32 %s12, 1
        %p160 = scmp.lt.s32.totalorder %s21, 1
        %s161 = scalar_select %p160, %s21, 1
        %s162 = smul.addr %s161, 54
        %s163 = smul.addr %s162, 4
        %s164 = scalar_lea.vmem %s0, %s163
        %p165 = pneg %p50
        %p166 = pneg %p47
        %p167 = pneg %p71
        %p168 = pneg %p68
        %p169 = pneg %p92
        %p170 = pneg %p89
        %p171 = pneg %p120
        %p172 = pneg %p117
        %s173 = sand.u32 %s107, 1
        %s174 = scalar_lea.sflag [#allocation3], %s173
        %s175 = sand.u32 %s107, 1
        %s176 = smul.addr %s175, 256
        %s177 = scalar_lea.vmem [#allocation2], %s176
        %p178 = scmp.lt.s32.totalorder %s21, 1
        %s179 = scalar_select %p178, %s21, 1
        %s180 = smul.addr %s179, 54
        %s181 = smul.addr %s180, 4
        %s182 = scalar_lea.vmem %s0, %s181
        %s183 = smul.u32 16, %s22
        %s185 = smul.u32 %s22, 16
        %s186 = smul.u32 %s185, 3
        %s187 = smul.addr %s186, 4
        %s188 = scalar_lea.vmem %s182, %s187
        %v189 = vld [vmem:[%s188] sm:$0xf]
        %v190 = vld [vmem:[%s188 + $0x4] sm:$0xf]
        %v191 = vld [vmem:[%s188 + $0xc] sm:$0xf]
        %v192 = vld [vmem:[%s188 + $0x10] sm:$0xf]
        %v193 = vld [vmem:[%s188 + $0x18] sm:$0xf]
        %v194 = vld [vmem:[%s188 + $0x1c] sm:$0xf]
        %v195 = vld [vmem:[%s188 + $0x24] sm:$0xf]
        %v196 = vld [vmem:[%s188 + $0x28] sm:$0xf]
        %v197 = vld [vmem:[%s188 + $0x30] sm:$0xf]
        %v198 = vld [vmem:[%s188 + $0x34] sm:$0xf]
        %v199 = vld [vmem:[%s188 + $0x3c] sm:$0xf]
        %v200 = vld [vmem:[%s188 + $0x40] sm:$0xf]
        %v201 = vld [vmem:[%s188 + $0x48] sm:$0xf]
        %v202 = vld [vmem:[%s188 + $0x4c] sm:$0xf]
        %v203 = vld [vmem:[%s188 + $0x54] sm:$0xf]
        %v204 = vld [vmem:[%s188 + $0x58] sm:$0xf]
        %v205 = vld [vmem:[%s188 + $0x60] sm:$0xf]
        %v206 = vld [vmem:[%s188 + $0x64] sm:$0xf]
        %v207 = vld [vmem:[%s188 + $0x6c] sm:$0xf]
        %v208 = vld [vmem:[%s188 + $0x70] sm:$0xf]
        %v209 = vld [vmem:[%s188 + $0x78] sm:$0xf]
        %v210 = vld [vmem:[%s188 + $0x7c] sm:$0xf]
        %v211 = vld [vmem:[%s188 + $0x84] sm:$0xf]
        %v212 = vld [vmem:[%s188 + $0x88] sm:$0xf]
        %v213 = vld [vmem:[%s188 + $0x90] sm:$0xf]
        %v214 = vld [vmem:[%s188 + $0x94] sm:$0xf]
        %v215 = vld [vmem:[%s188 + $0x9c] sm:$0xf]
        %v216 = vld [vmem:[%s188 + $0xa0] sm:$0xf]
        %v217 = vld [vmem:[%s188 + $0xa8] sm:$0xf]
        %v218 = vld [vmem:[%s188 + $0xac] sm:$0xf]
        %v219 = vld [vmem:[%s188 + $0xb4] sm:$0xf]
        %v220 = vld [vmem:[%s188 + $0xb8] sm:$0xf]
        %v221 = vld [vmem:[%s1] sm:$0xf]
        %v222 = vld [vmem:[%s188 + $0x8] sm:$0x1]
        %v223 = vld [vmem:[%s188 + $0x14] sm:$0x1]
        %v224 = vld [vmem:[%s188 + $0x20] sm:$0x1]
        %v225 = vld [vmem:[%s188 + $0x2c] sm:$0x1]
        %v226 = vld [vmem:[%s188 + $0x38] sm:$0x1]
        %v227 = vld [vmem:[%s188 + $0x44] sm:$0x1]
        %v228 = vld [vmem:[%s188 + $0x50] sm:$0x1]
        %v229 = vld [vmem:[%s188 + $0x5c] sm:$0x1]
        %v230 = vld [vmem:[%s188 + $0x68] sm:$0x1]
        %v231 = vld [vmem:[%s188 + $0x74] sm:$0x1]
        %v232 = vld [vmem:[%s188 + $0x80] sm:$0x1]
        %v233 = vld [vmem:[%s188 + $0x8c] sm:$0x1]
        %v234 = vld [vmem:[%s188 + $0x98] sm:$0x1]
        %v235 = vld [vmem:[%s188 + $0xa4] sm:$0x1]
        %v236 = vld [vmem:[%s188 + $0xb0] sm:$0x1]
        %v237 = vld [vmem:[%s188 + $0xbc] sm:$0x1]
        %vm238 = vsmask.f32 3328
        %vm239 = vsmask.f32 7440
        %vm240 = vmor %vm238, %vm239
        %v242 = vshrl.u32 %v189, 16
        %v244 = vrot.slane %v242, 4
        %v245 = vshll.u32 %v189, 16
        %v247 = vrot.slane %v245, 5
        %v248 = vor.u32 %v244, %v247
        %v249 = vrot.slane %v248, 4
        %v251 = vshll.u32 %v190, 16
        %v253 = vrot.slane %v251, 5
        %v254 = vsel %vm240, %v249, %v253
        %v255 = vshrl.u32 %v190, 16
        %v257 = vrot.slane %v255, 4
        %v258 = vor.u32 %v257, %v253
        %v259 = vrot.slane %v258, 4
        %v261 = vshll.u32 %v222, 16
        %v263 = vrot.slane %v261, 5
        %v264 = vsel %vm240, %v259, %v263
        %v266 = vshrl.u32 %v191, 16
        %v268 = vrot.slane %v266, 4
        %v269 = vshll.u32 %v191, 16
        %v271 = vrot.slane %v269, 5
        %v272 = vor.u32 %v268, %v271
        %v273 = vrot.slane %v272, 4
        %v275 = vshll.u32 %v192, 16
        %v277 = vrot.slane %v275, 5
        %v278 = vsel %vm240, %v273, %v277
        %v279 = vshrl.u32 %v192, 16
        %v281 = vrot.slane %v279, 4
        %v282 = vor.u32 %v281, %v277
        %v283 = vrot.slane %v282, 4
        %v285 = vshll.u32 %v223, 16
        %v287 = vrot.slane %v285, 5
        %v288 = vsel %vm240, %v283, %v287
        %v290 = vshrl.u32 %v193, 16
        %v292 = vrot.slane %v290, 4
        %v293 = vshll.u32 %v193, 16
        %v295 = vrot.slane %v293, 5
        %v296 = vor.u32 %v292, %v295
        %v297 = vrot.slane %v296, 4
        %v299 = vshll.u32 %v194, 16
        %v301 = vrot.slane %v299, 5
        %v302 = vsel %vm240, %v297, %v301
        %v303 = vshrl.u32 %v194, 16
        %v305 = vrot.slane %v303, 4
        %v306 = vor.u32 %v305, %v301
        %v307 = vrot.slane %v306, 4
        %v309 = vshll.u32 %v224, 16
        %v311 = vrot.slane %v309, 5
        %v312 = vsel %vm240, %v307, %v311
        %v314 = vshrl.u32 %v195, 16
        %v316 = vrot.slane %v314, 4
        %v317 = vshll.u32 %v195, 16
        %v319 = vrot.slane %v317, 5
        %v320 = vor.u32 %v316, %v319
        %v321 = vrot.slane %v320, 4
        %v323 = vshll.u32 %v196, 16
        %v325 = vrot.slane %v323, 5
        %v326 = vsel %vm240, %v321, %v325
        %v327 = vshrl.u32 %v196, 16
        %v329 = vrot.slane %v327, 4
        %v330 = vor.u32 %v329, %v325
        %v331 = vrot.slane %v330, 4
        %v333 = vshll.u32 %v225, 16
        %v335 = vrot.slane %v333, 5
        %v336 = vsel %vm240, %v331, %v335
        %v338 = vshrl.u32 %v197, 16
        %v340 = vrot.slane %v338, 4
        %v341 = vshll.u32 %v197, 16
        %v343 = vrot.slane %v341, 5
        %v344 = vor.u32 %v340, %v343
        %v345 = vrot.slane %v344, 4
        %v347 = vshll.u32 %v198, 16
        %v349 = vrot.slane %v347, 5
        %v350 = vsel %vm240, %v345, %v349
        %v351 = vshrl.u32 %v198, 16
        %v353 = vrot.slane %v351, 4
        %v354 = vor.u32 %v353, %v349
        %v355 = vrot.slane %v354, 4
        %v357 = vshll.u32 %v226, 16
        %v359 = vrot.slane %v357, 5
        %v360 = vsel %vm240, %v355, %v359
        %v362 = vshrl.u32 %v199, 16
        %v364 = vrot.slane %v362, 4
        %v365 = vshll.u32 %v199, 16
        %v367 = vrot.slane %v365, 5
        %v368 = vor.u32 %v364, %v367
        %v369 = vrot.slane %v368, 4
        %v371 = vshll.u32 %v200, 16
        %v373 = vrot.slane %v371, 5
        %v374 = vsel %vm240, %v369, %v373
        %v375 = vshrl.u32 %v200, 16
        %v377 = vrot.slane %v375, 4
        %v378 = vor.u32 %v377, %v373
        %v379 = vrot.slane %v378, 4
        %v381 = vshll.u32 %v227, 16
        %v383 = vrot.slane %v381, 5
        %v384 = vsel %vm240, %v379, %v383
        %v386 = vshrl.u32 %v201, 16
        %v388 = vrot.slane %v386, 4
        %v389 = vshll.u32 %v201, 16
        %v391 = vrot.slane %v389, 5
        %v392 = vor.u32 %v388, %v391
        %v393 = vrot.slane %v392, 4
        %v395 = vshll.u32 %v202, 16
        %v397 = vrot.slane %v395, 5
        %v398 = vsel %vm240, %v393, %v397
        %v399 = vshrl.u32 %v202, 16
        %v401 = vrot.slane %v399, 4
        %v402 = vor.u32 %v401, %v397
        %v403 = vrot.slane %v402, 4
        %v405 = vshll.u32 %v228, 16
        %v407 = vrot.slane %v405, 5
        %v408 = vsel %vm240, %v403, %v407
        %v410 = vshrl.u32 %v203, 16
        %v412 = vrot.slane %v410, 4
        %v413 = vshll.u32 %v203, 16
        %v415 = vrot.slane %v413, 5
        %v416 = vor.u32 %v412, %v415
        %v417 = vrot.slane %v416, 4
        %v419 = vshll.u32 %v204, 16
        %v421 = vrot.slane %v419, 5
        %v422 = vsel %vm240, %v417, %v421
        %v423 = vshrl.u32 %v204, 16
        %v425 = vrot.slane %v423, 4
        %v426 = vor.u32 %v425, %v421
        %v427 = vrot.slane %v426, 4
        %v429 = vshll.u32 %v229, 16
        %v431 = vrot.slane %v429, 5
        %v432 = vsel %vm240, %v427, %v431
        %v434 = vshrl.u32 %v205, 16
        %v436 = vrot.slane %v434, 4
        %v437 = vshll.u32 %v205, 16
        %v439 = vrot.slane %v437, 5
        %v440 = vor.u32 %v436, %v439
        %v441 = vrot.slane %v440, 4
        %v443 = vshll.u32 %v206, 16
        %v445 = vrot.slane %v443, 5
        %v446 = vsel %vm240, %v441, %v445
        %v447 = vshrl.u32 %v206, 16
        %v449 = vrot.slane %v447, 4
        %v450 = vor.u32 %v449, %v445
        %v451 = vrot.slane %v450, 4
        %v453 = vshll.u32 %v230, 16
        %v455 = vrot.slane %v453, 5
        %v456 = vsel %vm240, %v451, %v455
        %v458 = vshrl.u32 %v207, 16
        %v460 = vrot.slane %v458, 4
        %v461 = vshll.u32 %v207, 16
        %v463 = vrot.slane %v461, 5
        %v464 = vor.u32 %v460, %v463
        %v465 = vrot.slane %v464, 4
        %v467 = vshll.u32 %v208, 16
        %v469 = vrot.slane %v467, 5
        %v470 = vsel %vm240, %v465, %v469
        %v471 = vshrl.u32 %v208, 16
        %v473 = vrot.slane %v471, 4
        %v474 = vor.u32 %v473, %v469
        %v475 = vrot.slane %v474, 4
        %v477 = vshll.u32 %v231, 16
        %v479 = vrot.slane %v477, 5
        %v480 = vsel %vm240, %v475, %v479
        %v482 = vshrl.u32 %v209, 16
        %v484 = vrot.slane %v482, 4
        %v485 = vshll.u32 %v209, 16
        %v487 = vrot.slane %v485, 5
        %v488 = vor.u32 %v484, %v487
        %v489 = vrot.slane %v488, 4
        %v491 = vshll.u32 %v210, 16
        %v493 = vrot.slane %v491, 5
        %v494 = vsel %vm240, %v489, %v493
        %v495 = vshrl.u32 %v210, 16
        %v497 = vrot.slane %v495, 4
        %v498 = vor.u32 %v497, %v493
        %v499 = vrot.slane %v498, 4
        %v501 = vshll.u32 %v232, 16
        %v503 = vrot.slane %v501, 5
        %v504 = vsel %vm240, %v499, %v503
        %v506 = vshrl.u32 %v211, 16
        %v508 = vrot.slane %v506, 4
        %v509 = vshll.u32 %v211, 16
        %v511 = vrot.slane %v509, 5
        %v512 = vor.u32 %v508, %v511
        %v513 = vrot.slane %v512, 4
        %v515 = vshll.u32 %v212, 16
        %v517 = vrot.slane %v515, 5
        %v518 = vsel %vm240, %v513, %v517
        %v519 = vshrl.u32 %v212, 16
        %v521 = vrot.slane %v519, 4
        %v522 = vor.u32 %v521, %v517
        %v523 = vrot.slane %v522, 4
        %v525 = vshll.u32 %v233, 16
        %v527 = vrot.slane %v525, 5
        %v528 = vsel %vm240, %v523, %v527
        %v530 = vshrl.u32 %v213, 16
        %v532 = vrot.slane %v530, 4
        %v533 = vshll.u32 %v213, 16
        %v535 = vrot.slane %v533, 5
        %v536 = vor.u32 %v532, %v535
        %v537 = vrot.slane %v536, 4
        %v539 = vshll.u32 %v214, 16
        %v541 = vrot.slane %v539, 5
        %v542 = vsel %vm240, %v537, %v541
        %v543 = vshrl.u32 %v214, 16
        %v545 = vrot.slane %v543, 4
        %v546 = vor.u32 %v545, %v541
        %v547 = vrot.slane %v546, 4
        %v549 = vshll.u32 %v234, 16
        %v551 = vrot.slane %v549, 5
        %v552 = vsel %vm240, %v547, %v551
        %v554 = vshrl.u32 %v215, 16
        %v556 = vrot.slane %v554, 4
        %v557 = vshll.u32 %v215, 16
        %v559 = vrot.slane %v557, 5
        %v560 = vor.u32 %v556, %v559
        %v561 = vrot.slane %v560, 4
        %v563 = vshll.u32 %v216, 16
        %v565 = vrot.slane %v563, 5
        %v566 = vsel %vm240, %v561, %v565
        %v567 = vshrl.u32 %v216, 16
        %v569 = vrot.slane %v567, 4
        %v570 = vor.u32 %v569, %v565
        %v571 = vrot.slane %v570, 4
        %v573 = vshll.u32 %v235, 16
        %v575 = vrot.slane %v573, 5
        %v576 = vsel %vm240, %v571, %v575
        %v578 = vshrl.u32 %v217, 16
        %v580 = vrot.slane %v578, 4
        %v581 = vshll.u32 %v217, 16
        %v583 = vrot.slane %v581, 5
        %v584 = vor.u32 %v580, %v583
        %v585 = vrot.slane %v584, 4
        %v587 = vshll.u32 %v218, 16
        %v589 = vrot.slane %v587, 5
        %v590 = vsel %vm240, %v585, %v589
        %v591 = vshrl.u32 %v218, 16
        %v593 = vrot.slane %v591, 4
        %v594 = vor.u32 %v593, %v589
        %v595 = vrot.slane %v594, 4
        %v597 = vshll.u32 %v236, 16
        %v599 = vrot.slane %v597, 5
        %v600 = vsel %vm240, %v595, %v599
        %v602 = vshrl.u32 %v219, 16
        %v604 = vrot.slane %v602, 4
        %v605 = vshll.u32 %v219, 16
        %v607 = vrot.slane %v605, 5
        %v608 = vor.u32 %v604, %v607
        %v609 = vrot.slane %v608, 4
        %v611 = vshll.u32 %v220, 16
        %v613 = vrot.slane %v611, 5
        %v614 = vsel %vm240, %v609, %v613
        %v615 = vshrl.u32 %v220, 16
        %v617 = vrot.slane %v615, 4
        %v618 = vor.u32 %v617, %v613
        %v619 = vrot.slane %v618, 4
        %v621 = vshll.u32 %v237, 16
        %v623 = vrot.slane %v621, 5
        %v624 = vsel %vm240, %v619, %v623
        %s625 = scalar_lea.vmem %s1, 4
        %v626 = vld [vmem:[%s625] sm:$0xf]
        %v627 = vunpack.c.l.b16 %v254
        %v628 = vunpack.c.l.b16 %v264
        %v629 = vunpack.c.l.b16 %v278
        %v630 = vunpack.c.l.b16 %v288
        %v631 = vunpack.c.l.b16 %v302
        %v632 = vunpack.c.l.b16 %v312
        %v633 = vunpack.c.l.b16 %v326
        %v634 = vunpack.c.l.b16 %v336
        %v635 = vunpack.c.l.b16 %v350
        %v636 = vunpack.c.l.b16 %v360
        %v637 = vunpack.c.l.b16 %v374
        %v638 = vunpack.c.l.b16 %v384
        %v639 = vunpack.c.l.b16 %v398
        %v640 = vunpack.c.l.b16 %v408
        %v641 = vunpack.c.l.b16 %v422
        %v642 = vunpack.c.l.b16 %v432
        %v643 = vunpack.c.l.b16 %v446
        %v644 = vunpack.c.l.b16 %v456
        %v645 = vunpack.c.l.b16 %v470
        %v646 = vunpack.c.l.b16 %v480
        %v647 = vunpack.c.l.b16 %v494
        %v648 = vunpack.c.l.b16 %v504
        %v649 = vunpack.c.l.b16 %v518
        %v650 = vunpack.c.l.b16 %v528
        %v651 = vunpack.c.l.b16 %v542
        %v652 = vunpack.c.l.b16 %v552
        %v653 = vunpack.c.l.b16 %v566
        %v654 = vunpack.c.l.b16 %v576
        %v655 = vunpack.c.l.b16 %v590
        %v656 = vunpack.c.l.b16 %v600
        %v657 = vunpack.c.l.b16 %v614
        %v658 = vunpack.c.l.b16 %v624
        %v659 = vpack.c.b16 %v628, %v627
        %v660 = vpack.c.b16 %v630, %v629
        %v661 = vpack.c.b16 %v632, %v631
        %v662 = vpack.c.b16 %v634, %v633
        %v663 = vpack.c.b16 %v636, %v635
        %v664 = vpack.c.b16 %v638, %v637
        %v665 = vpack.c.b16 %v640, %v639
        %v666 = vpack.c.b16 %v642, %v641
        %v667 = vpack.c.b16 %v644, %v643
        %v668 = vpack.c.b16 %v646, %v645
        %v669 = vpack.c.b16 %v648, %v647
        %v670 = vpack.c.b16 %v650, %v649
        %v671 = vpack.c.b16 %v652, %v651
        %v672 = vpack.c.b16 %v654, %v653
        %v673 = vpack.c.b16 %v656, %v655
        %v674 = vpack.c.b16 %v658, %v657
        %v677 = vunpack.c.l.s4 1983009808
        %v678 = vunpack.c.0.s8 %v677
        %v679 = vlaneseq
        %v680 = vshrl.u32 %v679, 7
        %v681 = vsub.s32 %v678, %v680
        %v682 = vrot.slane %v626, %v681
        %v683 = vcombine.high %v682, %v682
        %vm684 = vcmask 31744
        %v686 = vsel %vm684, %v659, 0
        %v689 = vsel %vm684, %v660, 0
        %v692 = vsel %vm684, %v661, 0
        %v695 = vsel %vm684, %v662, 0
        %v698 = vsel %vm684, %v663, 0
        %v701 = vsel %vm684, %v664, 0
        %v704 = vsel %vm684, %v665, 0
        %v707 = vsel %vm684, %v666, 0
        %v710 = vsel %vm684, %v667, 0
        %v713 = vsel %vm684, %v668, 0
        %v716 = vsel %vm684, %v669, 0
        %v719 = vsel %vm684, %v670, 0
        %v722 = vsel %vm684, %v671, 0
        %v725 = vsel %vm684, %v672, 0
        %v728 = vsel %vm684, %v673, 0
        %v731 = vsel %vm684, %v674, 0
        %vm733 = vcmask 1041408
        %v735 = vsel %vm733, %v682, 0
        %v738 = vsel %vm733, %v683, 0
        %740 = vmatprep.subr.bf16.mxu0 0
        %741 = vmatpush1.bf16.msra.mxu0 0
        %742 = vmatprep.subr.bf16.mxu0 0
        %743 = vmatpush1.bf16.msra.mxu0 0
        %744 = vmatprep.subr.bf16.mxu0 0
        %745 = vmatpush1.bf16.msra.mxu0 0
        %746 = vmatprep.subr.bf16.mxu0 0
        %747 = vmatpush1.bf16.msra.mxu0 0
        %748 = vmatprep.subr.bf16.mxu0 0
        %749 = vmatpush1.bf16.msra.mxu0 0
        %750 = vmatprep.subr.bf16.mxu0 0
        %751 = vmatpush1.bf16.msra.mxu0 0
        %752 = vmatprep.subr.bf16.mxu0 0
        %753 = vmatpush1.bf16.msra.mxu0 0
        %754 = vmatprep.subr.bf16.mxu0 %v738
        %755 = vmatpush1.bf16.msra.mxu0 %v735
        %756 = vmatprep.subr.bf16.mxu0 0
        %757 = vmatpush2.bf16.msra.mxu0 0
        %758 = vmatprep.subr.bf16.mxu0 0
        %759 = vmatpush2.bf16.msra.mxu0 0
        %760 = vmatprep.subr.bf16.mxu0 0
        %761 = vmatpush2.bf16.msra.mxu0 0
        %762 = vmatprep.subr.bf16.mxu0 0
        %763 = vmatpush2.bf16.msra.mxu0 0
        %764 = vmatprep.subr.bf16.mxu0 0
        %765 = vmatpush2.bf16.msra.mxu0 0
        %766 = vmatprep.subr.bf16.mxu0 0
        %767 = vmatpush2.bf16.msra.mxu0 0
        %768 = vmatprep.subr.bf16.mxu0 0
        %769 = vmatpush2.bf16.msra.mxu0 0
        %770 = vmatprep.subr.bf16.mxu0 0
        %771 = vmatpush2.bf16.msra.mxu0 0
        %772 = vmatprep.mubr.bf16.mxu0 0
        %773 = vmatmul.mubr.bf16.gmra.mxu0 %v686
        %v774 = vpop.f32.mrf.mxu0
        %v775 = vadd.f32 0.0, %v774
        %v776 = vpop.f32.mrf.mxu0
        %v777 = vadd.f32 0.0, %v776
        %v778 = vpop.f32.mrf.mxu0
        %v779 = vadd.f32 0.0, %v778
        %v780 = vpop.f32.mrf.mxu0
        %v781 = vadd.f32 0.0, %v780
        %782 = vmatprep.mubr.bf16.mxu0 0
        %783 = vmatmul.mubr.bf16.gmra.mxu0 %v689
        %v784 = vpop.f32.mrf.mxu0
        %v785 = vadd.f32 0.0, %v784
        %v786 = vpop.f32.mrf.mxu0
        %v787 = vadd.f32 0.0, %v786
        %v788 = vpop.f32.mrf.mxu0
        %v789 = vadd.f32 0.0, %v788
        %v790 = vpop.f32.mrf.mxu0
        %v791 = vadd.f32 0.0, %v790
        %792 = vmatprep.mubr.bf16.mxu0 0
        %793 = vmatmul.mubr.bf16.gmra.mxu0 %v692
        %v794 = vpop.f32.mrf.mxu0
        %v795 = vadd.f32 0.0, %v794
        %v796 = vpop.f32.mrf.mxu0
        %v797 = vadd.f32 0.0, %v796
        %v798 = vpop.f32.mrf.mxu0
        %v799 = vadd.f32 0.0, %v798
        %v800 = vpop.f32.mrf.mxu0
        %v801 = vadd.f32 0.0, %v800
        %802 = vmatprep.mubr.bf16.mxu0 0
        %803 = vmatmul.mubr.bf16.gmra.mxu0 %v695
        %v804 = vpop.f32.mrf.mxu0
        %v805 = vadd.f32 0.0, %v804
        %v806 = vpop.f32.mrf.mxu0
        %v807 = vadd.f32 0.0, %v806
        %v808 = vpop.f32.mrf.mxu0
        %v809 = vadd.f32 0.0, %v808
        %v810 = vpop.f32.mrf.mxu0
        %v811 = vadd.f32 0.0, %v810
        %812 = vmatprep.mubr.bf16.mxu0 0
        %813 = vmatmul.mubr.bf16.gmra.mxu0 %v698
        %v814 = vpop.f32.mrf.mxu0
        %v815 = vadd.f32 0.0, %v814
        %v816 = vpop.f32.mrf.mxu0
        %v817 = vadd.f32 0.0, %v816
        %v818 = vpop.f32.mrf.mxu0
        %v819 = vadd.f32 0.0, %v818
        %v820 = vpop.f32.mrf.mxu0
        %v821 = vadd.f32 0.0, %v820
        %822 = vmatprep.mubr.bf16.mxu0 0
        %823 = vmatmul.mubr.bf16.gmra.mxu0 %v701
        %v824 = vpop.f32.mrf.mxu0
        %v825 = vadd.f32 0.0, %v824
        %v826 = vpop.f32.mrf.mxu0
        %v827 = vadd.f32 0.0, %v826
        %v828 = vpop.f32.mrf.mxu0
        %v829 = vadd.f32 0.0, %v828
        %v830 = vpop.f32.mrf.mxu0
        %v831 = vadd.f32 0.0, %v830
        %832 = vmatprep.mubr.bf16.mxu0 0
        %833 = vmatmul.mubr.bf16.gmra.mxu0 %v704
        %v834 = vpop.f32.mrf.mxu0
        %v835 = vadd.f32 0.0, %v834
        %v836 = vpop.f32.mrf.mxu0
        %v837 = vadd.f32 0.0, %v836
        %v838 = vpop.f32.mrf.mxu0
        %v839 = vadd.f32 0.0, %v838
        %v840 = vpop.f32.mrf.mxu0
        %v841 = vadd.f32 0.0, %v840
        %842 = vmatprep.mubr.bf16.mxu0 0
        %843 = vmatmul.mubr.bf16.gmra.mxu0 %v707
        %v844 = vpop.f32.mrf.mxu0
        %v845 = vadd.f32 0.0, %v844
        %v846 = vpop.f32.mrf.mxu0
        %v847 = vadd.f32 0.0, %v846
        %v848 = vpop.f32.mrf.mxu0
        %v849 = vadd.f32 0.0, %v848
        %v850 = vpop.f32.mrf.mxu0
        %v851 = vadd.f32 0.0, %v850
        %852 = vmatprep.mubr.bf16.mxu0 0
        %853 = vmatmul.mubr.bf16.gmra.mxu0 %v710
        %v854 = vpop.f32.mrf.mxu0
        %v855 = vadd.f32 0.0, %v854
        %v856 = vpop.f32.mrf.mxu0
        %v857 = vadd.f32 0.0, %v856
        %v858 = vpop.f32.mrf.mxu0
        %v859 = vadd.f32 0.0, %v858
        %v860 = vpop.f32.mrf.mxu0
        %v861 = vadd.f32 0.0, %v860
        %862 = vmatprep.mubr.bf16.mxu0 0
        %863 = vmatmul.mubr.bf16.gmra.mxu0 %v713
        %v864 = vpop.f32.mrf.mxu0
        %v865 = vadd.f32 0.0, %v864
        %v866 = vpop.f32.mrf.mxu0
        %v867 = vadd.f32 0.0, %v866
        %v868 = vpop.f32.mrf.mxu0
        %v869 = vadd.f32 0.0, %v868
        %v870 = vpop.f32.mrf.mxu0
        %v871 = vadd.f32 0.0, %v870
        %872 = vmatprep.mubr.bf16.mxu0 0
        %873 = vmatmul.mubr.bf16.gmra.mxu0 %v716
        %v874 = vpop.f32.mrf.mxu0
        %v875 = vadd.f32 0.0, %v874
        %v876 = vpop.f32.mrf.mxu0
        %v877 = vadd.f32 0.0, %v876
        %v878 = vpop.f32.mrf.mxu0
        %v879 = vadd.f32 0.0, %v878
        %v880 = vpop.f32.mrf.mxu0
        %v881 = vadd.f32 0.0, %v880
        %882 = vmatprep.mubr.bf16.mxu0 0
        %883 = vmatmul.mubr.bf16.gmra.mxu0 %v719
        %v884 = vpop.f32.mrf.mxu0
        %v885 = vadd.f32 0.0, %v884
        %v886 = vpop.f32.mrf.mxu0
        %v887 = vadd.f32 0.0, %v886
        %v888 = vpop.f32.mrf.mxu0
        %v889 = vadd.f32 0.0, %v888
        %v890 = vpop.f32.mrf.mxu0
        %v891 = vadd.f32 0.0, %v890
        %892 = vmatprep.mubr.bf16.mxu0 0
        %893 = vmatmul.mubr.bf16.gmra.mxu0 %v722
        %v894 = vpop.f32.mrf.mxu0
        %v895 = vadd.f32 0.0, %v894
        %v896 = vpop.f32.mrf.mxu0
        %v897 = vadd.f32 0.0, %v896
        %v898 = vpop.f32.mrf.mxu0
        %v899 = vadd.f32 0.0, %v898
        %v900 = vpop.f32.mrf.mxu0
        %v901 = vadd.f32 0.0, %v900
        %902 = vmatprep.mubr.bf16.mxu0 0
        %903 = vmatmul.mubr.bf16.gmra.mxu0 %v725
        %v904 = vpop.f32.mrf.mxu0
        %v905 = vadd.f32 0.0, %v904
        %v906 = vpop.f32.mrf.mxu0
        %v907 = vadd.f32 0.0, %v906
        %v908 = vpop.f32.mrf.mxu0
        %v909 = vadd.f32 0.0, %v908
        %v910 = vpop.f32.mrf.mxu0
        %v911 = vadd.f32 0.0, %v910
        %912 = vmatprep.mubr.bf16.mxu0 0
        %913 = vmatmul.mubr.bf16.gmra.mxu0 %v728
        %v914 = vpop.f32.mrf.mxu0
        %v915 = vadd.f32 0.0, %v914
        %v916 = vpop.f32.mrf.mxu0
        %v917 = vadd.f32 0.0, %v916
        %v918 = vpop.f32.mrf.mxu0
        %v919 = vadd.f32 0.0, %v918
        %v920 = vpop.f32.mrf.mxu0
        %v921 = vadd.f32 0.0, %v920
        %922 = vmatprep.mubr.bf16.mxu0 0
        %923 = vmatmul.mubr.bf16.gmra.mxu0 %v731
        %v924 = vpop.f32.mrf.mxu0
        %v925 = vadd.f32 0.0, %v924
        %v926 = vpop.f32.mrf.mxu0
        %v927 = vadd.f32 0.0, %v926
        %v928 = vpop.f32.mrf.mxu0
        %v929 = vadd.f32 0.0, %v928
        %v930 = vpop.f32.mrf.mxu0
        %v931 = vadd.f32 0.0, %v930
        %932 = vdwg.mxu0
        %v965 = vunpack.c.l.b16 %v189
        %v966 = vunpack.c.l.b16 %v190
        %v967 = vunpack.c.l.b16 %v191
        %v968 = vunpack.c.l.b16 %v192
        %v969 = vunpack.c.l.b16 %v193
        %v970 = vunpack.c.l.b16 %v194
        %v971 = vunpack.c.l.b16 %v195
        %v972 = vunpack.c.l.b16 %v196
        %v973 = vunpack.c.l.b16 %v197
        %v974 = vunpack.c.l.b16 %v198
        %v975 = vunpack.c.l.b16 %v199
        %v976 = vunpack.c.l.b16 %v200
        %v977 = vunpack.c.l.b16 %v201
        %v978 = vunpack.c.l.b16 %v202
        %v979 = vunpack.c.l.b16 %v203
        %v980 = vunpack.c.l.b16 %v204
        %v981 = vunpack.c.l.b16 %v205
        %v982 = vunpack.c.l.b16 %v206
        %v983 = vunpack.c.l.b16 %v207
        %v984 = vunpack.c.l.b16 %v208
        %v985 = vunpack.c.l.b16 %v209
        %v986 = vunpack.c.l.b16 %v210
        %v987 = vunpack.c.l.b16 %v211
        %v988 = vunpack.c.l.b16 %v212
        %v989 = vunpack.c.l.b16 %v213
        %v990 = vunpack.c.l.b16 %v214
        %v991 = vunpack.c.l.b16 %v215
        %v992 = vunpack.c.l.b16 %v216
        %v993 = vunpack.c.l.b16 %v217
        %v994 = vunpack.c.l.b16 %v218
        %v995 = vunpack.c.l.b16 %v219
        %v996 = vunpack.c.l.b16 %v220
        %v997 = vpack.c.b16 %v966, %v965
        %v998 = vpack.c.b16 %v968, %v967
        %v999 = vpack.c.b16 %v970, %v969
        %v1000 = vpack.c.b16 %v972, %v971
        %v1001 = vpack.c.b16 %v974, %v973
        %v1002 = vpack.c.b16 %v976, %v975
        %v1003 = vpack.c.b16 %v978, %v977
        %v1004 = vpack.c.b16 %v980, %v979
        %v1005 = vpack.c.b16 %v982, %v981
        %v1006 = vpack.c.b16 %v984, %v983
        %v1007 = vpack.c.b16 %v986, %v985
        %v1008 = vpack.c.b16 %v988, %v987
        %v1009 = vpack.c.b16 %v990, %v989
        %v1010 = vpack.c.b16 %v992, %v991
        %v1011 = vpack.c.b16 %v994, %v993
        %v1012 = vpack.c.b16 %v996, %v995
        %v1015 = vunpack.c.l.s4 1983009808
        %v1016 = vunpack.c.0.s8 %v1015
        %v1017 = vlaneseq
        %v1018 = vshrl.u32 %v1017, 7
        %v1019 = vsub.s32 %v1016, %v1018
        %v1020 = vrot.slane %v221, %v1019
        %v1021 = vcombine.high %v1020, %v1020
        %v1023 = vsel %vm684, %v997, 0
        %v1026 = vsel %vm684, %v998, 0
        %v1029 = vsel %vm684, %v999, 0
        %v1032 = vsel %vm684, %v1000, 0
        %v1035 = vsel %vm684, %v1001, 0
        %v1038 = vsel %vm684, %v1002, 0
        %v1041 = vsel %vm684, %v1003, 0
        %v1044 = vsel %vm684, %v1004, 0
        %v1047 = vsel %vm684, %v1005, 0
        %v1050 = vsel %vm684, %v1006, 0
        %v1053 = vsel %vm684, %v1007, 0
        %v1056 = vsel %vm684, %v1008, 0
        %v1059 = vsel %vm684, %v1009, 0
        %v1062 = vsel %vm684, %v1010, 0
        %v1065 = vsel %vm684, %v1011, 0
        %v1068 = vsel %vm684, %v1012, 0
        %v1071 = vsel %vm733, %v1020, 0
        %v1074 = vsel %vm733, %v1021, 0
        %1076 = vmatprep.subr.bf16.mxu0 0
        %1077 = vmatpush1.bf16.msra.mxu0 0
        %1078 = vmatprep.subr.bf16.mxu0 0
        %1079 = vmatpush1.bf16.msra.mxu0 0
        %1080 = vmatprep.subr.bf16.mxu0 0
        %1081 = vmatpush1.bf16.msra.mxu0 0
        %1082 = vmatprep.subr.bf16.mxu0 0
        %1083 = vmatpush1.bf16.msra.mxu0 0
        %1084 = vmatprep.subr.bf16.mxu0 0
        %1085 = vmatpush1.bf16.msra.mxu0 0
        %1086 = vmatprep.subr.bf16.mxu0 0
        %1087 = vmatpush1.bf16.msra.mxu0 0
        %1088 = vmatprep.subr.bf16.mxu0 0
        %1089 = vmatpush1.bf16.msra.mxu0 0
        %1090 = vmatprep.subr.bf16.mxu0 %v1074
        %1091 = vmatpush1.bf16.msra.mxu0 %v1071
        %1092 = vmatprep.subr.bf16.mxu0 0
        %1093 = vmatpush2.bf16.msra.mxu0 0
        %1094 = vmatprep.subr.bf16.mxu0 0
        %1095 = vmatpush2.bf16.msra.mxu0 0
        %1096 = vmatprep.subr.bf16.mxu0 0
        %1097 = vmatpush2.bf16.msra.mxu0 0
        %1098 = vmatprep.subr.bf16.mxu0 0
        %1099 = vmatpush2.bf16.msra.mxu0 0
        %1100 = vmatprep.subr.bf16.mxu0 0
        %1101 = vmatpush2.bf16.msra.mxu0 0
        %1102 = vmatprep.subr.bf16.mxu0 0
        %1103 = vmatpush2.bf16.msra.mxu0 0
        %1104 = vmatprep.subr.bf16.mxu0 0
        %1105 = vmatpush2.bf16.msra.mxu0 0
        %1106 = vmatprep.subr.bf16.mxu0 0
        %1107 = vmatpush2.bf16.msra.mxu0 0
        %1108 = vmatprep.mubr.bf16.mxu0 0
        %1109 = vmatmul.mubr.bf16.gmra.mxu0 %v1023
        %v1110 = vpop.f32.mrf.mxu0
        %v1111 = vadd.f32 %v775, %v1110
        %v1112 = vpop.f32.mrf.mxu0
        %v1113 = vadd.f32 %v777, %v1112
        %v1114 = vpop.f32.mrf.mxu0
        %v1115 = vadd.f32 %v779, %v1114
        %v1116 = vpop.f32.mrf.mxu0
        %v1117 = vadd.f32 %v781, %v1116
        %1118 = vmatprep.mubr.bf16.mxu0 0
        %1119 = vmatmul.mubr.bf16.gmra.mxu0 %v1026
        %v1120 = vpop.f32.mrf.mxu0
        %v1121 = vadd.f32 %v785, %v1120
        %v1122 = vpop.f32.mrf.mxu0
        %v1123 = vadd.f32 %v787, %v1122
        %v1124 = vpop.f32.mrf.mxu0
        %v1125 = vadd.f32 %v789, %v1124
        %v1126 = vpop.f32.mrf.mxu0
        %v1127 = vadd.f32 %v791, %v1126
        %1128 = vmatprep.mubr.bf16.mxu0 0
        %1129 = vmatmul.mubr.bf16.gmra.mxu0 %v1029
        %v1130 = vpop.f32.mrf.mxu0
        %v1131 = vadd.f32 %v795, %v1130
        %v1132 = vpop.f32.mrf.mxu0
        %v1133 = vadd.f32 %v797, %v1132
        %v1134 = vpop.f32.mrf.mxu0
        %v1135 = vadd.f32 %v799, %v1134
        %v1136 = vpop.f32.mrf.mxu0
        %v1137 = vadd.f32 %v801, %v1136
        %1138 = vmatprep.mubr.bf16.mxu0 0
        %1139 = vmatmul.mubr.bf16.gmra.mxu0 %v1032
        %v1140 = vpop.f32.mrf.mxu0
        %v1141 = vadd.f32 %v805, %v1140
        %v1142 = vpop.f32.mrf.mxu0
        %v1143 = vadd.f32 %v807, %v1142
        %v1144 = vpop.f32.mrf.mxu0
        %v1145 = vadd.f32 %v809, %v1144
        %v1146 = vpop.f32.mrf.mxu0
        %v1147 = vadd.f32 %v811, %v1146
        %1148 = vmatprep.mubr.bf16.mxu0 0
        %1149 = vmatmul.mubr.bf16.gmra.mxu0 %v1035
        %v1150 = vpop.f32.mrf.mxu0
        %v1151 = vadd.f32 %v815, %v1150
        %v1152 = vpop.f32.mrf.mxu0
        %v1153 = vadd.f32 %v817, %v1152
        %v1154 = vpop.f32.mrf.mxu0
        %v1155 = vadd.f32 %v819, %v1154
        %v1156 = vpop.f32.mrf.mxu0
        %v1157 = vadd.f32 %v821, %v1156
        %1158 = vmatprep.mubr.bf16.mxu0 0
        %1159 = vmatmul.mubr.bf16.gmra.mxu0 %v1038
        %v1160 = vpop.f32.mrf.mxu0
        %v1161 = vadd.f32 %v825, %v1160
        %v1162 = vpop.f32.mrf.mxu0
        %v1163 = vadd.f32 %v827, %v1162
        %v1164 = vpop.f32.mrf.mxu0
        %v1165 = vadd.f32 %v829, %v1164
        %v1166 = vpop.f32.mrf.mxu0
        %v1167 = vadd.f32 %v831, %v1166
        %1168 = vmatprep.mubr.bf16.mxu0 0
        %1169 = vmatmul.mubr.bf16.gmra.mxu0 %v1041
        %v1170 = vpop.f32.mrf.mxu0
        %v1171 = vadd.f32 %v835, %v1170
        %v1172 = vpop.f32.mrf.mxu0
        %v1173 = vadd.f32 %v837, %v1172
        %v1174 = vpop.f32.mrf.mxu0
        %v1175 = vadd.f32 %v839, %v1174
        %v1176 = vpop.f32.mrf.mxu0
        %v1177 = vadd.f32 %v841, %v1176
        %1178 = vmatprep.mubr.bf16.mxu0 0
        %1179 = vmatmul.mubr.bf16.gmra.mxu0 %v1044
        %v1180 = vpop.f32.mrf.mxu0
        %v1181 = vadd.f32 %v845, %v1180
        %v1182 = vpop.f32.mrf.mxu0
        %v1183 = vadd.f32 %v847, %v1182
        %v1184 = vpop.f32.mrf.mxu0
        %v1185 = vadd.f32 %v849, %v1184
        %v1186 = vpop.f32.mrf.mxu0
        %v1187 = vadd.f32 %v851, %v1186
        %1188 = vmatprep.mubr.bf16.mxu0 0
        %1189 = vmatmul.mubr.bf16.gmra.mxu0 %v1047
        %v1190 = vpop.f32.mrf.mxu0
        %v1191 = vadd.f32 %v855, %v1190
        %v1192 = vpop.f32.mrf.mxu0
        %v1193 = vadd.f32 %v857, %v1192
        %v1194 = vpop.f32.mrf.mxu0
        %v1195 = vadd.f32 %v859, %v1194
        %v1196 = vpop.f32.mrf.mxu0
        %v1197 = vadd.f32 %v861, %v1196
        %1198 = vmatprep.mubr.bf16.mxu0 0
        %1199 = vmatmul.mubr.bf16.gmra.mxu0 %v1050
        %v1200 = vpop.f32.mrf.mxu0
        %v1201 = vadd.f32 %v865, %v1200
        %v1202 = vpop.f32.mrf.mxu0
        %v1203 = vadd.f32 %v867, %v1202
        %v1204 = vpop.f32.mrf.mxu0
        %v1205 = vadd.f32 %v869, %v1204
        %v1206 = vpop.f32.mrf.mxu0
        %v1207 = vadd.f32 %v871, %v1206
        %1208 = vmatprep.mubr.bf16.mxu0 0
        %1209 = vmatmul.mubr.bf16.gmra.mxu0 %v1053
        %v1210 = vpop.f32.mrf.mxu0
        %v1211 = vadd.f32 %v875, %v1210
        %v1212 = vpop.f32.mrf.mxu0
        %v1213 = vadd.f32 %v877, %v1212
        %v1214 = vpop.f32.mrf.mxu0
        %v1215 = vadd.f32 %v879, %v1214
        %v1216 = vpop.f32.mrf.mxu0
        %v1217 = vadd.f32 %v881, %v1216
        %1218 = vmatprep.mubr.bf16.mxu0 0
        %1219 = vmatmul.mubr.bf16.gmra.mxu0 %v1056
        %v1220 = vpop.f32.mrf.mxu0
        %v1221 = vadd.f32 %v885, %v1220
        %v1222 = vpop.f32.mrf.mxu0
        %v1223 = vadd.f32 %v887, %v1222
        %v1224 = vpop.f32.mrf.mxu0
        %v1225 = vadd.f32 %v889, %v1224
        %v1226 = vpop.f32.mrf.mxu0
        %v1227 = vadd.f32 %v891, %v1226
        %1228 = vmatprep.mubr.bf16.mxu0 0
        %1229 = vmatmul.mubr.bf16.gmra.mxu0 %v1059
        %v1230 = vpop.f32.mrf.mxu0
        %v1231 = vadd.f32 %v895, %v1230
        %v1232 = vpop.f32.mrf.mxu0
        %v1233 = vadd.f32 %v897, %v1232
        %v1234 = vpop.f32.mrf.mxu0
        %v1235 = vadd.f32 %v899, %v1234
        %v1236 = vpop.f32.mrf.mxu0
        %v1237 = vadd.f32 %v901, %v1236
        %1238 = vmatprep.mubr.bf16.mxu0 0
        %1239 = vmatmul.mubr.bf16.gmra.mxu0 %v1062
        %v1240 = vpop.f32.mrf.mxu0
        %v1241 = vadd.f32 %v905, %v1240
        %v1242 = vpop.f32.mrf.mxu0
        %v1243 = vadd.f32 %v907, %v1242
        %v1244 = vpop.f32.mrf.mxu0
        %v1245 = vadd.f32 %v909, %v1244
        %v1246 = vpop.f32.mrf.mxu0
        %v1247 = vadd.f32 %v911, %v1246
        %1248 = vmatprep.mubr.bf16.mxu0 0
        %1249 = vmatmul.mubr.bf16.gmra.mxu0 %v1065
        %v1250 = vpop.f32.mrf.mxu0
        %v1251 = vadd.f32 %v915, %v1250
        %v1252 = vpop.f32.mrf.mxu0
        %v1253 = vadd.f32 %v917, %v1252
        %v1254 = vpop.f32.mrf.mxu0
        %v1255 = vadd.f32 %v919, %v1254
        %v1256 = vpop.f32.mrf.mxu0
        %v1257 = vadd.f32 %v921, %v1256
        %1258 = vmatprep.mubr.bf16.mxu0 0
        %1259 = vmatmul.mubr.bf16.gmra.mxu0 %v1068
        %v1260 = vpop.f32.mrf.mxu0
        %v1261 = vadd.f32 %v925, %v1260
        %v1262 = vpop.f32.mrf.mxu0
        %v1263 = vadd.f32 %v927, %v1262
        %v1264 = vpop.f32.mrf.mxu0
        %v1265 = vadd.f32 %v929, %v1264
        %v1266 = vpop.f32.mrf.mxu0
        %v1267 = vadd.f32 %v931, %v1266
        %1268 = vdwg.mxu0
        %v1269 = vld [vmem:[%s188] sm:$0xe]
        %v1270 = vld [vmem:[%s188 + $0x4] sm:$0xf]
        %v1271 = vld [vmem:[%s188 + $0x8] sm:$0x1]
        %v1272 = vld [vmem:[%s188 + $0xc] sm:$0xe]
        %v1273 = vld [vmem:[%s188 + $0x10] sm:$0xf]
        %v1274 = vld [vmem:[%s188 + $0x14] sm:$0x1]
        %v1275 = vld [vmem:[%s188 + $0x18] sm:$0xe]
        %v1276 = vld [vmem:[%s188 + $0x1c] sm:$0xf]
        %v1277 = vld [vmem:[%s188 + $0x20] sm:$0x1]
        %v1278 = vld [vmem:[%s188 + $0x24] sm:$0xe]
        %v1279 = vld [vmem:[%s188 + $0x28] sm:$0xf]
        %v1280 = vld [vmem:[%s188 + $0x2c] sm:$0x1]
        %v1281 = vld [vmem:[%s188 + $0x30] sm:$0xe]
        %v1282 = vld [vmem:[%s188 + $0x34] sm:$0xf]
        %v1283 = vld [vmem:[%s188 + $0x38] sm:$0x1]
        %v1284 = vld [vmem:[%s188 + $0x3c] sm:$0xe]
        %v1285 = vld [vmem:[%s188 + $0x40] sm:$0xf]
        %v1286 = vld [vmem:[%s188 + $0x44] sm:$0x1]
        %v1287 = vld [vmem:[%s188 + $0x48] sm:$0xe]
        %v1288 = vld [vmem:[%s188 + $0x4c] sm:$0xf]
        %v1289 = vld [vmem:[%s188 + $0x50] sm:$0x1]
        %v1290 = vld [vmem:[%s188 + $0x54] sm:$0xe]
        %v1291 = vld [vmem:[%s188 + $0x58] sm:$0xf]
        %v1292 = vld [vmem:[%s188 + $0x5c] sm:$0x1]
        %v1293 = vld [vmem:[%s188 + $0x60] sm:$0xe]
        %v1294 = vld [vmem:[%s188 + $0x64] sm:$0xf]
        %v1295 = vld [vmem:[%s188 + $0x68] sm:$0x1]
        %v1296 = vld [vmem:[%s188 + $0x6c] sm:$0xe]
        %v1297 = vld [vmem:[%s188 + $0x70] sm:$0xf]
        %v1298 = vld [vmem:[%s188 + $0x74] sm:$0x1]
        %v1299 = vld [vmem:[%s188 + $0x78] sm:$0xe]
        %v1300 = vld [vmem:[%s188 + $0x7c] sm:$0xf]
        %v1301 = vld [vmem:[%s188 + $0x80] sm:$0x1]
        %v1302 = vld [vmem:[%s188 + $0x84] sm:$0xe]
        %v1303 = vld [vmem:[%s188 + $0x88] sm:$0xf]
        %v1304 = vld [vmem:[%s188 + $0x8c] sm:$0x1]
        %v1305 = vld [vmem:[%s188 + $0x90] sm:$0xe]
        %v1306 = vld [vmem:[%s188 + $0x94] sm:$0xf]
        %v1307 = vld [vmem:[%s188 + $0x98] sm:$0x1]
        %v1308 = vld [vmem:[%s188 + $0x9c] sm:$0xe]
        %v1309 = vld [vmem:[%s188 + $0xa0] sm:$0xf]
        %v1310 = vld [vmem:[%s188 + $0xa4] sm:$0x1]
        %v1311 = vld [vmem:[%s188 + $0xa8] sm:$0xe]
        %v1312 = vld [vmem:[%s188 + $0xac] sm:$0xf]
        %v1313 = vld [vmem:[%s188 + $0xb0] sm:$0x1]
        %v1314 = vld [vmem:[%s188 + $0xb4] sm:$0xe]
        %v1315 = vld [vmem:[%s188 + $0xb8] sm:$0xf]
        %v1316 = vld [vmem:[%s188 + $0xbc] sm:$0x1]
        %vm1365 = vcmask 1042432
        %vm1366 = vcmask 1046532
        %vm1367 = vmor %vm1365, %vm1366
        %v1368 = vrot.slane %v1269, 5
        %v1369 = vrot.slane %v1368, 4
        %v1370 = vrot.slane %v1270, 5
        %v1371 = vsel %vm1367, %v1369, %v1370
        %v1372 = vrot.slane %v1370, 4
        %v1373 = vrot.slane %v1271, 5
        %v1374 = vsel %vm1367, %v1372, %v1373
        %v1375 = vrot.slane %v1272, 5
        %v1376 = vrot.slane %v1375, 4
        %v1377 = vrot.slane %v1273, 5
        %v1378 = vsel %vm1367, %v1376, %v1377
        %v1379 = vrot.slane %v1377, 4
        %v1380 = vrot.slane %v1274, 5
        %v1381 = vsel %vm1367, %v1379, %v1380
        %v1382 = vrot.slane %v1275, 5
        %v1383 = vrot.slane %v1382, 4
        %v1384 = vrot.slane %v1276, 5
        %v1385 = vsel %vm1367, %v1383, %v1384
        %v1386 = vrot.slane %v1384, 4
        %v1387 = vrot.slane %v1277, 5
        %v1388 = vsel %vm1367, %v1386, %v1387
        %v1389 = vrot.slane %v1278, 5
        %v1390 = vrot.slane %v1389, 4
        %v1391 = vrot.slane %v1279, 5
        %v1392 = vsel %vm1367, %v1390, %v1391
        %v1393 = vrot.slane %v1391, 4
        %v1394 = vrot.slane %v1280, 5
        %v1395 = vsel %vm1367, %v1393, %v1394
        %v1396 = vrot.slane %v1281, 5
        %v1397 = vrot.slane %v1396, 4
        %v1398 = vrot.slane %v1282, 5
        %v1399 = vsel %vm1367, %v1397, %v1398
        %v1400 = vrot.slane %v1398, 4
        %v1401 = vrot.slane %v1283, 5
        %v1402 = vsel %vm1367, %v1400, %v1401
        %v1403 = vrot.slane %v1284, 5
        %v1404 = vrot.slane %v1403, 4
        %v1405 = vrot.slane %v1285, 5
        %v1406 = vsel %vm1367, %v1404, %v1405
        %v1407 = vrot.slane %v1405, 4
        %v1408 = vrot.slane %v1286, 5
        %v1409 = vsel %vm1367, %v1407, %v1408
        %v1410 = vrot.slane %v1287, 5
        %v1411 = vrot.slane %v1410, 4
        %v1412 = vrot.slane %v1288, 5
        %v1413 = vsel %vm1367, %v1411, %v1412
        %v1414 = vrot.slane %v1412, 4
        %v1415 = vrot.slane %v1289, 5
        %v1416 = vsel %vm1367, %v1414, %v1415
        %v1417 = vrot.slane %v1290, 5
        %v1418 = vrot.slane %v1417, 4
        %v1419 = vrot.slane %v1291, 5
        %v1420 = vsel %vm1367, %v1418, %v1419
        %v1421 = vrot.slane %v1419, 4
        %v1422 = vrot.slane %v1292, 5
        %v1423 = vsel %vm1367, %v1421, %v1422
        %v1424 = vrot.slane %v1293, 5
        %v1425 = vrot.slane %v1424, 4
        %v1426 = vrot.slane %v1294, 5
        %v1427 = vsel %vm1367, %v1425, %v1426
        %v1428 = vrot.slane %v1426, 4
        %v1429 = vrot.slane %v1295, 5
        %v1430 = vsel %vm1367, %v1428, %v1429
        %v1431 = vrot.slane %v1296, 5
        %v1432 = vrot.slane %v1431, 4
        %v1433 = vrot.slane %v1297, 5
        %v1434 = vsel %vm1367, %v1432, %v1433
        %v1435 = vrot.slane %v1433, 4
        %v1436 = vrot.slane %v1298, 5
        %v1437 = vsel %vm1367, %v1435, %v1436
        %v1438 = vrot.slane %v1299, 5
        %v1439 = vrot.slane %v1438, 4
        %v1440 = vrot.slane %v1300, 5
        %v1441 = vsel %vm1367, %v1439, %v1440
        %v1442 = vrot.slane %v1440, 4
        %v1443 = vrot.slane %v1301, 5
        %v1444 = vsel %vm1367, %v1442, %v1443
        %v1445 = vrot.slane %v1302, 5
        %v1446 = vrot.slane %v1445, 4
        %v1447 = vrot.slane %v1303, 5
        %v1448 = vsel %vm1367, %v1446, %v1447
        %v1449 = vrot.slane %v1447, 4
        %v1450 = vrot.slane %v1304, 5
        %v1451 = vsel %vm1367, %v1449, %v1450
        %v1452 = vrot.slane %v1305, 5
        %v1453 = vrot.slane %v1452, 4
        %v1454 = vrot.slane %v1306, 5
        %v1455 = vsel %vm1367, %v1453, %v1454
        %v1456 = vrot.slane %v1454, 4
        %v1457 = vrot.slane %v1307, 5
        %v1458 = vsel %vm1367, %v1456, %v1457
        %v1459 = vrot.slane %v1308, 5
        %v1460 = vrot.slane %v1459, 4
        %v1461 = vrot.slane %v1309, 5
        %v1462 = vsel %vm1367, %v1460, %v1461
        %v1463 = vrot.slane %v1461, 4
        %v1464 = vrot.slane %v1310, 5
        %v1465 = vsel %vm1367, %v1463, %v1464
        %v1466 = vrot.slane %v1311, 5
        %v1467 = vrot.slane %v1466, 4
        %v1468 = vrot.slane %v1312, 5
        %v1469 = vsel %vm1367, %v1467, %v1468
        %v1470 = vrot.slane %v1468, 4
        %v1471 = vrot.slane %v1313, 5
        %v1472 = vsel %vm1367, %v1470, %v1471
        %v1473 = vrot.slane %v1314, 5
        %v1474 = vrot.slane %v1473, 4
        %v1475 = vrot.slane %v1315, 5
        %v1476 = vsel %vm1367, %v1474, %v1475
        %v1477 = vrot.slane %v1475, 4
        %v1478 = vrot.slane %v1316, 5
        %v1479 = vsel %vm1367, %v1477, %v1478
        %s1480 = scalar_lea.vmem %s1, 8
        %v1481 = vld [vmem:[%s1480] sm:$0xf]
        %v1482 = vunpack.c.l.b16 %v1371
        %v1483 = vunpack.c.l.b16 %v1374
        %v1484 = vunpack.c.l.b16 %v1378
        %v1485 = vunpack.c.l.b16 %v1381
        %v1486 = vunpack.c.l.b16 %v1385
        %v1487 = vunpack.c.l.b16 %v1388
        %v1488 = vunpack.c.l.b16 %v1392
        %v1489 = vunpack.c.l.b16 %v1395
        %v1490 = vunpack.c.l.b16 %v1399
        %v1491 = vunpack.c.l.b16 %v1402
        %v1492 = vunpack.c.l.b16 %v1406
        %v1493 = vunpack.c.l.b16 %v1409
        %v1494 = vunpack.c.l.b16 %v1413
        %v1495 = vunpack.c.l.b16 %v1416
        %v1496 = vunpack.c.l.b16 %v1420
        %v1497 = vunpack.c.l.b16 %v1423
        %v1498 = vunpack.c.l.b16 %v1427
        %v1499 = vunpack.c.l.b16 %v1430
        %v1500 = vunpack.c.l.b16 %v1434
        %v1501 = vunpack.c.l.b16 %v1437
        %v1502 = vunpack.c.l.b16 %v1441
        %v1503 = vunpack.c.l.b16 %v1444
        %v1504 = vunpack.c.l.b16 %v1448
        %v1505 = vunpack.c.l.b16 %v1451
        %v1506 = vunpack.c.l.b16 %v1455
        %v1507 = vunpack.c.l.b16 %v1458
        %v1508 = vunpack.c.l.b16 %v1462
        %v1509 = vunpack.c.l.b16 %v1465
        %v1510 = vunpack.c.l.b16 %v1469
        %v1511 = vunpack.c.l.b16 %v1472
        %v1512 = vunpack.c.l.b16 %v1476
        %v1513 = vunpack.c.l.b16 %v1479
        %v1514 = vpack.c.b16 %v1483, %v1482
        %v1515 = vpack.c.b16 %v1485, %v1484
        %v1516 = vpack.c.b16 %v1487, %v1486
        %v1517 = vpack.c.b16 %v1489, %v1488
        %v1518 = vpack.c.b16 %v1491, %v1490
        %v1519 = vpack.c.b16 %v1493, %v1492
        %v1520 = vpack.c.b16 %v1495, %v1494
        %v1521 = vpack.c.b16 %v1497, %v1496
        %v1522 = vpack.c.b16 %v1499, %v1498
        %v1523 = vpack.c.b16 %v1501, %v1500
        %v1524 = vpack.c.b16 %v1503, %v1502
        %v1525 = vpack.c.b16 %v1505, %v1504
        %v1526 = vpack.c.b16 %v1507, %v1506
        %v1527 = vpack.c.b16 %v1509, %v1508
        %v1528 = vpack.c.b16 %v1511, %v1510
        %v1529 = vpack.c.b16 %v1513, %v1512
        %v1532 = vunpack.c.l.s4 1983009808
        %v1533 = vunpack.c.0.s8 %v1532
        %v1534 = vlaneseq
        %v1535 = vshrl.u32 %v1534, 7
        %v1536 = vsub.s32 %v1533, %v1535
        %v1537 = vrot.slane %v1481, %v1536
        %v1538 = vcombine.high %v1537, %v1537
        %v1540 = vsel %vm684, %v1514, 0
        %v1543 = vsel %vm684, %v1515, 0
        %v1546 = vsel %vm684, %v1516, 0
        %v1549 = vsel %vm684, %v1517, 0
        %v1552 = vsel %vm684, %v1518, 0
        %v1555 = vsel %vm684, %v1519, 0
        %v1558 = vsel %vm684, %v1520, 0
        %v1561 = vsel %vm684, %v1521, 0
        %v1564 = vsel %vm684, %v1522, 0
        %v1567 = vsel %vm684, %v1523, 0
        %v1570 = vsel %vm684, %v1524, 0
        %v1573 = vsel %vm684, %v1525, 0
        %v1576 = vsel %vm684, %v1526, 0
        %v1579 = vsel %vm684, %v1527, 0
        %v1582 = vsel %vm684, %v1528, 0
        %v1585 = vsel %vm684, %v1529, 0
        %v1588 = vsel %vm733, %v1537, 0
        %v1591 = vsel %vm733, %v1538, 0
        %1593 = vmatprep.subr.bf16.mxu0 0
        %1594 = vmatpush1.bf16.msra.mxu0 0
        %1595 = vmatprep.subr.bf16.mxu0 0
        %1596 = vmatpush1.bf16.msra.mxu0 0
        %1597 = vmatprep.subr.bf16.mxu0 0
        %1598 = vmatpush1.bf16.msra.mxu0 0
        %1599 = vmatprep.subr.bf16.mxu0 0
        %1600 = vmatpush1.bf16.msra.mxu0 0
        %1601 = vmatprep.subr.bf16.mxu0 0
        %1602 = vmatpush1.bf16.msra.mxu0 0
        %1603 = vmatprep.subr.bf16.mxu0 0
        %1604 = vmatpush1.bf16.msra.mxu0 0
        %1605 = vmatprep.subr.bf16.mxu0 0
        %1606 = vmatpush1.bf16.msra.mxu0 0
        %1607 = vmatprep.subr.bf16.mxu0 %v1591
        %1608 = vmatpush1.bf16.msra.mxu0 %v1588
        %1609 = vmatprep.subr.bf16.mxu0 0
        %1610 = vmatpush2.bf16.msra.mxu0 0
        %1611 = vmatprep.subr.bf16.mxu0 0
        %1612 = vmatpush2.bf16.msra.mxu0 0
        %1613 = vmatprep.subr.bf16.mxu0 0
        %1614 = vmatpush2.bf16.msra.mxu0 0
        %1615 = vmatprep.subr.bf16.mxu0 0
        %1616 = vmatpush2.bf16.msra.mxu0 0
        %1617 = vmatprep.subr.bf16.mxu0 0
        %1618 = vmatpush2.bf16.msra.mxu0 0
        %1619 = vmatprep.subr.bf16.mxu0 0
        %1620 = vmatpush2.bf16.msra.mxu0 0
        %1621 = vmatprep.subr.bf16.mxu0 0
        %1622 = vmatpush2.bf16.msra.mxu0 0
        %1623 = vmatprep.subr.bf16.mxu0 0
        %1624 = vmatpush2.bf16.msra.mxu0 0
        %1625 = vmatprep.mubr.bf16.mxu0 0
        %1626 = vmatmul.mubr.bf16.gmra.mxu0 %v1540
        %v1627 = vpop.f32.mrf.mxu0
        %v1628 = vadd.f32 0.0, %v1627
        %v1629 = vpop.f32.mrf.mxu0
        %v1630 = vadd.f32 0.0, %v1629
        %v1631 = vpop.f32.mrf.mxu0
        %v1632 = vadd.f32 0.0, %v1631
        %v1633 = vpop.f32.mrf.mxu0
        %v1634 = vadd.f32 0.0, %v1633
        %1635 = vmatprep.mubr.bf16.mxu0 0
        %1636 = vmatmul.mubr.bf16.gmra.mxu0 %v1543
        %v1637 = vpop.f32.mrf.mxu0
        %v1638 = vadd.f32 0.0, %v1637
        %v1639 = vpop.f32.mrf.mxu0
        %v1640 = vadd.f32 0.0, %v1639
        %v1641 = vpop.f32.mrf.mxu0
        %v1642 = vadd.f32 0.0, %v1641
        %v1643 = vpop.f32.mrf.mxu0
        %v1644 = vadd.f32 0.0, %v1643
        %1645 = vmatprep.mubr.bf16.mxu0 0
        %1646 = vmatmul.mubr.bf16.gmra.mxu0 %v1546
        %v1647 = vpop.f32.mrf.mxu0
        %v1648 = vadd.f32 0.0, %v1647
        %v1649 = vpop.f32.mrf.mxu0
        %v1650 = vadd.f32 0.0, %v1649
        %v1651 = vpop.f32.mrf.mxu0
        %v1652 = vadd.f32 0.0, %v1651
        %v1653 = vpop.f32.mrf.mxu0
        %v1654 = vadd.f32 0.0, %v1653
        %1655 = vmatprep.mubr.bf16.mxu0 0
        %1656 = vmatmul.mubr.bf16.gmra.mxu0 %v1549
        %v1657 = vpop.f32.mrf.mxu0
        %v1658 = vadd.f32 0.0, %v1657
        %v1659 = vpop.f32.mrf.mxu0
        %v1660 = vadd.f32 0.0, %v1659
        %v1661 = vpop.f32.mrf.mxu0
        %v1662 = vadd.f32 0.0, %v1661
        %v1663 = vpop.f32.mrf.mxu0
        %v1664 = vadd.f32 0.0, %v1663
        %1665 = vmatprep.mubr.bf16.mxu0 0
        %1666 = vmatmul.mubr.bf16.gmra.mxu0 %v1552
        %v1667 = vpop.f32.mrf.mxu0
        %v1668 = vadd.f32 0.0, %v1667
        %v1669 = vpop.f32.mrf.mxu0
        %v1670 = vadd.f32 0.0, %v1669
        %v1671 = vpop.f32.mrf.mxu0
        %v1672 = vadd.f32 0.0, %v1671
        %v1673 = vpop.f32.mrf.mxu0
        %v1674 = vadd.f32 0.0, %v1673
        %1675 = vmatprep.mubr.bf16.mxu0 0
        %1676 = vmatmul.mubr.bf16.gmra.mxu0 %v1555
        %v1677 = vpop.f32.mrf.mxu0
        %v1678 = vadd.f32 0.0, %v1677
        %v1679 = vpop.f32.mrf.mxu0
        %v1680 = vadd.f32 0.0, %v1679
        %v1681 = vpop.f32.mrf.mxu0
        %v1682 = vadd.f32 0.0, %v1681
        %v1683 = vpop.f32.mrf.mxu0
        %v1684 = vadd.f32 0.0, %v1683
        %1685 = vmatprep.mubr.bf16.mxu0 0
        %1686 = vmatmul.mubr.bf16.gmra.mxu0 %v1558
        %v1687 = vpop.f32.mrf.mxu0
        %v1688 = vadd.f32 0.0, %v1687
        %v1689 = vpop.f32.mrf.mxu0
        %v1690 = vadd.f32 0.0, %v1689
        %v1691 = vpop.f32.mrf.mxu0
        %v1692 = vadd.f32 0.0, %v1691
        %v1693 = vpop.f32.mrf.mxu0
        %v1694 = vadd.f32 0.0, %v1693
        %1695 = vmatprep.mubr.bf16.mxu0 0
        %1696 = vmatmul.mubr.bf16.gmra.mxu0 %v1561
        %v1697 = vpop.f32.mrf.mxu0
        %v1698 = vadd.f32 0.0, %v1697
        %v1699 = vpop.f32.mrf.mxu0
        %v1700 = vadd.f32 0.0, %v1699
        %v1701 = vpop.f32.mrf.mxu0
        %v1702 = vadd.f32 0.0, %v1701
        %v1703 = vpop.f32.mrf.mxu0
        %v1704 = vadd.f32 0.0, %v1703
        %1705 = vmatprep.mubr.bf16.mxu0 0
        %1706 = vmatmul.mubr.bf16.gmra.mxu0 %v1564
        %v1707 = vpop.f32.mrf.mxu0
        %v1708 = vadd.f32 0.0, %v1707
        %v1709 = vpop.f32.mrf.mxu0
        %v1710 = vadd.f32 0.0, %v1709
        %v1711 = vpop.f32.mrf.mxu0
        %v1712 = vadd.f32 0.0, %v1711
        %v1713 = vpop.f32.mrf.mxu0
        %v1714 = vadd.f32 0.0, %v1713
        %1715 = vmatprep.mubr.bf16.mxu0 0
        %1716 = vmatmul.mubr.bf16.gmra.mxu0 %v1567
        %v1717 = vpop.f32.mrf.mxu0
        %v1718 = vadd.f32 0.0, %v1717
        %v1719 = vpop.f32.mrf.mxu0
        %v1720 = vadd.f32 0.0, %v1719
        %v1721 = vpop.f32.mrf.mxu0
        %v1722 = vadd.f32 0.0, %v1721
        %v1723 = vpop.f32.mrf.mxu0
        %v1724 = vadd.f32 0.0, %v1723
        %1725 = vmatprep.mubr.bf16.mxu0 0
        %1726 = vmatmul.mubr.bf16.gmra.mxu0 %v1570
        %v1727 = vpop.f32.mrf.mxu0
        %v1728 = vadd.f32 0.0, %v1727
        %v1729 = vpop.f32.mrf.mxu0
        %v1730 = vadd.f32 0.0, %v1729
        %v1731 = vpop.f32.mrf.mxu0
        %v1732 = vadd.f32 0.0, %v1731
        %v1733 = vpop.f32.mrf.mxu0
        %v1734 = vadd.f32 0.0, %v1733
        %1735 = vmatprep.mubr.bf16.mxu0 0
        %1736 = vmatmul.mubr.bf16.gmra.mxu0 %v1573
        %v1737 = vpop.f32.mrf.mxu0
        %v1738 = vadd.f32 0.0, %v1737
        %v1739 = vpop.f32.mrf.mxu0
        %v1740 = vadd.f32 0.0, %v1739
        %v1741 = vpop.f32.mrf.mxu0
        %v1742 = vadd.f32 0.0, %v1741
        %v1743 = vpop.f32.mrf.mxu0
        %v1744 = vadd.f32 0.0, %v1743
        %1745 = vmatprep.mubr.bf16.mxu0 0
        %1746 = vmatmul.mubr.bf16.gmra.mxu0 %v1576
        %v1747 = vpop.f32.mrf.mxu0
        %v1748 = vadd.f32 0.0, %v1747
        %v1749 = vpop.f32.mrf.mxu0
        %v1750 = vadd.f32 0.0, %v1749
        %v1751 = vpop.f32.mrf.mxu0
        %v1752 = vadd.f32 0.0, %v1751
        %v1753 = vpop.f32.mrf.mxu0
        %v1754 = vadd.f32 0.0, %v1753
        %1755 = vmatprep.mubr.bf16.mxu0 0
        %1756 = vmatmul.mubr.bf16.gmra.mxu0 %v1579
        %v1757 = vpop.f32.mrf.mxu0
        %v1758 = vadd.f32 0.0, %v1757
        %v1759 = vpop.f32.mrf.mxu0
        %v1760 = vadd.f32 0.0, %v1759
        %v1761 = vpop.f32.mrf.mxu0
        %v1762 = vadd.f32 0.0, %v1761
        %v1763 = vpop.f32.mrf.mxu0
        %v1764 = vadd.f32 0.0, %v1763
        %1765 = vmatprep.mubr.bf16.mxu0 0
        %1766 = vmatmul.mubr.bf16.gmra.mxu0 %v1582
        %v1767 = vpop.f32.mrf.mxu0
        %v1768 = vadd.f32 0.0, %v1767
        %v1769 = vpop.f32.mrf.mxu0
        %v1770 = vadd.f32 0.0, %v1769
        %v1771 = vpop.f32.mrf.mxu0
        %v1772 = vadd.f32 0.0, %v1771
        %v1773 = vpop.f32.mrf.mxu0
        %v1774 = vadd.f32 0.0, %v1773
        %1775 = vmatprep.mubr.bf16.mxu0 0
        %1776 = vmatmul.mubr.bf16.gmra.mxu0 %v1585
        %v1777 = vpop.f32.mrf.mxu0
        %v1778 = vadd.f32 0.0, %v1777
        %v1779 = vpop.f32.mrf.mxu0
        %v1780 = vadd.f32 0.0, %v1779
        %v1781 = vpop.f32.mrf.mxu0
        %v1782 = vadd.f32 0.0, %v1781
        %v1783 = vpop.f32.mrf.mxu0
        %v1784 = vadd.f32 0.0, %v1783
        %1785 = vdwg.mxu0
        %v1786 = vadd.f32 %v1111, %v1628
        %v1787 = vadd.f32 %v1113, %v1630
        %v1788 = vadd.f32 %v1115, %v1632
        %v1789 = vadd.f32 %v1117, %v1634
        %v1790 = vadd.f32 %v1121, %v1638
        %v1791 = vadd.f32 %v1123, %v1640
        %v1792 = vadd.f32 %v1125, %v1642
        %v1793 = vadd.f32 %v1127, %v1644
        %v1794 = vadd.f32 %v1131, %v1648
        %v1795 = vadd.f32 %v1133, %v1650
        %v1796 = vadd.f32 %v1135, %v1652
        %v1797 = vadd.f32 %v1137, %v1654
        %v1798 = vadd.f32 %v1141, %v1658
        %v1799 = vadd.f32 %v1143, %v1660
        %v1800 = vadd.f32 %v1145, %v1662
        %v1801 = vadd.f32 %v1147, %v1664
        %v1802 = vadd.f32 %v1151, %v1668
        %v1803 = vadd.f32 %v1153, %v1670
        %v1804 = vadd.f32 %v1155, %v1672
        %v1805 = vadd.f32 %v1157, %v1674
        %v1806 = vadd.f32 %v1161, %v1678
        %v1807 = vadd.f32 %v1163, %v1680
        %v1808 = vadd.f32 %v1165, %v1682
        %v1809 = vadd.f32 %v1167, %v1684
        %v1810 = vadd.f32 %v1171, %v1688
        %v1811 = vadd.f32 %v1173, %v1690
        %v1812 = vadd.f32 %v1175, %v1692
        %v1813 = vadd.f32 %v1177, %v1694
        %v1814 = vadd.f32 %v1181, %v1698
        %v1815 = vadd.f32 %v1183, %v1700
        %v1816 = vadd.f32 %v1185, %v1702
        %v1817 = vadd.f32 %v1187, %v1704
        %v1818 = vadd.f32 %v1191, %v1708
        %v1819 = vadd.f32 %v1193, %v1710
        %v1820 = vadd.f32 %v1195, %v1712
        %v1821 = vadd.f32 %v1197, %v1714
        %v1822 = vadd.f32 %v1201, %v1718
        %v1823 = vadd.f32 %v1203, %v1720
        %v1824 = vadd.f32 %v1205, %v1722
        %v1825 = vadd.f32 %v1207, %v1724
        %v1826 = vadd.f32 %v1211, %v1728
        %v1827 = vadd.f32 %v1213, %v1730
        %v1828 = vadd.f32 %v1215, %v1732
        %v1829 = vadd.f32 %v1217, %v1734
        %v1830 = vadd.f32 %v1221, %v1738
        %v1831 = vadd.f32 %v1223, %v1740
        %v1832 = vadd.f32 %v1225, %v1742
        %v1833 = vadd.f32 %v1227, %v1744
        %v1834 = vadd.f32 %v1231, %v1748
        %v1835 = vadd.f32 %v1233, %v1750
        %v1836 = vadd.f32 %v1235, %v1752
        %v1837 = vadd.f32 %v1237, %v1754
        %v1838 = vadd.f32 %v1241, %v1758
        %v1839 = vadd.f32 %v1243, %v1760
        %v1840 = vadd.f32 %v1245, %v1762
        %v1841 = vadd.f32 %v1247, %v1764
        %v1842 = vadd.f32 %v1251, %v1768
        %v1843 = vadd.f32 %v1253, %v1770
        %v1844 = vadd.f32 %v1255, %v1772
        %v1845 = vadd.f32 %v1257, %v1774
        %v1846 = vadd.f32 %v1261, %v1778
        %v1847 = vadd.f32 %v1263, %v1780
        %v1848 = vadd.f32 %v1265, %v1782
        %v1849 = vadd.f32 %v1267, %v1784
        %s1850 = sadd.s32 %s185, 1
        %s1851 = smul.u32 %s1850, 3
        %s1852 = smul.addr %s1851, 4
        %s1853 = scalar_lea.vmem %s182, %s1852
        %v1854 = vld [vmem:[%s1853] sm:$0xf]
        %v1855 = vld [vmem:[%s1853 + $0x4] sm:$0xf]
        %v1856 = vld [vmem:[%s1853 + $0xc] sm:$0xf]
        %v1857 = vld [vmem:[%s1853 + $0x10] sm:$0xf]
        %v1858 = vld [vmem:[%s1853 + $0x18] sm:$0xf]
        %v1859 = vld [vmem:[%s1853 + $0x1c] sm:$0xf]
        %v1860 = vld [vmem:[%s1853 + $0x24] sm:$0xf]
        %v1861 = vld [vmem:[%s1853 + $0x28] sm:$0xf]
        %v1862 = vld [vmem:[%s1853 + $0x30] sm:$0xf]
        %v1863 = vld [vmem:[%s1853 + $0x34] sm:$0xf]
        %v1864 = vld [vmem:[%s1853 + $0x3c] sm:$0xf]
        %v1865 = vld [vmem:[%s1853 + $0x40] sm:$0xf]
        %v1866 = vld [vmem:[%s1853 + $0x48] sm:$0xf]
        %v1867 = vld [vmem:[%s1853 + $0x4c] sm:$0xf]
        %v1868 = vld [vmem:[%s1853 + $0x54] sm:$0xf]
        %v1869 = vld [vmem:[%s1853 + $0x58] sm:$0xf]
        %v1870 = vld [vmem:[%s1853 + $0x60] sm:$0xf]
        %v1871 = vld [vmem:[%s1853 + $0x64] sm:$0xf]
        %v1872 = vld [vmem:[%s1853 + $0x6c] sm:$0xf]
        %v1873 = vld [vmem:[%s1853 + $0x70] sm:$0xf]
        %v1874 = vld [vmem:[%s1853 + $0x78] sm:$0xf]
        %v1875 = vld [vmem:[%s1853 + $0x7c] sm:$0xf]
        %v1876 = vld [vmem:[%s1853 + $0x84] sm:$0xf]
        %v1877 = vld [vmem:[%s1853 + $0x88] sm:$0xf]
        %v1878 = vld [vmem:[%s1853 + $0x90] sm:$0xf]
        %v1879 = vld [vmem:[%s1853 + $0x94] sm:$0xf]
        %v1880 = vld [vmem:[%s1853 + $0x9c] sm:$0xf]
        %v1881 = vld [vmem:[%s1853 + $0xa0] sm:$0xf]
        %v1882 = vld [vmem:[%s1853 + $0xa8] sm:$0xf]
        %v1883 = vld [vmem:[%s1853 + $0xac] sm:$0xf]
        %v1884 = vld [vmem:[%s1853 + $0xb4] sm:$0xf]
        %v1885 = vld [vmem:[%s1853 + $0xb8] sm:$0xf]
        %s1886 = scalar_lea.vmem %s1, 12
        %v1887 = vld [vmem:[%s1886] sm:$0xf]
        %v1920 = vunpack.c.l.b16 %v1854
        %v1921 = vunpack.c.l.b16 %v1855
        %v1922 = vunpack.c.l.b16 %v1856
        %v1923 = vunpack.c.l.b16 %v1857
        %v1924 = vunpack.c.l.b16 %v1858
        %v1925 = vunpack.c.l.b16 %v1859
        %v1926 = vunpack.c.l.b16 %v1860
        %v1927 = vunpack.c.l.b16 %v1861
        %v1928 = vunpack.c.l.b16 %v1862
        %v1929 = vunpack.c.l.b16 %v1863
        %v1930 = vunpack.c.l.b16 %v1864
        %v1931 = vunpack.c.l.b16 %v1865
        %v1932 = vunpack.c.l.b16 %v1866
        %v1933 = vunpack.c.l.b16 %v1867
        %v1934 = vunpack.c.l.b16 %v1868
        %v1935 = vunpack.c.l.b16 %v1869
        %v1936 = vunpack.c.l.b16 %v1870
        %v1937 = vunpack.c.l.b16 %v1871
        %v1938 = vunpack.c.l.b16 %v1872
        %v1939 = vunpack.c.l.b16 %v1873
        %v1940 = vunpack.c.l.b16 %v1874
        %v1941 = vunpack.c.l.b16 %v1875
        %v1942 = vunpack.c.l.b16 %v1876
        %v1943 = vunpack.c.l.b16 %v1877
        %v1944 = vunpack.c.l.b16 %v1878
        %v1945 = vunpack.c.l.b16 %v1879
        %v1946 = vunpack.c.l.b16 %v1880
        %v1947 = vunpack.c.l.b16 %v1881
        %v1948 = vunpack.c.l.b16 %v1882
        %v1949 = vunpack.c.l.b16 %v1883
        %v1950 = vunpack.c.l.b16 %v1884
        %v1951 = vunpack.c.l.b16 %v1885
        %v1952 = vpack.c.b16 %v1921, %v1920
        %v1953 = vpack.c.b16 %v1923, %v1922
        %v1954 = vpack.c.b16 %v1925, %v1924
        %v1955 = vpack.c.b16 %v1927, %v1926
        %v1956 = vpack.c.b16 %v1929, %v1928
        %v1957 = vpack.c.b16 %v1931, %v1930
        %v1958 = vpack.c.b16 %v1933, %v1932
        %v1959 = vpack.c.b16 %v1935, %v1934
        %v1960 = vpack.c.b16 %v1937, %v1936
        %v1961 = vpack.c.b16 %v1939, %v1938
        %v1962 = vpack.c.b16 %v1941, %v1940
        %v1963 = vpack.c.b16 %v1943, %v1942
        %v1964 = vpack.c.b16 %v1945, %v1944
        %v1965 = vpack.c.b16 %v1947, %v1946
        %v1966 = vpack.c.b16 %v1949, %v1948
        %v1967 = vpack.c.b16 %v1951, %v1950
        %v1970 = vunpack.c.l.s4 1983009808
        %v1971 = vunpack.c.0.s8 %v1970
        %v1972 = vlaneseq
        %v1973 = vshrl.u32 %v1972, 7
        %v1974 = vsub.s32 %v1971, %v1973
        %v1975 = vrot.slane %v1887, %v1974
        %v1976 = vcombine.high %v1975, %v1975
        %v1978 = vsel %vm684, %v1952, 0
        %v1981 = vsel %vm684, %v1953, 0
        %v1984 = vsel %vm684, %v1954, 0
        %v1987 = vsel %vm684, %v1955, 0
        %v1990 = vsel %vm684, %v1956, 0
        %v1993 = vsel %vm684, %v1957, 0
        %v1996 = vsel %vm684, %v1958, 0
        %v1999 = vsel %vm684, %v1959, 0
        %v2002 = vsel %vm684, %v1960, 0
        %v2005 = vsel %vm684, %v1961, 0
        %v2008 = vsel %vm684, %v1962, 0
        %v2011 = vsel %vm684, %v1963, 0
        %v2014 = vsel %vm684, %v1964, 0
        %v2017 = vsel %vm684, %v1965, 0
        %v2020 = vsel %vm684, %v1966, 0
        %v2023 = vsel %vm684, %v1967, 0
        %v2026 = vsel %vm733, %v1975, 0
        %v2029 = vsel %vm733, %v1976, 0
        %2031 = vmatprep.subr.bf16.mxu0 0
        %2032 = vmatpush1.bf16.msra.mxu0 0
        %2033 = vmatprep.subr.bf16.mxu0 0
        %2034 = vmatpush1.bf16.msra.mxu0 0
        %2035 = vmatprep.subr.bf16.mxu0 0
        %2036 = vmatpush1.bf16.msra.mxu0 0
        %2037 = vmatprep.subr.bf16.mxu0 0
        %2038 = vmatpush1.bf16.msra.mxu0 0
        %2039 = vmatprep.subr.bf16.mxu0 0
        %2040 = vmatpush1.bf16.msra.mxu0 0
        %2041 = vmatprep.subr.bf16.mxu0 0
        %2042 = vmatpush1.bf16.msra.mxu0 0
        %2043 = vmatprep.subr.bf16.mxu0 0
        %2044 = vmatpush1.bf16.msra.mxu0 0
        %2045 = vmatprep.subr.bf16.mxu0 %v2029
        %2046 = vmatpush1.bf16.msra.mxu0 %v2026
        %2047 = vmatprep.subr.bf16.mxu0 0
        %2048 = vmatpush2.bf16.msra.mxu0 0
        %2049 = vmatprep.subr.bf16.mxu0 0
        %2050 = vmatpush2.bf16.msra.mxu0 0
        %2051 = vmatprep.subr.bf16.mxu0 0
        %2052 = vmatpush2.bf16.msra.mxu0 0
        %2053 = vmatprep.subr.bf16.mxu0 0
        %2054 = vmatpush2.bf16.msra.mxu0 0
        %2055 = vmatprep.subr.bf16.mxu0 0
        %2056 = vmatpush2.bf16.msra.mxu0 0
        %2057 = vmatprep.subr.bf16.mxu0 0
        %2058 = vmatpush2.bf16.msra.mxu0 0
        %2059 = vmatprep.subr.bf16.mxu0 0
        %2060 = vmatpush2.bf16.msra.mxu0 0
        %2061 = vmatprep.subr.bf16.mxu0 0
        %2062 = vmatpush2.bf16.msra.mxu0 0
        %2063 = vmatprep.mubr.bf16.mxu0 0
        %2064 = vmatmul.mubr.bf16.gmra.mxu0 %v1978
        %v2065 = vpop.f32.mrf.mxu0
        %v2066 = vadd.f32 0.0, %v2065
        %v2067 = vpop.f32.mrf.mxu0
        %v2068 = vadd.f32 0.0, %v2067
        %v2069 = vpop.f32.mrf.mxu0
        %v2070 = vadd.f32 0.0, %v2069
        %v2071 = vpop.f32.mrf.mxu0
        %v2072 = vadd.f32 0.0, %v2071
        %2073 = vmatprep.mubr.bf16.mxu0 0
        %2074 = vmatmul.mubr.bf16.gmra.mxu0 %v1981
        %v2075 = vpop.f32.mrf.mxu0
        %v2076 = vadd.f32 0.0, %v2075
        %v2077 = vpop.f32.mrf.mxu0
        %v2078 = vadd.f32 0.0, %v2077
        %v2079 = vpop.f32.mrf.mxu0
        %v2080 = vadd.f32 0.0, %v2079
        %v2081 = vpop.f32.mrf.mxu0
        %v2082 = vadd.f32 0.0, %v2081
        %2083 = vmatprep.mubr.bf16.mxu0 0
        %2084 = vmatmul.mubr.bf16.gmra.mxu0 %v1984
        %v2085 = vpop.f32.mrf.mxu0
        %v2086 = vadd.f32 0.0, %v2085
        %v2087 = vpop.f32.mrf.mxu0
        %v2088 = vadd.f32 0.0, %v2087
        %v2089 = vpop.f32.mrf.mxu0
        %v2090 = vadd.f32 0.0, %v2089
        %v2091 = vpop.f32.mrf.mxu0
        %v2092 = vadd.f32 0.0, %v2091
        %2093 = vmatprep.mubr.bf16.mxu0 0
        %2094 = vmatmul.mubr.bf16.gmra.mxu0 %v1987
        %v2095 = vpop.f32.mrf.mxu0
        %v2096 = vadd.f32 0.0, %v2095
        %v2097 = vpop.f32.mrf.mxu0
        %v2098 = vadd.f32 0.0, %v2097
        %v2099 = vpop.f32.mrf.mxu0
        %v2100 = vadd.f32 0.0, %v2099
        %v2101 = vpop.f32.mrf.mxu0
        %v2102 = vadd.f32 0.0, %v2101
        %2103 = vmatprep.mubr.bf16.mxu0 0
        %2104 = vmatmul.mubr.bf16.gmra.mxu0 %v1990
        %v2105 = vpop.f32.mrf.mxu0
        %v2106 = vadd.f32 0.0, %v2105
        %v2107 = vpop.f32.mrf.mxu0
        %v2108 = vadd.f32 0.0, %v2107
        %v2109 = vpop.f32.mrf.mxu0
        %v2110 = vadd.f32 0.0, %v2109
        %v2111 = vpop.f32.mrf.mxu0
        %v2112 = vadd.f32 0.0, %v2111
        %2113 = vmatprep.mubr.bf16.mxu0 0
        %2114 = vmatmul.mubr.bf16.gmra.mxu0 %v1993
        %v2115 = vpop.f32.mrf.mxu0
        %v2116 = vadd.f32 0.0, %v2115
        %v2117 = vpop.f32.mrf.mxu0
        %v2118 = vadd.f32 0.0, %v2117
        %v2119 = vpop.f32.mrf.mxu0
        %v2120 = vadd.f32 0.0, %v2119
        %v2121 = vpop.f32.mrf.mxu0
        %v2122 = vadd.f32 0.0, %v2121
        %2123 = vmatprep.mubr.bf16.mxu0 0
        %2124 = vmatmul.mubr.bf16.gmra.mxu0 %v1996
        %v2125 = vpop.f32.mrf.mxu0
        %v2126 = vadd.f32 0.0, %v2125
        %v2127 = vpop.f32.mrf.mxu0
        %v2128 = vadd.f32 0.0, %v2127
        %v2129 = vpop.f32.mrf.mxu0
        %v2130 = vadd.f32 0.0, %v2129
        %v2131 = vpop.f32.mrf.mxu0
        %v2132 = vadd.f32 0.0, %v2131
        %2133 = vmatprep.mubr.bf16.mxu0 0
        %2134 = vmatmul.mubr.bf16.gmra.mxu0 %v1999
        %v2135 = vpop.f32.mrf.mxu0
        %v2136 = vadd.f32 0.0, %v2135
        %v2137 = vpop.f32.mrf.mxu0
        %v2138 = vadd.f32 0.0, %v2137
        %v2139 = vpop.f32.mrf.mxu0
        %v2140 = vadd.f32 0.0, %v2139
        %v2141 = vpop.f32.mrf.mxu0
        %v2142 = vadd.f32 0.0, %v2141
        %2143 = vmatprep.mubr.bf16.mxu0 0
        %2144 = vmatmul.mubr.bf16.gmra.mxu0 %v2002
        %v2145 = vpop.f32.mrf.mxu0
        %v2146 = vadd.f32 0.0, %v2145
        %v2147 = vpop.f32.mrf.mxu0
        %v2148 = vadd.f32 0.0, %v2147
        %v2149 = vpop.f32.mrf.mxu0
        %v2150 = vadd.f32 0.0, %v2149
        %v2151 = vpop.f32.mrf.mxu0
        %v2152 = vadd.f32 0.0, %v2151
        %2153 = vmatprep.mubr.bf16.mxu0 0
        %2154 = vmatmul.mubr.bf16.gmra.mxu0 %v2005
        %v2155 = vpop.f32.mrf.mxu0
        %v2156 = vadd.f32 0.0, %v2155
        %v2157 = vpop.f32.mrf.mxu0
        %v2158 = vadd.f32 0.0, %v2157
        %v2159 = vpop.f32.mrf.mxu0
        %v2160 = vadd.f32 0.0, %v2159
        %v2161 = vpop.f32.mrf.mxu0
        %v2162 = vadd.f32 0.0, %v2161
        %2163 = vmatprep.mubr.bf16.mxu0 0
        %2164 = vmatmul.mubr.bf16.gmra.mxu0 %v2008
        %v2165 = vpop.f32.mrf.mxu0
        %v2166 = vadd.f32 0.0, %v2165
        %v2167 = vpop.f32.mrf.mxu0
        %v2168 = vadd.f32 0.0, %v2167
        %v2169 = vpop.f32.mrf.mxu0
        %v2170 = vadd.f32 0.0, %v2169
        %v2171 = vpop.f32.mrf.mxu0
        %v2172 = vadd.f32 0.0, %v2171
        %2173 = vmatprep.mubr.bf16.mxu0 0
        %2174 = vmatmul.mubr.bf16.gmra.mxu0 %v2011
        %v2175 = vpop.f32.mrf.mxu0
        %v2176 = vadd.f32 0.0, %v2175
        %v2177 = vpop.f32.mrf.mxu0
        %v2178 = vadd.f32 0.0, %v2177
        %v2179 = vpop.f32.mrf.mxu0
        %v2180 = vadd.f32 0.0, %v2179
        %v2181 = vpop.f32.mrf.mxu0
        %v2182 = vadd.f32 0.0, %v2181
        %2183 = vmatprep.mubr.bf16.mxu0 0
        %2184 = vmatmul.mubr.bf16.gmra.mxu0 %v2014
        %v2185 = vpop.f32.mrf.mxu0
        %v2186 = vadd.f32 0.0, %v2185
        %v2187 = vpop.f32.mrf.mxu0
        %v2188 = vadd.f32 0.0, %v2187
        %v2189 = vpop.f32.mrf.mxu0
        %v2190 = vadd.f32 0.0, %v2189
        %v2191 = vpop.f32.mrf.mxu0
        %v2192 = vadd.f32 0.0, %v2191
        %2193 = vmatprep.mubr.bf16.mxu0 0
        %2194 = vmatmul.mubr.bf16.gmra.mxu0 %v2017
        %v2195 = vpop.f32.mrf.mxu0
        %v2196 = vadd.f32 0.0, %v2195
        %v2197 = vpop.f32.mrf.mxu0
        %v2198 = vadd.f32 0.0, %v2197
        %v2199 = vpop.f32.mrf.mxu0
        %v2200 = vadd.f32 0.0, %v2199
        %v2201 = vpop.f32.mrf.mxu0
        %v2202 = vadd.f32 0.0, %v2201
        %2203 = vmatprep.mubr.bf16.mxu0 0
        %2204 = vmatmul.mubr.bf16.gmra.mxu0 %v2020
        %v2205 = vpop.f32.mrf.mxu0
        %v2206 = vadd.f32 0.0, %v2205
        %v2207 = vpop.f32.mrf.mxu0
        %v2208 = vadd.f32 0.0, %v2207
        %v2209 = vpop.f32.mrf.mxu0
        %v2210 = vadd.f32 0.0, %v2209
        %v2211 = vpop.f32.mrf.mxu0
        %v2212 = vadd.f32 0.0, %v2211
        %2213 = vmatprep.mubr.bf16.mxu0 0
        %2214 = vmatmul.mubr.bf16.gmra.mxu0 %v2023
        %v2215 = vpop.f32.mrf.mxu0
        %v2216 = vadd.f32 0.0, %v2215
        %v2217 = vpop.f32.mrf.mxu0
        %v2218 = vadd.f32 0.0, %v2217
        %v2219 = vpop.f32.mrf.mxu0
        %v2220 = vadd.f32 0.0, %v2219
        %v2221 = vpop.f32.mrf.mxu0
        %v2222 = vadd.f32 0.0, %v2221
        %2223 = vdwg.mxu0
        %v2224 = vadd.f32 %v1786, %v2066
        %v2225 = vadd.f32 %v1787, %v2068
        %v2226 = vadd.f32 %v1788, %v2070
        %v2227 = vadd.f32 %v1789, %v2072
        %v2228 = vadd.f32 %v1790, %v2076
        %v2229 = vadd.f32 %v1791, %v2078
        %v2230 = vadd.f32 %v1792, %v2080
        %v2231 = vadd.f32 %v1793, %v2082
        %v2232 = vadd.f32 %v1794, %v2086
        %v2233 = vadd.f32 %v1795, %v2088
        %v2234 = vadd.f32 %v1796, %v2090
        %v2235 = vadd.f32 %v1797, %v2092
        %v2236 = vadd.f32 %v1798, %v2096
        %v2237 = vadd.f32 %v1799, %v2098
        %v2238 = vadd.f32 %v1800, %v2100
        %v2239 = vadd.f32 %v1801, %v2102
        %v2240 = vadd.f32 %v1802, %v2106
        %v2241 = vadd.f32 %v1803, %v2108
        %v2242 = vadd.f32 %v1804, %v2110
        %v2243 = vadd.f32 %v1805, %v2112
        %v2244 = vadd.f32 %v1806, %v2116
        %v2245 = vadd.f32 %v1807, %v2118
        %v2246 = vadd.f32 %v1808, %v2120
        %v2247 = vadd.f32 %v1809, %v2122
        %v2248 = vadd.f32 %v1810, %v2126
        %v2249 = vadd.f32 %v1811, %v2128
        %v2250 = vadd.f32 %v1812, %v2130
        %v2251 = vadd.f32 %v1813, %v2132
        %v2252 = vadd.f32 %v1814, %v2136
        %v2253 = vadd.f32 %v1815, %v2138
        %v2254 = vadd.f32 %v1816, %v2140
        %v2255 = vadd.f32 %v1817, %v2142
        %v2256 = vadd.f32 %v1818, %v2146
        %v2257 = vadd.f32 %v1819, %v2148
        %v2258 = vadd.f32 %v1820, %v2150
        %v2259 = vadd.f32 %v1821, %v2152
        %v2260 = vadd.f32 %v1822, %v2156
        %v2261 = vadd.f32 %v1823, %v2158
        %v2262 = vadd.f32 %v1824, %v2160
        %v2263 = vadd.f32 %v1825, %v2162
        %v2264 = vadd.f32 %v1826, %v2166
        %v2265 = vadd.f32 %v1827, %v2168
        %v2266 = vadd.f32 %v1828, %v2170
        %v2267 = vadd.f32 %v1829, %v2172
        %v2268 = vadd.f32 %v1830, %v2176
        %v2269 = vadd.f32 %v1831, %v2178
        %v2270 = vadd.f32 %v1832, %v2180
        %v2271 = vadd.f32 %v1833, %v2182
        %v2272 = vadd.f32 %v1834, %v2186
        %v2273 = vadd.f32 %v1835, %v2188
        %v2274 = vadd.f32 %v1836, %v2190
        %v2275 = vadd.f32 %v1837, %v2192
        %v2276 = vadd.f32 %v1838, %v2196
        %v2277 = vadd.f32 %v1839, %v2198
        %v2278 = vadd.f32 %v1840, %v2200
        %v2279 = vadd.f32 %v1841, %v2202
        %v2280 = vadd.f32 %v1842, %v2206
        %v2281 = vadd.f32 %v1843, %v2208
        %v2282 = vadd.f32 %v1844, %v2210
        %v2283 = vadd.f32 %v1845, %v2212
        %v2284 = vadd.f32 %v1846, %v2216
        %v2285 = vadd.f32 %v1847, %v2218
        %v2286 = vadd.f32 %v1848, %v2220
        %v2287 = vadd.f32 %v1849, %v2222
        %v2288 = vld [vmem:[%s1853] sm:$0xf]
        %v2289 = vld [vmem:[%s1853 + $0x4] sm:$0xf]
        %v2290 = vld [vmem:[%s1853 + $0x8] sm:$0x1]
        %v2291 = vld [vmem:[%s1853 + $0xc] sm:$0xf]
        %v2292 = vld [vmem:[%s1853 + $0x10] sm:$0xf]
        %v2293 = vld [vmem:[%s1853 + $0x14] sm:$0x1]
        %v2294 = vld [vmem:[%s1853 + $0x18] sm:$0xf]
        %v2295 = vld [vmem:[%s1853 + $0x1c] sm:$0xf]
        %v2296 = vld [vmem:[%s1853 + $0x20] sm:$0x1]
        %v2297 = vld [vmem:[%s1853 + $0x24] sm:$0xf]
        %v2298 = vld [vmem:[%s1853 + $0x28] sm:$0xf]
        %v2299 = vld [vmem:[%s1853 + $0x2c] sm:$0x1]
        %v2300 = vld [vmem:[%s1853 + $0x30] sm:$0xf]
        %v2301 = vld [vmem:[%s1853 + $0x34] sm:$0xf]
        %v2302 = vld [vmem:[%s1853 + $0x38] sm:$0x1]
        %v2303 = vld [vmem:[%s1853 + $0x3c] sm:$0xf]
        %v2304 = vld [vmem:[%s1853 + $0x40] sm:$0xf]
        %v2305 = vld [vmem:[%s1853 + $0x44] sm:$0x1]
        %v2306 = vld [vmem:[%s1853 + $0x48] sm:$0xf]
        %v2307 = vld [vmem:[%s1853 + $0x4c] sm:$0xf]
        %v2308 = vld [vmem:[%s1853 + $0x50] sm:$0x1]
        %v2309 = vld [vmem:[%s1853 + $0x54] sm:$0xf]
        %v2310 = vld [vmem:[%s1853 + $0x58] sm:$0xf]
        %v2311 = vld [vmem:[%s1853 + $0x5c] sm:$0x1]
        %v2312 = vld [vmem:[%s1853 + $0x60] sm:$0xf]
        %v2313 = vld [vmem:[%s1853 + $0x64] sm:$0xf]
        %v2314 = vld [vmem:[%s1853 + $0x68] sm:$0x1]
        %v2315 = vld [vmem:[%s1853 + $0x6c] sm:$0xf]
        %v2316 = vld [vmem:[%s1853 + $0x70] sm:$0xf]
        %v2317 = vld [vmem:[%s1853 + $0x74] sm:$0x1]
        %v2318 = vld [vmem:[%s1853 + $0x78] sm:$0xf]
        %v2319 = vld [vmem:[%s1853 + $0x7c] sm:$0xf]
        %v2320 = vld [vmem:[%s1853 + $0x80] sm:$0x1]
        %v2321 = vld [vmem:[%s1853 + $0x84] sm:$0xf]
        %v2322 = vld [vmem:[%s1853 + $0x88] sm:$0xf]
        %v2323 = vld [vmem:[%s1853 + $0x8c] sm:$0x1]
        %v2324 = vld [vmem:[%s1853 + $0x90] sm:$0xf]
        %v2325 = vld [vmem:[%s1853 + $0x94] sm:$0xf]
        %v2326 = vld [vmem:[%s1853 + $0x98] sm:$0x1]
        %v2327 = vld [vmem:[%s1853 + $0x9c] sm:$0xf]
        %v2328 = vld [vmem:[%s1853 + $0xa0] sm:$0xf]
        %v2329 = vld [vmem:[%s1853 + $0xa4] sm:$0x1]
        %v2330 = vld [vmem:[%s1853 + $0xa8] sm:$0xf]
        %v2331 = vld [vmem:[%s1853 + $0xac] sm:$0xf]
        %v2332 = vld [vmem:[%s1853 + $0xb0] sm:$0x1]
        %v2333 = vld [vmem:[%s1853 + $0xb4] sm:$0xf]
        %v2334 = vld [vmem:[%s1853 + $0xb8] sm:$0xf]
        %v2335 = vld [vmem:[%s1853 + $0xbc] sm:$0x1]
        %v2337 = vshrl.u32 %v2288, 16
        %v2339 = vrot.slane %v2337, 4
        %v2340 = vshll.u32 %v2288, 16
        %v2342 = vrot.slane %v2340, 5
        %v2343 = vor.u32 %v2339, %v2342
        %v2344 = vrot.slane %v2343, 4
        %v2346 = vshll.u32 %v2289, 16
        %v2348 = vrot.slane %v2346, 5
        %v2349 = vsel %vm240, %v2344, %v2348
        %v2350 = vshrl.u32 %v2289, 16
        %v2352 = vrot.slane %v2350, 4
        %v2353 = vor.u32 %v2352, %v2348
        %v2354 = vrot.slane %v2353, 4
        %v2356 = vshll.u32 %v2290, 16
        %v2358 = vrot.slane %v2356, 5
        %v2359 = vsel %vm240, %v2354, %v2358
        %v2361 = vshrl.u32 %v2291, 16
        %v2363 = vrot.slane %v2361, 4
        %v2364 = vshll.u32 %v2291, 16
        %v2366 = vrot.slane %v2364, 5
        %v2367 = vor.u32 %v2363, %v2366
        %v2368 = vrot.slane %v2367, 4
        %v2370 = vshll.u32 %v2292, 16
        %v2372 = vrot.slane %v2370, 5
        %v2373 = vsel %vm240, %v2368, %v2372
        %v2374 = vshrl.u32 %v2292, 16
        %v2376 = vrot.slane %v2374, 4
        %v2377 = vor.u32 %v2376, %v2372
        %v2378 = vrot.slane %v2377, 4
        %v2380 = vshll.u32 %v2293, 16
        %v2382 = vrot.slane %v2380, 5
        %v2383 = vsel %vm240, %v2378, %v2382
        %v2385 = vshrl.u32 %v2294, 16
        %v2387 = vrot.slane %v2385, 4
        %v2388 = vshll.u32 %v2294, 16
        %v2390 = vrot.slane %v2388, 5
        %v2391 = vor.u32 %v2387, %v2390
        %v2392 = vrot.slane %v2391, 4
        %v2394 = vshll.u32 %v2295, 16
        %v2396 = vrot.slane %v2394, 5
        %v2397 = vsel %vm240, %v2392, %v2396
        %v2398 = vshrl.u32 %v2295, 16
        %v2400 = vrot.slane %v2398, 4
        %v2401 = vor.u32 %v2400, %v2396
        %v2402 = vrot.slane %v2401, 4
        %v2404 = vshll.u32 %v2296, 16
        %v2406 = vrot.slane %v2404, 5
        %v2407 = vsel %vm240, %v2402, %v2406
        %v2409 = vshrl.u32 %v2297, 16
        %v2411 = vrot.slane %v2409, 4
        %v2412 = vshll.u32 %v2297, 16
        %v2414 = vrot.slane %v2412, 5
        %v2415 = vor.u32 %v2411, %v2414
        %v2416 = vrot.slane %v2415, 4
        %v2418 = vshll.u32 %v2298, 16
        %v2420 = vrot.slane %v2418, 5
        %v2421 = vsel %vm240, %v2416, %v2420
        %v2422 = vshrl.u32 %v2298, 16
        %v2424 = vrot.slane %v2422, 4
        %v2425 = vor.u32 %v2424, %v2420
        %v2426 = vrot.slane %v2425, 4
        %v2428 = vshll.u32 %v2299, 16
        %v2430 = vrot.slane %v2428, 5
        %v2431 = vsel %vm240, %v2426, %v2430
        %v2433 = vshrl.u32 %v2300, 16
        %v2435 = vrot.slane %v2433, 4
        %v2436 = vshll.u32 %v2300, 16
        %v2438 = vrot.slane %v2436, 5
        %v2439 = vor.u32 %v2435, %v2438
        %v2440 = vrot.slane %v2439, 4
        %v2442 = vshll.u32 %v2301, 16
        %v2444 = vrot.slane %v2442, 5
        %v2445 = vsel %vm240, %v2440, %v2444
        %v2446 = vshrl.u32 %v2301, 16
        %v2448 = vrot.slane %v2446, 4
        %v2449 = vor.u32 %v2448, %v2444
        %v2450 = vrot.slane %v2449, 4
        %v2452 = vshll.u32 %v2302, 16
        %v2454 = vrot.slane %v2452, 5
        %v2455 = vsel %vm240, %v2450, %v2454
        %v2457 = vshrl.u32 %v2303, 16
        %v2459 = vrot.slane %v2457, 4
        %v2460 = vshll.u32 %v2303, 16
        %v2462 = vrot.slane %v2460, 5
        %v2463 = vor.u32 %v2459, %v2462
        %v2464 = vrot.slane %v2463, 4
        %v2466 = vshll.u32 %v2304, 16
        %v2468 = vrot.slane %v2466, 5
        %v2469 = vsel %vm240, %v2464, %v2468
        %v2470 = vshrl.u32 %v2304, 16
        %v2472 = vrot.slane %v2470, 4
        %v2473 = vor.u32 %v2472, %v2468
        %v2474 = vrot.slane %v2473, 4
        %v2476 = vshll.u32 %v2305, 16
        %v2478 = vrot.slane %v2476, 5
        %v2479 = vsel %vm240, %v2474, %v2478
        %v2481 = vshrl.u32 %v2306, 16
        %v2483 = vrot.slane %v2481, 4
        %v2484 = vshll.u32 %v2306, 16
        %v2486 = vrot.slane %v2484, 5
        %v2487 = vor.u32 %v2483, %v2486
        %v2488 = vrot.slane %v2487, 4
        %v2490 = vshll.u32 %v2307, 16
        %v2492 = vrot.slane %v2490, 5
        %v2493 = vsel %vm240, %v2488, %v2492
        %v2494 = vshrl.u32 %v2307, 16
        %v2496 = vrot.slane %v2494, 4
        %v2497 = vor.u32 %v2496, %v2492
        %v2498 = vrot.slane %v2497, 4
        %v2500 = vshll.u32 %v2308, 16
        %v2502 = vrot.slane %v2500, 5
        %v2503 = vsel %vm240, %v2498, %v2502
        %v2505 = vshrl.u32 %v2309, 16
        %v2507 = vrot.slane %v2505, 4
        %v2508 = vshll.u32 %v2309, 16
        %v2510 = vrot.slane %v2508, 5
        %v2511 = vor.u32 %v2507, %v2510
        %v2512 = vrot.slane %v2511, 4
        %v2514 = vshll.u32 %v2310, 16
        %v2516 = vrot.slane %v2514, 5
        %v2517 = vsel %vm240, %v2512, %v2516
        %v2518 = vshrl.u32 %v2310, 16
        %v2520 = vrot.slane %v2518, 4
        %v2521 = vor.u32 %v2520, %v2516
        %v2522 = vrot.slane %v2521, 4
        %v2524 = vshll.u32 %v2311, 16
        %v2526 = vrot.slane %v2524, 5
        %v2527 = vsel %vm240, %v2522, %v2526
        %v2529 = vshrl.u32 %v2312, 16
        %v2531 = vrot.slane %v2529, 4
        %v2532 = vshll.u32 %v2312, 16
        %v2534 = vrot.slane %v2532, 5
        %v2535 = vor.u32 %v2531, %v2534
        %v2536 = vrot.slane %v2535, 4
        %v2538 = vshll.u32 %v2313, 16
        %v2540 = vrot.slane %v2538, 5
        %v2541 = vsel %vm240, %v2536, %v2540
        %v2542 = vshrl.u32 %v2313, 16
        %v2544 = vrot.slane %v2542, 4
        %v2545 = vor.u32 %v2544, %v2540
        %v2546 = vrot.slane %v2545, 4
        %v2548 = vshll.u32 %v2314, 16
        %v2550 = vrot.slane %v2548, 5
        %v2551 = vsel %vm240, %v2546, %v2550
        %v2553 = vshrl.u32 %v2315, 16
        %v2555 = vrot.slane %v2553, 4
        %v2556 = vshll.u32 %v2315, 16
        %v2558 = vrot.slane %v2556, 5
        %v2559 = vor.u32 %v2555, %v2558
        %v2560 = vrot.slane %v2559, 4
        %v2562 = vshll.u32 %v2316, 16
        %v2564 = vrot.slane %v2562, 5
        %v2565 = vsel %vm240, %v2560, %v2564
        %v2566 = vshrl.u32 %v2316, 16
        %v2568 = vrot.slane %v2566, 4
        %v2569 = vor.u32 %v2568, %v2564
        %v2570 = vrot.slane %v2569, 4
        %v2572 = vshll.u32 %v2317, 16
        %v2574 = vrot.slane %v2572, 5
        %v2575 = vsel %vm240, %v2570, %v2574
        %v2577 = vshrl.u32 %v2318, 16
        %v2579 = vrot.slane %v2577, 4
        %v2580 = vshll.u32 %v2318, 16
        %v2582 = vrot.slane %v2580, 5
        %v2583 = vor.u32 %v2579, %v2582
        %v2584 = vrot.slane %v2583, 4
        %v2586 = vshll.u32 %v2319, 16
        %v2588 = vrot.slane %v2586, 5
        %v2589 = vsel %vm240, %v2584, %v2588
        %v2590 = vshrl.u32 %v2319, 16
        %v2592 = vrot.slane %v2590, 4
        %v2593 = vor.u32 %v2592, %v2588
        %v2594 = vrot.slane %v2593, 4
        %v2596 = vshll.u32 %v2320, 16
        %v2598 = vrot.slane %v2596, 5
        %v2599 = vsel %vm240, %v2594, %v2598
        %v2601 = vshrl.u32 %v2321, 16
        %v2603 = vrot.slane %v2601, 4
        %v2604 = vshll.u32 %v2321, 16
        %v2606 = vrot.slane %v2604, 5
        %v2607 = vor.u32 %v2603, %v2606
        %v2608 = vrot.slane %v2607, 4
        %v2610 = vshll.u32 %v2322, 16
        %v2612 = vrot.slane %v2610, 5
        %v2613 = vsel %vm240, %v2608, %v2612
        %v2614 = vshrl.u32 %v2322, 16
        %v2616 = vrot.slane %v2614, 4
        %v2617 = vor.u32 %v2616, %v2612
        %v2618 = vrot.slane %v2617, 4
        %v2620 = vshll.u32 %v2323, 16
        %v2622 = vrot.slane %v2620, 5
        %v2623 = vsel %vm240, %v2618, %v2622
        %v2625 = vshrl.u32 %v2324, 16
        %v2627 = vrot.slane %v2625, 4
        %v2628 = vshll.u32 %v2324, 16
        %v2630 = vrot.slane %v2628, 5
        %v2631 = vor.u32 %v2627, %v2630
        %v2632 = vrot.slane %v2631, 4
        %v2634 = vshll.u32 %v2325, 16
        %v2636 = vrot.slane %v2634, 5
        %v2637 = vsel %vm240, %v2632, %v2636
        %v2638 = vshrl.u32 %v2325, 16
        %v2640 = vrot.slane %v2638, 4
        %v2641 = vor.u32 %v2640, %v2636
        %v2642 = vrot.slane %v2641, 4
        %v2644 = vshll.u32 %v2326, 16
        %v2646 = vrot.slane %v2644, 5
        %v2647 = vsel %vm240, %v2642, %v2646
        %v2649 = vshrl.u32 %v2327, 16
        %v2651 = vrot.slane %v2649, 4
        %v2652 = vshll.u32 %v2327, 16
        %v2654 = vrot.slane %v2652, 5
        %v2655 = vor.u32 %v2651, %v2654
        %v2656 = vrot.slane %v2655, 4
        %v2658 = vshll.u32 %v2328, 16
        %v2660 = vrot.slane %v2658, 5
        %v2661 = vsel %vm240, %v2656, %v2660
        %v2662 = vshrl.u32 %v2328, 16
        %v2664 = vrot.slane %v2662, 4
        %v2665 = vor.u32 %v2664, %v2660
        %v2666 = vrot.slane %v2665, 4
        %v2668 = vshll.u32 %v2329, 16
        %v2670 = vrot.slane %v2668, 5
        %v2671 = vsel %vm240, %v2666, %v2670
        %v2673 = vshrl.u32 %v2330, 16
        %v2675 = vrot.slane %v2673, 4
        %v2676 = vshll.u32 %v2330, 16
        %v2678 = vrot.slane %v2676, 5
        %v2679 = vor.u32 %v2675, %v2678
        %v2680 = vrot.slane %v2679, 4
        %v2682 = vshll.u32 %v2331, 16
        %v2684 = vrot.slane %v2682, 5
        %v2685 = vsel %vm240, %v2680, %v2684
        %v2686 = vshrl.u32 %v2331, 16
        %v2688 = vrot.slane %v2686, 4
        %v2689 = vor.u32 %v2688, %v2684
        %v2690 = vrot.slane %v2689, 4
        %v2692 = vshll.u32 %v2332, 16
        %v2694 = vrot.slane %v2692, 5
        %v2695 = vsel %vm240, %v2690, %v2694
        %v2697 = vshrl.u32 %v2333, 16
        %v2699 = vrot.slane %v2697, 4
        %v2700 = vshll.u32 %v2333, 16
        %v2702 = vrot.slane %v2700, 5
        %v2703 = vor.u32 %v2699, %v2702
        %v2704 = vrot.slane %v2703, 4
        %v2706 = vshll.u32 %v2334, 16
        %v2708 = vrot.slane %v2706, 5
        %v2709 = vsel %vm240, %v2704, %v2708
        %v2710 = vshrl.u32 %v2334, 16
        %v2712 = vrot.slane %v2710, 4
        %v2713 = vor.u32 %v2712, %v2708
        %v2714 = vrot.slane %v2713, 4
        %v2716 = vshll.u32 %v2335, 16
        %v2718 = vrot.slane %v2716, 5
        %v2719 = vsel %vm240, %v2714, %v2718
        %s2720 = scalar_lea.vmem %s1, 16
        %v2721 = vld [vmem:[%s2720] sm:$0xf]
        %v2722 = vunpack.c.l.b16 %v2349
        %v2723 = vunpack.c.l.b16 %v2359
        %v2724 = vunpack.c.l.b16 %v2373
        %v2725 = vunpack.c.l.b16 %v2383
        %v2726 = vunpack.c.l.b16 %v2397
        %v2727 = vunpack.c.l.b16 %v2407
        %v2728 = vunpack.c.l.b16 %v2421
        %v2729 = vunpack.c.l.b16 %v2431
        %v2730 = vunpack.c.l.b16 %v2445
        %v2731 = vunpack.c.l.b16 %v2455
        %v2732 = vunpack.c.l.b16 %v2469
        %v2733 = vunpack.c.l.b16 %v2479
        %v2734 = vunpack.c.l.b16 %v2493
        %v2735 = vunpack.c.l.b16 %v2503
        %v2736 = vunpack.c.l.b16 %v2517
        %v2737 = vunpack.c.l.b16 %v2527
        %v2738 = vunpack.c.l.b16 %v2541
        %v2739 = vunpack.c.l.b16 %v2551
        %v2740 = vunpack.c.l.b16 %v2565
        %v2741 = vunpack.c.l.b16 %v2575
        %v2742 = vunpack.c.l.b16 %v2589
        %v2743 = vunpack.c.l.b16 %v2599
        %v2744 = vunpack.c.l.b16 %v2613
        %v2745 = vunpack.c.l.b16 %v2623
        %v2746 = vunpack.c.l.b16 %v2637
        %v2747 = vunpack.c.l.b16 %v2647
        %v2748 = vunpack.c.l.b16 %v2661
        %v2749 = vunpack.c.l.b16 %v2671
        %v2750 = vunpack.c.l.b16 %v2685
        %v2751 = vunpack.c.l.b16 %v2695
        %v2752 = vunpack.c.l.b16 %v2709
        %v2753 = vunpack.c.l.b16 %v2719
        %v2754 = vpack.c.b16 %v2723, %v2722
        %v2755 = vpack.c.b16 %v2725, %v2724
        %v2756 = vpack.c.b16 %v2727, %v2726
        %v2757 = vpack.c.b16 %v2729, %v2728
        %v2758 = vpack.c.b16 %v2731, %v2730
        %v2759 = vpack.c.b16 %v2733, %v2732
        %v2760 = vpack.c.b16 %v2735, %v2734
        %v2761 = vpack.c.b16 %v2737, %v2736
        %v2762 = vpack.c.b16 %v2739, %v2738
        %v2763 = vpack.c.b16 %v2741, %v2740
        %v2764 = vpack.c.b16 %v2743, %v2742
        %v2765 = vpack.c.b16 %v2745, %v2744
        %v2766 = vpack.c.b16 %v2747, %v2746
        %v2767 = vpack.c.b16 %v2749, %v2748
        %v2768 = vpack.c.b16 %v2751, %v2750
        %v2769 = vpack.c.b16 %v2753, %v2752
        %v2772 = vunpack.c.l.s4 1983009808
        %v2773 = vunpack.c.0.s8 %v2772
        %v2774 = vlaneseq
        %v2775 = vshrl.u32 %v2774, 7
        %v2776 = vsub.s32 %v2773, %v2775
        %v2777 = vrot.slane %v2721, %v2776
        %v2778 = vcombine.high %v2777, %v2777
        %v2780 = vsel %vm684, %v2754, 0
        %v2783 = vsel %vm684, %v2755, 0
        %v2786 = vsel %vm684, %v2756, 0
        %v2789 = vsel %vm684, %v2757, 0
        %v2792 = vsel %vm684, %v2758, 0
        %v2795 = vsel %vm684, %v2759, 0
        %v2798 = vsel %vm684, %v2760, 0
        %v2801 = vsel %vm684, %v2761, 0
        %v2804 = vsel %vm684, %v2762, 0
        %v2807 = vsel %vm684, %v2763, 0
        %v2810 = vsel %vm684, %v2764, 0
        %v2813 = vsel %vm684, %v2765, 0
        %v2816 = vsel %vm684, %v2766, 0
        %v2819 = vsel %vm684, %v2767, 0
        %v2822 = vsel %vm684, %v2768, 0
        %v2825 = vsel %vm684, %v2769, 0
        %v2828 = vsel %vm733, %v2777, 0
        %v2831 = vsel %vm733, %v2778, 0
        %2833 = vmatprep.subr.bf16.mxu0 0
        %2834 = vmatpush1.bf16.msra.mxu0 0
        %2835 = vmatprep.subr.bf16.mxu0 0
        %2836 = vmatpush1.bf16.msra.mxu0 0
        %2837 = vmatprep.subr.bf16.mxu0 0
        %2838 = vmatpush1.bf16.msra.mxu0 0
        %2839 = vmatprep.subr.bf16.mxu0 0
        %2840 = vmatpush1.bf16.msra.mxu0 0
        %2841 = vmatprep.subr.bf16.mxu0 0
        %2842 = vmatpush1.bf16.msra.mxu0 0
        %2843 = vmatprep.subr.bf16.mxu0 0
        %2844 = vmatpush1.bf16.msra.mxu0 0
        %2845 = vmatprep.subr.bf16.mxu0 0
        %2846 = vmatpush1.bf16.msra.mxu0 0
        %2847 = vmatprep.subr.bf16.mxu0 %v2831
        %2848 = vmatpush1.bf16.msra.mxu0 %v2828
        %2849 = vmatprep.subr.bf16.mxu0 0
        %2850 = vmatpush2.bf16.msra.mxu0 0
        %2851 = vmatprep.subr.bf16.mxu0 0
        %2852 = vmatpush2.bf16.msra.mxu0 0
        %2853 = vmatprep.subr.bf16.mxu0 0
        %2854 = vmatpush2.bf16.msra.mxu0 0
        %2855 = vmatprep.subr.bf16.mxu0 0
        %2856 = vmatpush2.bf16.msra.mxu0 0
        %2857 = vmatprep.subr.bf16.mxu0 0
        %2858 = vmatpush2.bf16.msra.mxu0 0
        %2859 = vmatprep.subr.bf16.mxu0 0
        %2860 = vmatpush2.bf16.msra.mxu0 0
        %2861 = vmatprep.subr.bf16.mxu0 0
        %2862 = vmatpush2.bf16.msra.mxu0 0
        %2863 = vmatprep.subr.bf16.mxu0 0
        %2864 = vmatpush2.bf16.msra.mxu0 0
        %2865 = vmatprep.mubr.bf16.mxu0 0
        %2866 = vmatmul.mubr.bf16.gmra.mxu0 %v2780
        %v2867 = vpop.f32.mrf.mxu0
        %v2868 = vadd.f32 0.0, %v2867
        %v2869 = vpop.f32.mrf.mxu0
        %v2870 = vadd.f32 0.0, %v2869
        %v2871 = vpop.f32.mrf.mxu0
        %v2872 = vadd.f32 0.0, %v2871
        %v2873 = vpop.f32.mrf.mxu0
        %v2874 = vadd.f32 0.0, %v2873
        %2875 = vmatprep.mubr.bf16.mxu0 0
        %2876 = vmatmul.mubr.bf16.gmra.mxu0 %v2783
        %v2877 = vpop.f32.mrf.mxu0
        %v2878 = vadd.f32 0.0, %v2877
        %v2879 = vpop.f32.mrf.mxu0
        %v2880 = vadd.f32 0.0, %v2879
        %v2881 = vpop.f32.mrf.mxu0
        %v2882 = vadd.f32 0.0, %v2881
        %v2883 = vpop.f32.mrf.mxu0
        %v2884 = vadd.f32 0.0, %v2883
        %2885 = vmatprep.mubr.bf16.mxu0 0
        %2886 = vmatmul.mubr.bf16.gmra.mxu0 %v2786
        %v2887 = vpop.f32.mrf.mxu0
        %v2888 = vadd.f32 0.0, %v2887
        %v2889 = vpop.f32.mrf.mxu0
        %v2890 = vadd.f32 0.0, %v2889
        %v2891 = vpop.f32.mrf.mxu0
        %v2892 = vadd.f32 0.0, %v2891
        %v2893 = vpop.f32.mrf.mxu0
        %v2894 = vadd.f32 0.0, %v2893
        %2895 = vmatprep.mubr.bf16.mxu0 0
        %2896 = vmatmul.mubr.bf16.gmra.mxu0 %v2789
        %v2897 = vpop.f32.mrf.mxu0
        %v2898 = vadd.f32 0.0, %v2897
        %v2899 = vpop.f32.mrf.mxu0
        %v2900 = vadd.f32 0.0, %v2899
        %v2901 = vpop.f32.mrf.mxu0
        %v2902 = vadd.f32 0.0, %v2901
        %v2903 = vpop.f32.mrf.mxu0
        %v2904 = vadd.f32 0.0, %v2903
        %2905 = vmatprep.mubr.bf16.mxu0 0
        %2906 = vmatmul.mubr.bf16.gmra.mxu0 %v2792
        %v2907 = vpop.f32.mrf.mxu0
        %v2908 = vadd.f32 0.0, %v2907
        %v2909 = vpop.f32.mrf.mxu0
        %v2910 = vadd.f32 0.0, %v2909
        %v2911 = vpop.f32.mrf.mxu0
        %v2912 = vadd.f32 0.0, %v2911
        %v2913 = vpop.f32.mrf.mxu0
        %v2914 = vadd.f32 0.0, %v2913
        %2915 = vmatprep.mubr.bf16.mxu0 0
        %2916 = vmatmul.mubr.bf16.gmra.mxu0 %v2795
        %v2917 = vpop.f32.mrf.mxu0
        %v2918 = vadd.f32 0.0, %v2917
        %v2919 = vpop.f32.mrf.mxu0
        %v2920 = vadd.f32 0.0, %v2919
        %v2921 = vpop.f32.mrf.mxu0
        %v2922 = vadd.f32 0.0, %v2921
        %v2923 = vpop.f32.mrf.mxu0
        %v2924 = vadd.f32 0.0, %v2923
        %2925 = vmatprep.mubr.bf16.mxu0 0
        %2926 = vmatmul.mubr.bf16.gmra.mxu0 %v2798
        %v2927 = vpop.f32.mrf.mxu0
        %v2928 = vadd.f32 0.0, %v2927
        %v2929 = vpop.f32.mrf.mxu0
        %v2930 = vadd.f32 0.0, %v2929
        %v2931 = vpop.f32.mrf.mxu0
        %v2932 = vadd.f32 0.0, %v2931
        %v2933 = vpop.f32.mrf.mxu0
        %v2934 = vadd.f32 0.0, %v2933
        %2935 = vmatprep.mubr.bf16.mxu0 0
        %2936 = vmatmul.mubr.bf16.gmra.mxu0 %v2801
        %v2937 = vpop.f32.mrf.mxu0
        %v2938 = vadd.f32 0.0, %v2937
        %v2939 = vpop.f32.mrf.mxu0
        %v2940 = vadd.f32 0.0, %v2939
        %v2941 = vpop.f32.mrf.mxu0
        %v2942 = vadd.f32 0.0, %v2941
        %v2943 = vpop.f32.mrf.mxu0
        %v2944 = vadd.f32 0.0, %v2943
        %2945 = vmatprep.mubr.bf16.mxu0 0
        %2946 = vmatmul.mubr.bf16.gmra.mxu0 %v2804
        %v2947 = vpop.f32.mrf.mxu0
        %v2948 = vadd.f32 0.0, %v2947
        %v2949 = vpop.f32.mrf.mxu0
        %v2950 = vadd.f32 0.0, %v2949
        %v2951 = vpop.f32.mrf.mxu0
        %v2952 = vadd.f32 0.0, %v2951
        %v2953 = vpop.f32.mrf.mxu0
        %v2954 = vadd.f32 0.0, %v2953
        %2955 = vmatprep.mubr.bf16.mxu0 0
        %2956 = vmatmul.mubr.bf16.gmra.mxu0 %v2807
        %v2957 = vpop.f32.mrf.mxu0
        %v2958 = vadd.f32 0.0, %v2957
        %v2959 = vpop.f32.mrf.mxu0
        %v2960 = vadd.f32 0.0, %v2959
        %v2961 = vpop.f32.mrf.mxu0
        %v2962 = vadd.f32 0.0, %v2961
        %v2963 = vpop.f32.mrf.mxu0
        %v2964 = vadd.f32 0.0, %v2963
        %2965 = vmatprep.mubr.bf16.mxu0 0
        %2966 = vmatmul.mubr.bf16.gmra.mxu0 %v2810
        %v2967 = vpop.f32.mrf.mxu0
        %v2968 = vadd.f32 0.0, %v2967
        %v2969 = vpop.f32.mrf.mxu0
        %v2970 = vadd.f32 0.0, %v2969
        %v2971 = vpop.f32.mrf.mxu0
        %v2972 = vadd.f32 0.0, %v2971
        %v2973 = vpop.f32.mrf.mxu0
        %v2974 = vadd.f32 0.0, %v2973
        %2975 = vmatprep.mubr.bf16.mxu0 0
        %2976 = vmatmul.mubr.bf16.gmra.mxu0 %v2813
        %v2977 = vpop.f32.mrf.mxu0
        %v2978 = vadd.f32 0.0, %v2977
        %v2979 = vpop.f32.mrf.mxu0
        %v2980 = vadd.f32 0.0, %v2979
        %v2981 = vpop.f32.mrf.mxu0
        %v2982 = vadd.f32 0.0, %v2981
        %v2983 = vpop.f32.mrf.mxu0
        %v2984 = vadd.f32 0.0, %v2983
        %2985 = vmatprep.mubr.bf16.mxu0 0
        %2986 = vmatmul.mubr.bf16.gmra.mxu0 %v2816
        %v2987 = vpop.f32.mrf.mxu0
        %v2988 = vadd.f32 0.0, %v2987
        %v2989 = vpop.f32.mrf.mxu0
        %v2990 = vadd.f32 0.0, %v2989
        %v2991 = vpop.f32.mrf.mxu0
        %v2992 = vadd.f32 0.0, %v2991
        %v2993 = vpop.f32.mrf.mxu0
        %v2994 = vadd.f32 0.0, %v2993
        %2995 = vmatprep.mubr.bf16.mxu0 0
        %2996 = vmatmul.mubr.bf16.gmra.mxu0 %v2819
        %v2997 = vpop.f32.mrf.mxu0
        %v2998 = vadd.f32 0.0, %v2997
        %v2999 = vpop.f32.mrf.mxu0
        %v3000 = vadd.f32 0.0, %v2999
        %v3001 = vpop.f32.mrf.mxu0
        %v3002 = vadd.f32 0.0, %v3001
        %v3003 = vpop.f32.mrf.mxu0
        %v3004 = vadd.f32 0.0, %v3003
        %3005 = vmatprep.mubr.bf16.mxu0 0
        %3006 = vmatmul.mubr.bf16.gmra.mxu0 %v2822
        %v3007 = vpop.f32.mrf.mxu0
        %v3008 = vadd.f32 0.0, %v3007
        %v3009 = vpop.f32.mrf.mxu0
        %v3010 = vadd.f32 0.0, %v3009
        %v3011 = vpop.f32.mrf.mxu0
        %v3012 = vadd.f32 0.0, %v3011
        %v3013 = vpop.f32.mrf.mxu0
        %v3014 = vadd.f32 0.0, %v3013
        %3015 = vmatprep.mubr.bf16.mxu0 0
        %3016 = vmatmul.mubr.bf16.gmra.mxu0 %v2825
        %v3017 = vpop.f32.mrf.mxu0
        %v3018 = vadd.f32 0.0, %v3017
        %v3019 = vpop.f32.mrf.mxu0
        %v3020 = vadd.f32 0.0, %v3019
        %v3021 = vpop.f32.mrf.mxu0
        %v3022 = vadd.f32 0.0, %v3021
        %v3023 = vpop.f32.mrf.mxu0
        %v3024 = vadd.f32 0.0, %v3023
        %3025 = vdwg.mxu0
        %v3026 = vadd.f32 %v2224, %v2868
        %v3027 = vadd.f32 %v2225, %v2870
        %v3028 = vadd.f32 %v2226, %v2872
        %v3029 = vadd.f32 %v2227, %v2874
        %v3030 = vadd.f32 %v2228, %v2878
        %v3031 = vadd.f32 %v2229, %v2880
        %v3032 = vadd.f32 %v2230, %v2882
        %v3033 = vadd.f32 %v2231, %v2884
        %v3034 = vadd.f32 %v2232, %v2888
        %v3035 = vadd.f32 %v2233, %v2890
        %v3036 = vadd.f32 %v2234, %v2892
        %v3037 = vadd.f32 %v2235, %v2894
        %v3038 = vadd.f32 %v2236, %v2898
        %v3039 = vadd.f32 %v2237, %v2900
        %v3040 = vadd.f32 %v2238, %v2902
        %v3041 = vadd.f32 %v2239, %v2904
        %v3042 = vadd.f32 %v2240, %v2908
        %v3043 = vadd.f32 %v2241, %v2910
        %v3044 = vadd.f32 %v2242, %v2912
        %v3045 = vadd.f32 %v2243, %v2914
        %v3046 = vadd.f32 %v2244, %v2918
        %v3047 = vadd.f32 %v2245, %v2920
        %v3048 = vadd.f32 %v2246, %v2922
        %v3049 = vadd.f32 %v2247, %v2924
        %v3050 = vadd.f32 %v2248, %v2928
        %v3051 = vadd.f32 %v2249, %v2930
        %v3052 = vadd.f32 %v2250, %v2932
        %v3053 = vadd.f32 %v2251, %v2934
        %v3054 = vadd.f32 %v2252, %v2938
        %v3055 = vadd.f32 %v2253, %v2940
        %v3056 = vadd.f32 %v2254, %v2942
        %v3057 = vadd.f32 %v2255, %v2944
        %v3058 = vadd.f32 %v2256, %v2948
        %v3059 = vadd.f32 %v2257, %v2950
        %v3060 = vadd.f32 %v2258, %v2952
        %v3061 = vadd.f32 %v2259, %v2954
        %v3062 = vadd.f32 %v2260, %v2958
        %v3063 = vadd.f32 %v2261, %v2960
        %v3064 = vadd.f32 %v2262, %v2962
        %v3065 = vadd.f32 %v2263, %v2964
        %v3066 = vadd.f32 %v2264, %v2968
        %v3067 = vadd.f32 %v2265, %v2970
        %v3068 = vadd.f32 %v2266, %v2972
        %v3069 = vadd.f32 %v2267, %v2974
        %v3070 = vadd.f32 %v2268, %v2978
        %v3071 = vadd.f32 %v2269, %v2980
        %v3072 = vadd.f32 %v2270, %v2982
        %v3073 = vadd.f32 %v2271, %v2984
        %v3074 = vadd.f32 %v2272, %v2988
        %v3075 = vadd.f32 %v2273, %v2990
        %v3076 = vadd.f32 %v2274, %v2992
        %v3077 = vadd.f32 %v2275, %v2994
        %v3078 = vadd.f32 %v2276, %v2998
        %v3079 = vadd.f32 %v2277, %v3000
        %v3080 = vadd.f32 %v2278, %v3002
        %v3081 = vadd.f32 %v2279, %v3004
        %v3082 = vadd.f32 %v2280, %v3008
        %v3083 = vadd.f32 %v2281, %v3010
        %v3084 = vadd.f32 %v2282, %v3012
        %v3085 = vadd.f32 %v2283, %v3014
        %v3086 = vadd.f32 %v2284, %v3018
        %v3087 = vadd.f32 %v2285, %v3020
        %v3088 = vadd.f32 %v2286, %v3022
        %v3089 = vadd.f32 %v2287, %v3024
        %v3090 = vld [vmem:[%s1853] sm:$0xe]
        %v3091 = vld [vmem:[%s1853 + $0x4] sm:$0xf]
        %v3092 = vld [vmem:[%s1853 + $0x8] sm:$0x1]
        %v3093 = vld [vmem:[%s1853 + $0xc] sm:$0xe]
        %v3094 = vld [vmem:[%s1853 + $0x10] sm:$0xf]
        %v3095 = vld [vmem:[%s1853 + $0x14] sm:$0x1]
        %v3096 = vld [vmem:[%s1853 + $0x18] sm:$0xe]
        %v3097 = vld [vmem:[%s1853 + $0x1c] sm:$0xf]
        %v3098 = vld [vmem:[%s1853 + $0x20] sm:$0x1]
        %v3099 = vld [vmem:[%s1853 + $0x24] sm:$0xe]
        %v3100 = vld [vmem:[%s1853 + $0x28] sm:$0xf]
        %v3101 = vld [vmem:[%s1853 + $0x2c] sm:$0x1]
        %v3102 = vld [vmem:[%s1853 + $0x30] sm:$0xe]
        %v3103 = vld [vmem:[%s1853 + $0x34] sm:$0xf]
        %v3104 = vld [vmem:[%s1853 + $0x38] sm:$0x1]
        %v3105 = vld [vmem:[%s1853 + $0x3c] sm:$0xe]
        %v3106 = vld [vmem:[%s1853 + $0x40] sm:$0xf]
        %v3107 = vld [vmem:[%s1853 + $0x44] sm:$0x1]
        %v3108 = vld [vmem:[%s1853 + $0x48] sm:$0xe]
        %v3109 = vld [vmem:[%s1853 + $0x4c] sm:$0xf]
        %v3110 = vld [vmem:[%s1853 + $0x50] sm:$0x1]
        %v3111 = vld [vmem:[%s1853 + $0x54] sm:$0xe]
        %v3112 = vld [vmem:[%s1853 + $0x58] sm:$0xf]
        %v3113 = vld [vmem:[%s1853 + $0x5c] sm:$0x1]
        %v3114 = vld [vmem:[%s1853 + $0x60] sm:$0xe]
        %v3115 = vld [vmem:[%s1853 + $0x64] sm:$0xf]
        %v3116 = vld [vmem:[%s1853 + $0x68] sm:$0x1]
        %v3117 = vld [vmem:[%s1853 + $0x6c] sm:$0xe]
        %v3118 = vld [vmem:[%s1853 + $0x70] sm:$0xf]
        %v3119 = vld [vmem:[%s1853 + $0x74] sm:$0x1]
        %v3120 = vld [vmem:[%s1853 + $0x78] sm:$0xe]
        %v3121 = vld [vmem:[%s1853 + $0x7c] sm:$0xf]
        %v3122 = vld [vmem:[%s1853 + $0x80] sm:$0x1]
        %v3123 = vld [vmem:[%s1853 + $0x84] sm:$0xe]
        %v3124 = vld [vmem:[%s1853 + $0x88] sm:$0xf]
        %v3125 = vld [vmem:[%s1853 + $0x8c] sm:$0x1]
        %v3126 = vld [vmem:[%s1853 + $0x90] sm:$0xe]
        %v3127 = vld [vmem:[%s1853 + $0x94] sm:$0xf]
        %v3128 = vld [vmem:[%s1853 + $0x98] sm:$0x1]
        %v3129 = vld [vmem:[%s1853 + $0x9c] sm:$0xe]
        %v3130 = vld [vmem:[%s1853 + $0xa0] sm:$0xf]
        %v3131 = vld [vmem:[%s1853 + $0xa4] sm:$0x1]
        %v3132 = vld [vmem:[%s1853 + $0xa8] sm:$0xe]
        %v3133 = vld [vmem:[%s1853 + $0xac] sm:$0xf]
        %v3134 = vld [vmem:[%s1853 + $0xb0] sm:$0x1]
        %v3135 = vld [vmem:[%s1853 + $0xb4] sm:$0xe]
        %v3136 = vld [vmem:[%s1853 + $0xb8] sm:$0xf]
        %v3137 = vld [vmem:[%s1853 + $0xbc] sm:$0x1]
        %v3186 = vrot.slane %v3090, 5
        %v3187 = vrot.slane %v3186, 4
        %v3188 = vrot.slane %v3091, 5
        %v3189 = vsel %vm1367, %v3187, %v3188
        %v3190 = vrot.slane %v3188, 4
        %v3191 = vrot.slane %v3092, 5
        %v3192 = vsel %vm1367, %v3190, %v3191
        %v3193 = vrot.slane %v3093, 5
        %v3194 = vrot.slane %v3193, 4
        %v3195 = vrot.slane %v3094, 5
        %v3196 = vsel %vm1367, %v3194, %v3195
        %v3197 = vrot.slane %v3195, 4
        %v3198 = vrot.slane %v3095, 5
        %v3199 = vsel %vm1367, %v3197, %v3198
        %v3200 = vrot.slane %v3096, 5
        %v3201 = vrot.slane %v3200, 4
        %v3202 = vrot.slane %v3097, 5
        %v3203 = vsel %vm1367, %v3201, %v3202
        %v3204 = vrot.slane %v3202, 4
        %v3205 = vrot.slane %v3098, 5
        %v3206 = vsel %vm1367, %v3204, %v3205
        %v3207 = vrot.slane %v3099, 5
        %v3208 = vrot.slane %v3207, 4
        %v3209 = vrot.slane %v3100, 5
        %v3210 = vsel %vm1367, %v3208, %v3209
        %v3211 = vrot.slane %v3209, 4
        %v3212 = vrot.slane %v3101, 5
        %v3213 = vsel %vm1367, %v3211, %v3212
        %v3214 = vrot.slane %v3102, 5
        %v3215 = vrot.slane %v3214, 4
        %v3216 = vrot.slane %v3103, 5
        %v3217 = vsel %vm1367, %v3215, %v3216
        %v3218 = vrot.slane %v3216, 4
        %v3219 = vrot.slane %v3104, 5
        %v3220 = vsel %vm1367, %v3218, %v3219
        %v3221 = vrot.slane %v3105, 5
        %v3222 = vrot.slane %v3221, 4
        %v3223 = vrot.slane %v3106, 5
        %v3224 = vsel %vm1367, %v3222, %v3223
        %v3225 = vrot.slane %v3223, 4
        %v3226 = vrot.slane %v3107, 5
        %v3227 = vsel %vm1367, %v3225, %v3226
        %v3228 = vrot.slane %v3108, 5
        %v3229 = vrot.slane %v3228, 4
        %v3230 = vrot.slane %v3109, 5
        %v3231 = vsel %vm1367, %v3229, %v3230
        %v3232 = vrot.slane %v3230, 4
        %v3233 = vrot.slane %v3110, 5
        %v3234 = vsel %vm1367, %v3232, %v3233
        %v3235 = vrot.slane %v3111, 5
        %v3236 = vrot.slane %v3235, 4
        %v3237 = vrot.slane %v3112, 5
        %v3238 = vsel %vm1367, %v3236, %v3237
        %v3239 = vrot.slane %v3237, 4
        %v3240 = vrot.slane %v3113, 5
        %v3241 = vsel %vm1367, %v3239, %v3240
        %v3242 = vrot.slane %v3114, 5
        %v3243 = vrot.slane %v3242, 4
        %v3244 = vrot.slane %v3115, 5
        %v3245 = vsel %vm1367, %v3243, %v3244
        %v3246 = vrot.slane %v3244, 4
        %v3247 = vrot.slane %v3116, 5
        %v3248 = vsel %vm1367, %v3246, %v3247
        %v3249 = vrot.slane %v3117, 5
        %v3250 = vrot.slane %v3249, 4
        %v3251 = vrot.slane %v3118, 5
        %v3252 = vsel %vm1367, %v3250, %v3251
        %v3253 = vrot.slane %v3251, 4
        %v3254 = vrot.slane %v3119, 5
        %v3255 = vsel %vm1367, %v3253, %v3254
        %v3256 = vrot.slane %v3120, 5
        %v3257 = vrot.slane %v3256, 4
        %v3258 = vrot.slane %v3121, 5
        %v3259 = vsel %vm1367, %v3257, %v3258
        %v3260 = vrot.slane %v3258, 4
        %v3261 = vrot.slane %v3122, 5
        %v3262 = vsel %vm1367, %v3260, %v3261
        %v3263 = vrot.slane %v3123, 5
        %v3264 = vrot.slane %v3263, 4
        %v3265 = vrot.slane %v3124, 5
        %v3266 = vsel %vm1367, %v3264, %v3265
        %v3267 = vrot.slane %v3265, 4
        %v3268 = vrot.slane %v3125, 5
        %v3269 = vsel %vm1367, %v3267, %v3268
        %v3270 = vrot.slane %v3126, 5
        %v3271 = vrot.slane %v3270, 4
        %v3272 = vrot.slane %v3127, 5
        %v3273 = vsel %vm1367, %v3271, %v3272
        %v3274 = vrot.slane %v3272, 4
        %v3275 = vrot.slane %v3128, 5
        %v3276 = vsel %vm1367, %v3274, %v3275
        %v3277 = vrot.slane %v3129, 5
        %v3278 = vrot.slane %v3277, 4
        %v3279 = vrot.slane %v3130, 5
        %v3280 = vsel %vm1367, %v3278, %v3279
        %v3281 = vrot.slane %v3279, 4
        %v3282 = vrot.slane %v3131, 5
        %v3283 = vsel %vm1367, %v3281, %v3282
        %v3284 = vrot.slane %v3132, 5
        %v3285 = vrot.slane %v3284, 4
        %v3286 = vrot.slane %v3133, 5
        %v3287 = vsel %vm1367, %v3285, %v3286
        %v3288 = vrot.slane %v3286, 4
        %v3289 = vrot.slane %v3134, 5
        %v3290 = vsel %vm1367, %v3288, %v3289
        %v3291 = vrot.slane %v3135, 5
        %v3292 = vrot.slane %v3291, 4
        %v3293 = vrot.slane %v3136, 5
        %v3294 = vsel %vm1367, %v3292, %v3293
        %v3295 = vrot.slane %v3293, 4
        %v3296 = vrot.slane %v3137, 5
        %v3297 = vsel %vm1367, %v3295, %v3296
        %s3298 = scalar_lea.vmem %s1, 20
        %v3299 = vld [vmem:[%s3298] sm:$0xf]
        %v3300 = vunpack.c.l.b16 %v3189
        %v3301 = vunpack.c.l.b16 %v3192
        %v3302 = vunpack.c.l.b16 %v3196
        %v3303 = vunpack.c.l.b16 %v3199
        %v3304 = vunpack.c.l.b16 %v3203
        %v3305 = vunpack.c.l.b16 %v3206
        %v3306 = vunpack.c.l.b16 %v3210
        %v3307 = vunpack.c.l.b16 %v3213
        %v3308 = vunpack.c.l.b16 %v3217
        %v3309 = vunpack.c.l.b16 %v3220
        %v3310 = vunpack.c.l.b16 %v3224
        %v3311 = vunpack.c.l.b16 %v3227
        %v3312 = vunpack.c.l.b16 %v3231
        %v3313 = vunpack.c.l.b16 %v3234
        %v3314 = vunpack.c.l.b16 %v3238
        %v3315 = vunpack.c.l.b16 %v3241
        %v3316 = vunpack.c.l.b16 %v3245
        %v3317 = vunpack.c.l.b16 %v3248
        %v3318 = vunpack.c.l.b16 %v3252
        %v3319 = vunpack.c.l.b16 %v3255
        %v3320 = vunpack.c.l.b16 %v3259
        %v3321 = vunpack.c.l.b16 %v3262
        %v3322 = vunpack.c.l.b16 %v3266
        %v3323 = vunpack.c.l.b16 %v3269
        %v3324 = vunpack.c.l.b16 %v3273
        %v3325 = vunpack.c.l.b16 %v3276
        %v3326 = vunpack.c.l.b16 %v3280
        %v3327 = vunpack.c.l.b16 %v3283
        %v3328 = vunpack.c.l.b16 %v3287
        %v3329 = vunpack.c.l.b16 %v3290
        %v3330 = vunpack.c.l.b16 %v3294
        %v3331 = vunpack.c.l.b16 %v3297
        %v3332 = vpack.c.b16 %v3301, %v3300
        %v3333 = vpack.c.b16 %v3303, %v3302
        %v3334 = vpack.c.b16 %v3305, %v3304
        %v3335 = vpack.c.b16 %v3307, %v3306
        %v3336 = vpack.c.b16 %v3309, %v3308
        %v3337 = vpack.c.b16 %v3311, %v3310
        %v3338 = vpack.c.b16 %v3313, %v3312
        %v3339 = vpack.c.b16 %v3315, %v3314
        %v3340 = vpack.c.b16 %v3317, %v3316
        %v3341 = vpack.c.b16 %v3319, %v3318
        %v3342 = vpack.c.b16 %v3321, %v3320
        %v3343 = vpack.c.b16 %v3323, %v3322
        %v3344 = vpack.c.b16 %v3325, %v3324
        %v3345 = vpack.c.b16 %v3327, %v3326
        %v3346 = vpack.c.b16 %v3329, %v3328
        %v3347 = vpack.c.b16 %v3331, %v3330
        %v3350 = vunpack.c.l.s4 1983009808
        %v3351 = vunpack.c.0.s8 %v3350
        %v3352 = vlaneseq
        %v3353 = vshrl.u32 %v3352, 7
        %v3354 = vsub.s32 %v3351, %v3353
        %v3355 = vrot.slane %v3299, %v3354
        %v3356 = vcombine.high %v3355, %v3355
        %v3358 = vsel %vm684, %v3332, 0
        %v3361 = vsel %vm684, %v3333, 0
        %v3364 = vsel %vm684, %v3334, 0
        %v3367 = vsel %vm684, %v3335, 0
        %v3370 = vsel %vm684, %v3336, 0
        %v3373 = vsel %vm684, %v3337, 0
        %v3376 = vsel %vm684, %v3338, 0
        %v3379 = vsel %vm684, %v3339, 0
        %v3382 = vsel %vm684, %v3340, 0
        %v3385 = vsel %vm684, %v3341, 0
        %v3388 = vsel %vm684, %v3342, 0
        %v3391 = vsel %vm684, %v3343, 0
        %v3394 = vsel %vm684, %v3344, 0
        %v3397 = vsel %vm684, %v3345, 0
        %v3400 = vsel %vm684, %v3346, 0
        %v3403 = vsel %vm684, %v3347, 0
        %v3406 = vsel %vm733, %v3355, 0
        %v3409 = vsel %vm733, %v3356, 0
        %3411 = vmatprep.subr.bf16.mxu0 0
        %3412 = vmatpush1.bf16.msra.mxu0 0
        %3413 = vmatprep.subr.bf16.mxu0 0
        %3414 = vmatpush1.bf16.msra.mxu0 0
        %3415 = vmatprep.subr.bf16.mxu0 0
        %3416 = vmatpush1.bf16.msra.mxu0 0
        %3417 = vmatprep.subr.bf16.mxu0 0
        %3418 = vmatpush1.bf16.msra.mxu0 0
        %3419 = vmatprep.subr.bf16.mxu0 0
        %3420 = vmatpush1.bf16.msra.mxu0 0
        %3421 = vmatprep.subr.bf16.mxu0 0
        %3422 = vmatpush1.bf16.msra.mxu0 0
        %3423 = vmatprep.subr.bf16.mxu0 0
        %3424 = vmatpush1.bf16.msra.mxu0 0
        %3425 = vmatprep.subr.bf16.mxu0 %v3409
        %3426 = vmatpush1.bf16.msra.mxu0 %v3406
        %3427 = vmatprep.subr.bf16.mxu0 0
        %3428 = vmatpush2.bf16.msra.mxu0 0
        %3429 = vmatprep.subr.bf16.mxu0 0
        %3430 = vmatpush2.bf16.msra.mxu0 0
        %3431 = vmatprep.subr.bf16.mxu0 0
        %3432 = vmatpush2.bf16.msra.mxu0 0
        %3433 = vmatprep.subr.bf16.mxu0 0
        %3434 = vmatpush2.bf16.msra.mxu0 0
        %3435 = vmatprep.subr.bf16.mxu0 0
        %3436 = vmatpush2.bf16.msra.mxu0 0
        %3437 = vmatprep.subr.bf16.mxu0 0
        %3438 = vmatpush2.bf16.msra.mxu0 0
        %3439 = vmatprep.subr.bf16.mxu0 0
        %3440 = vmatpush2.bf16.msra.mxu0 0
        %3441 = vmatprep.subr.bf16.mxu0 0
        %3442 = vmatpush2.bf16.msra.mxu0 0
        %3443 = vmatprep.mubr.bf16.mxu0 0
        %3444 = vmatmul.mubr.bf16.gmra.mxu0 %v3358
        %v3445 = vpop.f32.mrf.mxu0
        %v3446 = vadd.f32 0.0, %v3445
        %v3447 = vpop.f32.mrf.mxu0
        %v3448 = vadd.f32 0.0, %v3447
        %v3449 = vpop.f32.mrf.mxu0
        %v3450 = vadd.f32 0.0, %v3449
        %v3451 = vpop.f32.mrf.mxu0
        %v3452 = vadd.f32 0.0, %v3451
        %3453 = vmatprep.mubr.bf16.mxu0 0
        %3454 = vmatmul.mubr.bf16.gmra.mxu0 %v3361
        %v3455 = vpop.f32.mrf.mxu0
        %v3456 = vadd.f32 0.0, %v3455
        %v3457 = vpop.f32.mrf.mxu0
        %v3458 = vadd.f32 0.0, %v3457
        %v3459 = vpop.f32.mrf.mxu0
        %v3460 = vadd.f32 0.0, %v3459
        %v3461 = vpop.f32.mrf.mxu0
        %v3462 = vadd.f32 0.0, %v3461
        %3463 = vmatprep.mubr.bf16.mxu0 0
        %3464 = vmatmul.mubr.bf16.gmra.mxu0 %v3364
        %v3465 = vpop.f32.mrf.mxu0
        %v3466 = vadd.f32 0.0, %v3465
        %v3467 = vpop.f32.mrf.mxu0
        %v3468 = vadd.f32 0.0, %v3467
        %v3469 = vpop.f32.mrf.mxu0
        %v3470 = vadd.f32 0.0, %v3469
        %v3471 = vpop.f32.mrf.mxu0
        %v3472 = vadd.f32 0.0, %v3471
        %3473 = vmatprep.mubr.bf16.mxu0 0
        %3474 = vmatmul.mubr.bf16.gmra.mxu0 %v3367
        %v3475 = vpop.f32.mrf.mxu0
        %v3476 = vadd.f32 0.0, %v3475
        %v3477 = vpop.f32.mrf.mxu0
        %v3478 = vadd.f32 0.0, %v3477
        %v3479 = vpop.f32.mrf.mxu0
        %v3480 = vadd.f32 0.0, %v3479
        %v3481 = vpop.f32.mrf.mxu0
        %v3482 = vadd.f32 0.0, %v3481
        %3483 = vmatprep.mubr.bf16.mxu0 0
        %3484 = vmatmul.mubr.bf16.gmra.mxu0 %v3370
        %v3485 = vpop.f32.mrf.mxu0
        %v3486 = vadd.f32 0.0, %v3485
        %v3487 = vpop.f32.mrf.mxu0
        %v3488 = vadd.f32 0.0, %v3487
        %v3489 = vpop.f32.mrf.mxu0
        %v3490 = vadd.f32 0.0, %v3489
        %v3491 = vpop.f32.mrf.mxu0
        %v3492 = vadd.f32 0.0, %v3491
        %3493 = vmatprep.mubr.bf16.mxu0 0
        %3494 = vmatmul.mubr.bf16.gmra.mxu0 %v3373
        %v3495 = vpop.f32.mrf.mxu0
        %v3496 = vadd.f32 0.0, %v3495
        %v3497 = vpop.f32.mrf.mxu0
        %v3498 = vadd.f32 0.0, %v3497
        %v3499 = vpop.f32.mrf.mxu0
        %v3500 = vadd.f32 0.0, %v3499
        %v3501 = vpop.f32.mrf.mxu0
        %v3502 = vadd.f32 0.0, %v3501
        %3503 = vmatprep.mubr.bf16.mxu0 0
        %3504 = vmatmul.mubr.bf16.gmra.mxu0 %v3376
        %v3505 = vpop.f32.mrf.mxu0
        %v3506 = vadd.f32 0.0, %v3505
        %v3507 = vpop.f32.mrf.mxu0
        %v3508 = vadd.f32 0.0, %v3507
        %v3509 = vpop.f32.mrf.mxu0
        %v3510 = vadd.f32 0.0, %v3509
        %v3511 = vpop.f32.mrf.mxu0
        %v3512 = vadd.f32 0.0, %v3511
        %3513 = vmatprep.mubr.bf16.mxu0 0
        %3514 = vmatmul.mubr.bf16.gmra.mxu0 %v3379
        %v3515 = vpop.f32.mrf.mxu0
        %v3516 = vadd.f32 0.0, %v3515
        %v3517 = vpop.f32.mrf.mxu0
        %v3518 = vadd.f32 0.0, %v3517
        %v3519 = vpop.f32.mrf.mxu0
        %v3520 = vadd.f32 0.0, %v3519
        %v3521 = vpop.f32.mrf.mxu0
        %v3522 = vadd.f32 0.0, %v3521
        %3523 = vmatprep.mubr.bf16.mxu0 0
        %3524 = vmatmul.mubr.bf16.gmra.mxu0 %v3382
        %v3525 = vpop.f32.mrf.mxu0
        %v3526 = vadd.f32 0.0, %v3525
        %v3527 = vpop.f32.mrf.mxu0
        %v3528 = vadd.f32 0.0, %v3527
        %v3529 = vpop.f32.mrf.mxu0
        %v3530 = vadd.f32 0.0, %v3529
        %v3531 = vpop.f32.mrf.mxu0
        %v3532 = vadd.f32 0.0, %v3531
        %3533 = vmatprep.mubr.bf16.mxu0 0
        %3534 = vmatmul.mubr.bf16.gmra.mxu0 %v3385
        %v3535 = vpop.f32.mrf.mxu0
        %v3536 = vadd.f32 0.0, %v3535
        %v3537 = vpop.f32.mrf.mxu0
        %v3538 = vadd.f32 0.0, %v3537
        %v3539 = vpop.f32.mrf.mxu0
        %v3540 = vadd.f32 0.0, %v3539
        %v3541 = vpop.f32.mrf.mxu0
        %v3542 = vadd.f32 0.0, %v3541
        %3543 = vmatprep.mubr.bf16.mxu0 0
        %3544 = vmatmul.mubr.bf16.gmra.mxu0 %v3388
        %v3545 = vpop.f32.mrf.mxu0
        %v3546 = vadd.f32 0.0, %v3545
        %v3547 = vpop.f32.mrf.mxu0
        %v3548 = vadd.f32 0.0, %v3547
        %v3549 = vpop.f32.mrf.mxu0
        %v3550 = vadd.f32 0.0, %v3549
        %v3551 = vpop.f32.mrf.mxu0
        %v3552 = vadd.f32 0.0, %v3551
        %3553 = vmatprep.mubr.bf16.mxu0 0
        %3554 = vmatmul.mubr.bf16.gmra.mxu0 %v3391
        %v3555 = vpop.f32.mrf.mxu0
        %v3556 = vadd.f32 0.0, %v3555
        %v3557 = vpop.f32.mrf.mxu0
        %v3558 = vadd.f32 0.0, %v3557
        %v3559 = vpop.f32.mrf.mxu0
        %v3560 = vadd.f32 0.0, %v3559
        %v3561 = vpop.f32.mrf.mxu0
        %v3562 = vadd.f32 0.0, %v3561
        %3563 = vmatprep.mubr.bf16.mxu0 0
        %3564 = vmatmul.mubr.bf16.gmra.mxu0 %v3394
        %v3565 = vpop.f32.mrf.mxu0
        %v3566 = vadd.f32 0.0, %v3565
        %v3567 = vpop.f32.mrf.mxu0
        %v3568 = vadd.f32 0.0, %v3567
        %v3569 = vpop.f32.mrf.mxu0
        %v3570 = vadd.f32 0.0, %v3569
        %v3571 = vpop.f32.mrf.mxu0
        %v3572 = vadd.f32 0.0, %v3571
        %3573 = vmatprep.mubr.bf16.mxu0 0
        %3574 = vmatmul.mubr.bf16.gmra.mxu0 %v3397
        %v3575 = vpop.f32.mrf.mxu0
        %v3576 = vadd.f32 0.0, %v3575
        %v3577 = vpop.f32.mrf.mxu0
        %v3578 = vadd.f32 0.0, %v3577
        %v3579 = vpop.f32.mrf.mxu0
        %v3580 = vadd.f32 0.0, %v3579
        %v3581 = vpop.f32.mrf.mxu0
        %v3582 = vadd.f32 0.0, %v3581
        %3583 = vmatprep.mubr.bf16.mxu0 0
        %3584 = vmatmul.mubr.bf16.gmra.mxu0 %v3400
        %v3585 = vpop.f32.mrf.mxu0
        %v3586 = vadd.f32 0.0, %v3585
        %v3587 = vpop.f32.mrf.mxu0
        %v3588 = vadd.f32 0.0, %v3587
        %v3589 = vpop.f32.mrf.mxu0
        %v3590 = vadd.f32 0.0, %v3589
        %v3591 = vpop.f32.mrf.mxu0
        %v3592 = vadd.f32 0.0, %v3591
        %3593 = vmatprep.mubr.bf16.mxu0 0
        %3594 = vmatmul.mubr.bf16.gmra.mxu0 %v3403
        %v3595 = vpop.f32.mrf.mxu0
        %v3596 = vadd.f32 0.0, %v3595
        %v3597 = vpop.f32.mrf.mxu0
        %v3598 = vadd.f32 0.0, %v3597
        %v3599 = vpop.f32.mrf.mxu0
        %v3600 = vadd.f32 0.0, %v3599
        %v3601 = vpop.f32.mrf.mxu0
        %v3602 = vadd.f32 0.0, %v3601
        %3603 = vdwg.mxu0
        %v3604 = vadd.f32 %v3026, %v3446
        %v3605 = vadd.f32 %v3027, %v3448
        %v3606 = vadd.f32 %v3028, %v3450
        %v3607 = vadd.f32 %v3029, %v3452
        %v3608 = vadd.f32 %v3030, %v3456
        %v3609 = vadd.f32 %v3031, %v3458
        %v3610 = vadd.f32 %v3032, %v3460
        %v3611 = vadd.f32 %v3033, %v3462
        %v3612 = vadd.f32 %v3034, %v3466
        %v3613 = vadd.f32 %v3035, %v3468
        %v3614 = vadd.f32 %v3036, %v3470
        %v3615 = vadd.f32 %v3037, %v3472
        %v3616 = vadd.f32 %v3038, %v3476
        %v3617 = vadd.f32 %v3039, %v3478
        %v3618 = vadd.f32 %v3040, %v3480
        %v3619 = vadd.f32 %v3041, %v3482
        %v3620 = vadd.f32 %v3042, %v3486
        %v3621 = vadd.f32 %v3043, %v3488
        %v3622 = vadd.f32 %v3044, %v3490
        %v3623 = vadd.f32 %v3045, %v3492
        %v3624 = vadd.f32 %v3046, %v3496
        %v3625 = vadd.f32 %v3047, %v3498
        %v3626 = vadd.f32 %v3048, %v3500
        %v3627 = vadd.f32 %v3049, %v3502
        %v3628 = vadd.f32 %v3050, %v3506
        %v3629 = vadd.f32 %v3051, %v3508
        %v3630 = vadd.f32 %v3052, %v3510
        %v3631 = vadd.f32 %v3053, %v3512
        %v3632 = vadd.f32 %v3054, %v3516
        %v3633 = vadd.f32 %v3055, %v3518
        %v3634 = vadd.f32 %v3056, %v3520
        %v3635 = vadd.f32 %v3057, %v3522
        %v3636 = vadd.f32 %v3058, %v3526
        %v3637 = vadd.f32 %v3059, %v3528
        %v3638 = vadd.f32 %v3060, %v3530
        %v3639 = vadd.f32 %v3061, %v3532
        %v3640 = vadd.f32 %v3062, %v3536
        %v3641 = vadd.f32 %v3063, %v3538
        %v3642 = vadd.f32 %v3064, %v3540
        %v3643 = vadd.f32 %v3065, %v3542
        %v3644 = vadd.f32 %v3066, %v3546
        %v3645 = vadd.f32 %v3067, %v3548
        %v3646 = vadd.f32 %v3068, %v3550
        %v3647 = vadd.f32 %v3069, %v3552
        %v3648 = vadd.f32 %v3070, %v3556
        %v3649 = vadd.f32 %v3071, %v3558
        %v3650 = vadd.f32 %v3072, %v3560
        %v3651 = vadd.f32 %v3073, %v3562
        %v3652 = vadd.f32 %v3074, %v3566
        %v3653 = vadd.f32 %v3075, %v3568
        %v3654 = vadd.f32 %v3076, %v3570
        %v3655 = vadd.f32 %v3077, %v3572
        %v3656 = vadd.f32 %v3078, %v3576
        %v3657 = vadd.f32 %v3079, %v3578
        %v3658 = vadd.f32 %v3080, %v3580
        %v3659 = vadd.f32 %v3081, %v3582
        %v3660 = vadd.f32 %v3082, %v3586
        %v3661 = vadd.f32 %v3083, %v3588
        %v3662 = vadd.f32 %v3084, %v3590
        %v3663 = vadd.f32 %v3085, %v3592
        %v3664 = vadd.f32 %v3086, %v3596
        %v3665 = vadd.f32 %v3087, %v3598
        %v3666 = vadd.f32 %v3088, %v3600
        %v3667 = vadd.f32 %v3089, %v3602
        %s3668 = sadd.s32 %s185, 2
        %s3669 = smul.u32 %s3668, 3
        %s3670 = smul.addr %s3669, 4
        %s3671 = scalar_lea.vmem %s182, %s3670
        %v3672 = vld [vmem:[%s3671] sm:$0xf]
        %v3673 = vld [vmem:[%s3671 + $0x4] sm:$0xf]
        %v3674 = vld [vmem:[%s3671 + $0xc] sm:$0xf]
        %v3675 = vld [vmem:[%s3671 + $0x10] sm:$0xf]
        %v3676 = vld [vmem:[%s3671 + $0x18] sm:$0xf]
        %v3677 = vld [vmem:[%s3671 + $0x1c] sm:$0xf]
        %v3678 = vld [vmem:[%s3671 + $0x24] sm:$0xf]
        %v3679 = vld [vmem:[%s3671 + $0x28] sm:$0xf]
        %v3680 = vld [vmem:[%s3671 + $0x30] sm:$0xf]
        %v3681 = vld [vmem:[%s3671 + $0x34] sm:$0xf]
        %v3682 = vld [vmem:[%s3671 + $0x3c] sm:$0xf]
        %v3683 = vld [vmem:[%s3671 + $0x40] sm:$0xf]
        %v3684 = vld [vmem:[%s3671 + $0x48] sm:$0xf]
        %v3685 = vld [vmem:[%s3671 + $0x4c] sm:$0xf]
        %v3686 = vld [vmem:[%s3671 + $0x54] sm:$0xf]
        %v3687 = vld [vmem:[%s3671 + $0x58] sm:$0xf]
        %v3688 = vld [vmem:[%s3671 + $0x60] sm:$0xf]
        %v3689 = vld [vmem:[%s3671 + $0x64] sm:$0xf]
        %v3690 = vld [vmem:[%s3671 + $0x6c] sm:$0xf]
        %v3691 = vld [vmem:[%s3671 + $0x70] sm:$0xf]
        %v3692 = vld [vmem:[%s3671 + $0x78] sm:$0xf]
        %v3693 = vld [vmem:[%s3671 + $0x7c] sm:$0xf]
        %v3694 = vld [vmem:[%s3671 + $0x84] sm:$0xf]
        %v3695 = vld [vmem:[%s3671 + $0x88] sm:$0xf]
        %v3696 = vld [vmem:[%s3671 + $0x90] sm:$0xf]
        %v3697 = vld [vmem:[%s3671 + $0x94] sm:$0xf]
        %v3698 = vld [vmem:[%s3671 + $0x9c] sm:$0xf]
        %v3699 = vld [vmem:[%s3671 + $0xa0] sm:$0xf]
        %v3700 = vld [vmem:[%s3671 + $0xa8] sm:$0xf]
        %v3701 = vld [vmem:[%s3671 + $0xac] sm:$0xf]
        %v3702 = vld [vmem:[%s3671 + $0xb4] sm:$0xf]
        %v3703 = vld [vmem:[%s3671 + $0xb8] sm:$0xf]
        %s3704 = scalar_lea.vmem %s1, 24
        %v3705 = vld [vmem:[%s3704] sm:$0xf]
        %v3738 = vunpack.c.l.b16 %v3672
        %v3739 = vunpack.c.l.b16 %v3673
        %v3740 = vunpack.c.l.b16 %v3674
        %v3741 = vunpack.c.l.b16 %v3675
        %v3742 = vunpack.c.l.b16 %v3676
        %v3743 = vunpack.c.l.b16 %v3677
        %v3744 = vunpack.c.l.b16 %v3678
        %v3745 = vunpack.c.l.b16 %v3679
        %v3746 = vunpack.c.l.b16 %v3680
        %v3747 = vunpack.c.l.b16 %v3681
        %v3748 = vunpack.c.l.b16 %v3682
        %v3749 = vunpack.c.l.b16 %v3683
        %v3750 = vunpack.c.l.b16 %v3684
        %v3751 = vunpack.c.l.b16 %v3685
        %v3752 = vunpack.c.l.b16 %v3686
        %v3753 = vunpack.c.l.b16 %v3687
        %v3754 = vunpack.c.l.b16 %v3688
        %v3755 = vunpack.c.l.b16 %v3689
        %v3756 = vunpack.c.l.b16 %v3690
        %v3757 = vunpack.c.l.b16 %v3691
        %v3758 = vunpack.c.l.b16 %v3692
        %v3759 = vunpack.c.l.b16 %v3693
        %v3760 = vunpack.c.l.b16 %v3694
        %v3761 = vunpack.c.l.b16 %v3695
        %v3762 = vunpack.c.l.b16 %v3696
        %v3763 = vunpack.c.l.b16 %v3697
        %v3764 = vunpack.c.l.b16 %v3698
        %v3765 = vunpack.c.l.b16 %v3699
        %v3766 = vunpack.c.l.b16 %v3700
        %v3767 = vunpack.c.l.b16 %v3701
        %v3768 = vunpack.c.l.b16 %v3702
        %v3769 = vunpack.c.l.b16 %v3703
        %v3770 = vpack.c.b16 %v3739, %v3738
        %v3771 = vpack.c.b16 %v3741, %v3740
        %v3772 = vpack.c.b16 %v3743, %v3742
        %v3773 = vpack.c.b16 %v3745, %v3744
        %v3774 = vpack.c.b16 %v3747, %v3746
        %v3775 = vpack.c.b16 %v3749, %v3748
        %v3776 = vpack.c.b16 %v3751, %v3750
        %v3777 = vpack.c.b16 %v3753, %v3752
        %v3778 = vpack.c.b16 %v3755, %v3754
        %v3779 = vpack.c.b16 %v3757, %v3756
        %v3780 = vpack.c.b16 %v3759, %v3758
        %v3781 = vpack.c.b16 %v3761, %v3760
        %v3782 = vpack.c.b16 %v3763, %v3762
        %v3783 = vpack.c.b16 %v3765, %v3764
        %v3784 = vpack.c.b16 %v3767, %v3766
        %v3785 = vpack.c.b16 %v3769, %v3768
        %v3788 = vunpack.c.l.s4 1983009808
        %v3789 = vunpack.c.0.s8 %v3788
        %v3790 = vlaneseq
        %v3791 = vshrl.u32 %v3790, 7
        %v3792 = vsub.s32 %v3789, %v3791
        %v3793 = vrot.slane %v3705, %v3792
        %v3794 = vcombine.high %v3793, %v3793
        %v3796 = vsel %vm684, %v3770, 0
        %v3799 = vsel %vm684, %v3771, 0
        %v3802 = vsel %vm684, %v3772, 0
        %v3805 = vsel %vm684, %v3773, 0
        %v3808 = vsel %vm684, %v3774, 0
        %v3811 = vsel %vm684, %v3775, 0
        %v3814 = vsel %vm684, %v3776, 0
        %v3817 = vsel %vm684, %v3777, 0
        %v3820 = vsel %vm684, %v3778, 0
        %v3823 = vsel %vm684, %v3779, 0
        %v3826 = vsel %vm684, %v3780, 0
        %v3829 = vsel %vm684, %v3781, 0
        %v3832 = vsel %vm684, %v3782, 0
        %v3835 = vsel %vm684, %v3783, 0
        %v3838 = vsel %vm684, %v3784, 0
        %v3841 = vsel %vm684, %v3785, 0
        %v3844 = vsel %vm733, %v3793, 0
        %v3847 = vsel %vm733, %v3794, 0
        %3849 = vmatprep.subr.bf16.mxu0 0
        %3850 = vmatpush1.bf16.msra.mxu0 0
        %3851 = vmatprep.subr.bf16.mxu0 0
        %3852 = vmatpush1.bf16.msra.mxu0 0
        %3853 = vmatprep.subr.bf16.mxu0 0
        %3854 = vmatpush1.bf16.msra.mxu0 0
        %3855 = vmatprep.subr.bf16.mxu0 0
        %3856 = vmatpush1.bf16.msra.mxu0 0
        %3857 = vmatprep.subr.bf16.mxu0 0
        %3858 = vmatpush1.bf16.msra.mxu0 0
        %3859 = vmatprep.subr.bf16.mxu0 0
        %3860 = vmatpush1.bf16.msra.mxu0 0
        %3861 = vmatprep.subr.bf16.mxu0 0
        %3862 = vmatpush1.bf16.msra.mxu0 0
        %3863 = vmatprep.subr.bf16.mxu0 %v3847
        %3864 = vmatpush1.bf16.msra.mxu0 %v3844
        %3865 = vmatprep.subr.bf16.mxu0 0
        %3866 = vmatpush2.bf16.msra.mxu0 0
        %3867 = vmatprep.subr.bf16.mxu0 0
        %3868 = vmatpush2.bf16.msra.mxu0 0
        %3869 = vmatprep.subr.bf16.mxu0 0
        %3870 = vmatpush2.bf16.msra.mxu0 0
        %3871 = vmatprep.subr.bf16.mxu0 0
        %3872 = vmatpush2.bf16.msra.mxu0 0
        %3873 = vmatprep.subr.bf16.mxu0 0
        %3874 = vmatpush2.bf16.msra.mxu0 0
        %3875 = vmatprep.subr.bf16.mxu0 0
        %3876 = vmatpush2.bf16.msra.mxu0 0
        %3877 = vmatprep.subr.bf16.mxu0 0
        %3878 = vmatpush2.bf16.msra.mxu0 0
        %3879 = vmatprep.subr.bf16.mxu0 0
        %3880 = vmatpush2.bf16.msra.mxu0 0
        %3881 = vmatprep.mubr.bf16.mxu0 0
        %3882 = vmatmul.mubr.bf16.gmra.mxu0 %v3796
        %v3883 = vpop.f32.mrf.mxu0
        %v3884 = vadd.f32 0.0, %v3883
        %v3885 = vpop.f32.mrf.mxu0
        %v3886 = vadd.f32 0.0, %v3885
        %v3887 = vpop.f32.mrf.mxu0
        %v3888 = vadd.f32 0.0, %v3887
        %v3889 = vpop.f32.mrf.mxu0
        %v3890 = vadd.f32 0.0, %v3889
        %3891 = vmatprep.mubr.bf16.mxu0 0
        %3892 = vmatmul.mubr.bf16.gmra.mxu0 %v3799
        %v3893 = vpop.f32.mrf.mxu0
        %v3894 = vadd.f32 0.0, %v3893
        %v3895 = vpop.f32.mrf.mxu0
        %v3896 = vadd.f32 0.0, %v3895
        %v3897 = vpop.f32.mrf.mxu0
        %v3898 = vadd.f32 0.0, %v3897
        %v3899 = vpop.f32.mrf.mxu0
        %v3900 = vadd.f32 0.0, %v3899
        %3901 = vmatprep.mubr.bf16.mxu0 0
        %3902 = vmatmul.mubr.bf16.gmra.mxu0 %v3802
        %v3903 = vpop.f32.mrf.mxu0
        %v3904 = vadd.f32 0.0, %v3903
        %v3905 = vpop.f32.mrf.mxu0
        %v3906 = vadd.f32 0.0, %v3905
        %v3907 = vpop.f32.mrf.mxu0
        %v3908 = vadd.f32 0.0, %v3907
        %v3909 = vpop.f32.mrf.mxu0
        %v3910 = vadd.f32 0.0, %v3909
        %3911 = vmatprep.mubr.bf16.mxu0 0
        %3912 = vmatmul.mubr.bf16.gmra.mxu0 %v3805
        %v3913 = vpop.f32.mrf.mxu0
        %v3914 = vadd.f32 0.0, %v3913
        %v3915 = vpop.f32.mrf.mxu0
        %v3916 = vadd.f32 0.0, %v3915
        %v3917 = vpop.f32.mrf.mxu0
        %v3918 = vadd.f32 0.0, %v3917
        %v3919 = vpop.f32.mrf.mxu0
        %v3920 = vadd.f32 0.0, %v3919
        %3921 = vmatprep.mubr.bf16.mxu0 0
        %3922 = vmatmul.mubr.bf16.gmra.mxu0 %v3808
        %v3923 = vpop.f32.mrf.mxu0
        %v3924 = vadd.f32 0.0, %v3923
        %v3925 = vpop.f32.mrf.mxu0
        %v3926 = vadd.f32 0.0, %v3925
        %v3927 = vpop.f32.mrf.mxu0
        %v3928 = vadd.f32 0.0, %v3927
        %v3929 = vpop.f32.mrf.mxu0
        %v3930 = vadd.f32 0.0, %v3929
        %3931 = vmatprep.mubr.bf16.mxu0 0
        %3932 = vmatmul.mubr.bf16.gmra.mxu0 %v3811
        %v3933 = vpop.f32.mrf.mxu0
        %v3934 = vadd.f32 0.0, %v3933
        %v3935 = vpop.f32.mrf.mxu0
        %v3936 = vadd.f32 0.0, %v3935
        %v3937 = vpop.f32.mrf.mxu0
        %v3938 = vadd.f32 0.0, %v3937
        %v3939 = vpop.f32.mrf.mxu0
        %v3940 = vadd.f32 0.0, %v3939
        %3941 = vmatprep.mubr.bf16.mxu0 0
        %3942 = vmatmul.mubr.bf16.gmra.mxu0 %v3814
        %v3943 = vpop.f32.mrf.mxu0
        %v3944 = vadd.f32 0.0, %v3943
        %v3945 = vpop.f32.mrf.mxu0
        %v3946 = vadd.f32 0.0, %v3945
        %v3947 = vpop.f32.mrf.mxu0
        %v3948 = vadd.f32 0.0, %v3947
        %v3949 = vpop.f32.mrf.mxu0
        %v3950 = vadd.f32 0.0, %v3949
        %3951 = vmatprep.mubr.bf16.mxu0 0
        %3952 = vmatmul.mubr.bf16.gmra.mxu0 %v3817
        %v3953 = vpop.f32.mrf.mxu0
        %v3954 = vadd.f32 0.0, %v3953
        %v3955 = vpop.f32.mrf.mxu0
        %v3956 = vadd.f32 0.0, %v3955
        %v3957 = vpop.f32.mrf.mxu0
        %v3958 = vadd.f32 0.0, %v3957
        %v3959 = vpop.f32.mrf.mxu0
        %v3960 = vadd.f32 0.0, %v3959
        %3961 = vmatprep.mubr.bf16.mxu0 0
        %3962 = vmatmul.mubr.bf16.gmra.mxu0 %v3820
        %v3963 = vpop.f32.mrf.mxu0
        %v3964 = vadd.f32 0.0, %v3963
        %v3965 = vpop.f32.mrf.mxu0
        %v3966 = vadd.f32 0.0, %v3965
        %v3967 = vpop.f32.mrf.mxu0
        %v3968 = vadd.f32 0.0, %v3967
        %v3969 = vpop.f32.mrf.mxu0
        %v3970 = vadd.f32 0.0, %v3969
        %3971 = vmatprep.mubr.bf16.mxu0 0
        %3972 = vmatmul.mubr.bf16.gmra.mxu0 %v3823
        %v3973 = vpop.f32.mrf.mxu0
        %v3974 = vadd.f32 0.0, %v3973
        %v3975 = vpop.f32.mrf.mxu0
        %v3976 = vadd.f32 0.0, %v3975
        %v3977 = vpop.f32.mrf.mxu0
        %v3978 = vadd.f32 0.0, %v3977
        %v3979 = vpop.f32.mrf.mxu0
        %v3980 = vadd.f32 0.0, %v3979
        %3981 = vmatprep.mubr.bf16.mxu0 0
        %3982 = vmatmul.mubr.bf16.gmra.mxu0 %v3826
        %v3983 = vpop.f32.mrf.mxu0
        %v3984 = vadd.f32 0.0, %v3983
        %v3985 = vpop.f32.mrf.mxu0
        %v3986 = vadd.f32 0.0, %v3985
        %v3987 = vpop.f32.mrf.mxu0
        %v3988 = vadd.f32 0.0, %v3987
        %v3989 = vpop.f32.mrf.mxu0
        %v3990 = vadd.f32 0.0, %v3989
        %3991 = vmatprep.mubr.bf16.mxu0 0
        %3992 = vmatmul.mubr.bf16.gmra.mxu0 %v3829
        %v3993 = vpop.f32.mrf.mxu0
        %v3994 = vadd.f32 0.0, %v3993
        %v3995 = vpop.f32.mrf.mxu0
        %v3996 = vadd.f32 0.0, %v3995
        %v3997 = vpop.f32.mrf.mxu0
        %v3998 = vadd.f32 0.0, %v3997
        %v3999 = vpop.f32.mrf.mxu0
        %v4000 = vadd.f32 0.0, %v3999
        %4001 = vmatprep.mubr.bf16.mxu0 0
        %4002 = vmatmul.mubr.bf16.gmra.mxu0 %v3832
        %v4003 = vpop.f32.mrf.mxu0
        %v4004 = vadd.f32 0.0, %v4003
        %v4005 = vpop.f32.mrf.mxu0
        %v4006 = vadd.f32 0.0, %v4005
        %v4007 = vpop.f32.mrf.mxu0
        %v4008 = vadd.f32 0.0, %v4007
        %v4009 = vpop.f32.mrf.mxu0
        %v4010 = vadd.f32 0.0, %v4009
        %4011 = vmatprep.mubr.bf16.mxu0 0
        %4012 = vmatmul.mubr.bf16.gmra.mxu0 %v3835
        %v4013 = vpop.f32.mrf.mxu0
        %v4014 = vadd.f32 0.0, %v4013
        %v4015 = vpop.f32.mrf.mxu0
        %v4016 = vadd.f32 0.0, %v4015
        %v4017 = vpop.f32.mrf.mxu0
        %v4018 = vadd.f32 0.0, %v4017
        %v4019 = vpop.f32.mrf.mxu0
        %v4020 = vadd.f32 0.0, %v4019
        %4021 = vmatprep.mubr.bf16.mxu0 0
        %4022 = vmatmul.mubr.bf16.gmra.mxu0 %v3838
        %v4023 = vpop.f32.mrf.mxu0
        %v4024 = vadd.f32 0.0, %v4023
        %v4025 = vpop.f32.mrf.mxu0
        %v4026 = vadd.f32 0.0, %v4025
        %v4027 = vpop.f32.mrf.mxu0
        %v4028 = vadd.f32 0.0, %v4027
        %v4029 = vpop.f32.mrf.mxu0
        %v4030 = vadd.f32 0.0, %v4029
        %4031 = vmatprep.mubr.bf16.mxu0 0
        %4032 = vmatmul.mubr.bf16.gmra.mxu0 %v3841
        %v4033 = vpop.f32.mrf.mxu0
        %v4034 = vadd.f32 0.0, %v4033
        %v4035 = vpop.f32.mrf.mxu0
        %v4036 = vadd.f32 0.0, %v4035
        %v4037 = vpop.f32.mrf.mxu0
        %v4038 = vadd.f32 0.0, %v4037
        %v4039 = vpop.f32.mrf.mxu0
        %v4040 = vadd.f32 0.0, %v4039
        %4041 = vdwg.mxu0
        %v4042 = vadd.f32 %v3604, %v3884
        %v4043 = vadd.f32 %v3605, %v3886
        %v4044 = vadd.f32 %v3606, %v3888
        %v4045 = vadd.f32 %v3607, %v3890
        %v4046 = vadd.f32 %v3608, %v3894
        %v4047 = vadd.f32 %v3609, %v3896
        %v4048 = vadd.f32 %v3610, %v3898
        %v4049 = vadd.f32 %v3611, %v3900
        %v4050 = vadd.f32 %v3612, %v3904
        %v4051 = vadd.f32 %v3613, %v3906
        %v4052 = vadd.f32 %v3614, %v3908
        %v4053 = vadd.f32 %v3615, %v3910
        %v4054 = vadd.f32 %v3616, %v3914
        %v4055 = vadd.f32 %v3617, %v3916
        %v4056 = vadd.f32 %v3618, %v3918
        %v4057 = vadd.f32 %v3619, %v3920
        %v4058 = vadd.f32 %v3620, %v3924
        %v4059 = vadd.f32 %v3621, %v3926
        %v4060 = vadd.f32 %v3622, %v3928
        %v4061 = vadd.f32 %v3623, %v3930
        %v4062 = vadd.f32 %v3624, %v3934
        %v4063 = vadd.f32 %v3625, %v3936
        %v4064 = vadd.f32 %v3626, %v3938
        %v4065 = vadd.f32 %v3627, %v3940
        %v4066 = vadd.f32 %v3628, %v3944
        %v4067 = vadd.f32 %v3629, %v3946
        %v4068 = vadd.f32 %v3630, %v3948
        %v4069 = vadd.f32 %v3631, %v3950
        %v4070 = vadd.f32 %v3632, %v3954
        %v4071 = vadd.f32 %v3633, %v3956
        %v4072 = vadd.f32 %v3634, %v3958
        %v4073 = vadd.f32 %v3635, %v3960
        %v4074 = vadd.f32 %v3636, %v3964
        %v4075 = vadd.f32 %v3637, %v3966
        %v4076 = vadd.f32 %v3638, %v3968
        %v4077 = vadd.f32 %v3639, %v3970
        %v4078 = vadd.f32 %v3640, %v3974
        %v4079 = vadd.f32 %v3641, %v3976
        %v4080 = vadd.f32 %v3642, %v3978
        %v4081 = vadd.f32 %v3643, %v3980
        %v4082 = vadd.f32 %v3644, %v3984
        %v4083 = vadd.f32 %v3645, %v3986
        %v4084 = vadd.f32 %v3646, %v3988
        %v4085 = vadd.f32 %v3647, %v3990
        %v4086 = vadd.f32 %v3648, %v3994
        %v4087 = vadd.f32 %v3649, %v3996
        %v4088 = vadd.f32 %v3650, %v3998
        %v4089 = vadd.f32 %v3651, %v4000
        %v4090 = vadd.f32 %v3652, %v4004
        %v4091 = vadd.f32 %v3653, %v4006
        %v4092 = vadd.f32 %v3654, %v4008
        %v4093 = vadd.f32 %v3655, %v4010
        %v4094 = vadd.f32 %v3656, %v4014
        %v4095 = vadd.f32 %v3657, %v4016
        %v4096 = vadd.f32 %v3658, %v4018
        %v4097 = vadd.f32 %v3659, %v4020
        %v4098 = vadd.f32 %v3660, %v4024
        %v4099 = vadd.f32 %v3661, %v4026
        %v4100 = vadd.f32 %v3662, %v4028
        %v4101 = vadd.f32 %v3663, %v4030
        %v4102 = vadd.f32 %v3664, %v4034
        %v4103 = vadd.f32 %v3665, %v4036
        %v4104 = vadd.f32 %v3666, %v4038
        %v4105 = vadd.f32 %v3667, %v4040
        %v4106 = vld [vmem:[%s3671] sm:$0xf]
        %v4107 = vld [vmem:[%s3671 + $0x4] sm:$0xf]
        %v4108 = vld [vmem:[%s3671 + $0x8] sm:$0x1]
        %v4109 = vld [vmem:[%s3671 + $0xc] sm:$0xf]
        %v4110 = vld [vmem:[%s3671 + $0x10] sm:$0xf]
        %v4111 = vld [vmem:[%s3671 + $0x14] sm:$0x1]
        %v4112 = vld [vmem:[%s3671 + $0x18] sm:$0xf]
        %v4113 = vld [vmem:[%s3671 + $0x1c] sm:$0xf]
        %v4114 = vld [vmem:[%s3671 + $0x20] sm:$0x1]
        %v4115 = vld [vmem:[%s3671 + $0x24] sm:$0xf]
        %v4116 = vld [vmem:[%s3671 + $0x28] sm:$0xf]
        %v4117 = vld [vmem:[%s3671 + $0x2c] sm:$0x1]
        %v4118 = vld [vmem:[%s3671 + $0x30] sm:$0xf]
        %v4119 = vld [vmem:[%s3671 + $0x34] sm:$0xf]
        %v4120 = vld [vmem:[%s3671 + $0x38] sm:$0x1]
        %v4121 = vld [vmem:[%s3671 + $0x3c] sm:$0xf]
        %v4122 = vld [vmem:[%s3671 + $0x40] sm:$0xf]
        %v4123 = vld [vmem:[%s3671 + $0x44] sm:$0x1]
        %v4124 = vld [vmem:[%s3671 + $0x48] sm:$0xf]
        %v4125 = vld [vmem:[%s3671 + $0x4c] sm:$0xf]
        %v4126 = vld [vmem:[%s3671 + $0x50] sm:$0x1]
        %v4127 = vld [vmem:[%s3671 + $0x54] sm:$0xf]
        %v4128 = vld [vmem:[%s3671 + $0x58] sm:$0xf]
        %v4129 = vld [vmem:[%s3671 + $0x5c] sm:$0x1]
        %v4130 = vld [vmem:[%s3671 + $0x60] sm:$0xf]
        %v4131 = vld [vmem:[%s3671 + $0x64] sm:$0xf]
        %v4132 = vld [vmem:[%s3671 + $0x68] sm:$0x1]
        %v4133 = vld [vmem:[%s3671 + $0x6c] sm:$0xf]
        %v4134 = vld [vmem:[%s3671 + $0x70] sm:$0xf]
        %v4135 = vld [vmem:[%s3671 + $0x74] sm:$0x1]
        %v4136 = vld [vmem:[%s3671 + $0x78] sm:$0xf]
        %v4137 = vld [vmem:[%s3671 + $0x7c] sm:$0xf]
        %v4138 = vld [vmem:[%s3671 + $0x80] sm:$0x1]
        %v4139 = vld [vmem:[%s3671 + $0x84] sm:$0xf]
        %v4140 = vld [vmem:[%s3671 + $0x88] sm:$0xf]
        %v4141 = vld [vmem:[%s3671 + $0x8c] sm:$0x1]
        %v4142 = vld [vmem:[%s3671 + $0x90] sm:$0xf]
        %v4143 = vld [vmem:[%s3671 + $0x94] sm:$0xf]
        %v4144 = vld [vmem:[%s3671 + $0x98] sm:$0x1]
        %v4145 = vld [vmem:[%s3671 + $0x9c] sm:$0xf]
        %v4146 = vld [vmem:[%s3671 + $0xa0] sm:$0xf]
        %v4147 = vld [vmem:[%s3671 + $0xa4] sm:$0x1]
        %v4148 = vld [vmem:[%s3671 + $0xa8] sm:$0xf]
        %v4149 = vld [vmem:[%s3671 + $0xac] sm:$0xf]
        %v4150 = vld [vmem:[%s3671 + $0xb0] sm:$0x1]
        %v4151 = vld [vmem:[%s3671 + $0xb4] sm:$0xf]
        %v4152 = vld [vmem:[%s3671 + $0xb8] sm:$0xf]
        %v4153 = vld [vmem:[%s3671 + $0xbc] sm:$0x1]
        %v4155 = vshrl.u32 %v4106, 16
        %v4157 = vrot.slane %v4155, 4
        %v4158 = vshll.u32 %v4106, 16
        %v4160 = vrot.slane %v4158, 5
        %v4161 = vor.u32 %v4157, %v4160
        %v4162 = vrot.slane %v4161, 4
        %v4164 = vshll.u32 %v4107, 16
        %v4166 = vrot.slane %v4164, 5
        %v4167 = vsel %vm240, %v4162, %v4166
        %v4168 = vshrl.u32 %v4107, 16
        %v4170 = vrot.slane %v4168, 4
        %v4171 = vor.u32 %v4170, %v4166
        %v4172 = vrot.slane %v4171, 4
        %v4174 = vshll.u32 %v4108, 16
        %v4176 = vrot.slane %v4174, 5
        %v4177 = vsel %vm240, %v4172, %v4176
        %v4179 = vshrl.u32 %v4109, 16
        %v4181 = vrot.slane %v4179, 4
        %v4182 = vshll.u32 %v4109, 16
        %v4184 = vrot.slane %v4182, 5
        %v4185 = vor.u32 %v4181, %v4184
        %v4186 = vrot.slane %v4185, 4
        %v4188 = vshll.u32 %v4110, 16
        %v4190 = vrot.slane %v4188, 5
        %v4191 = vsel %vm240, %v4186, %v4190
        %v4192 = vshrl.u32 %v4110, 16
        %v4194 = vrot.slane %v4192, 4
        %v4195 = vor.u32 %v4194, %v4190
        %v4196 = vrot.slane %v4195, 4
        %v4198 = vshll.u32 %v4111, 16
        %v4200 = vrot.slane %v4198, 5
        %v4201 = vsel %vm240, %v4196, %v4200
        %v4203 = vshrl.u32 %v4112, 16
        %v4205 = vrot.slane %v4203, 4
        %v4206 = vshll.u32 %v4112, 16
        %v4208 = vrot.slane %v4206, 5
        %v4209 = vor.u32 %v4205, %v4208
        %v4210 = vrot.slane %v4209, 4
        %v4212 = vshll.u32 %v4113, 16
        %v4214 = vrot.slane %v4212, 5
        %v4215 = vsel %vm240, %v4210, %v4214
        %v4216 = vshrl.u32 %v4113, 16
        %v4218 = vrot.slane %v4216, 4
        %v4219 = vor.u32 %v4218, %v4214
        %v4220 = vrot.slane %v4219, 4
        %v4222 = vshll.u32 %v4114, 16
        %v4224 = vrot.slane %v4222, 5
        %v4225 = vsel %vm240, %v4220, %v4224
        %v4227 = vshrl.u32 %v4115, 16
        %v4229 = vrot.slane %v4227, 4
        %v4230 = vshll.u32 %v4115, 16
        %v4232 = vrot.slane %v4230, 5
        %v4233 = vor.u32 %v4229, %v4232
        %v4234 = vrot.slane %v4233, 4
        %v4236 = vshll.u32 %v4116, 16
        %v4238 = vrot.slane %v4236, 5
        %v4239 = vsel %vm240, %v4234, %v4238
        %v4240 = vshrl.u32 %v4116, 16
        %v4242 = vrot.slane %v4240, 4
        %v4243 = vor.u32 %v4242, %v4238
        %v4244 = vrot.slane %v4243, 4
        %v4246 = vshll.u32 %v4117, 16
        %v4248 = vrot.slane %v4246, 5
        %v4249 = vsel %vm240, %v4244, %v4248
        %v4251 = vshrl.u32 %v4118, 16
        %v4253 = vrot.slane %v4251, 4
        %v4254 = vshll.u32 %v4118, 16
        %v4256 = vrot.slane %v4254, 5
        %v4257 = vor.u32 %v4253, %v4256
        %v4258 = vrot.slane %v4257, 4
        %v4260 = vshll.u32 %v4119, 16
        %v4262 = vrot.slane %v4260, 5
        %v4263 = vsel %vm240, %v4258, %v4262
        %v4264 = vshrl.u32 %v4119, 16
        %v4266 = vrot.slane %v4264, 4
        %v4267 = vor.u32 %v4266, %v4262
        %v4268 = vrot.slane %v4267, 4
        %v4270 = vshll.u32 %v4120, 16
        %v4272 = vrot.slane %v4270, 5
        %v4273 = vsel %vm240, %v4268, %v4272
        %v4275 = vshrl.u32 %v4121, 16
        %v4277 = vrot.slane %v4275, 4
        %v4278 = vshll.u32 %v4121, 16
        %v4280 = vrot.slane %v4278, 5
        %v4281 = vor.u32 %v4277, %v4280
        %v4282 = vrot.slane %v4281, 4
        %v4284 = vshll.u32 %v4122, 16
        %v4286 = vrot.slane %v4284, 5
        %v4287 = vsel %vm240, %v4282, %v4286
        %v4288 = vshrl.u32 %v4122, 16
        %v4290 = vrot.slane %v4288, 4
        %v4291 = vor.u32 %v4290, %v4286
        %v4292 = vrot.slane %v4291, 4
        %v4294 = vshll.u32 %v4123, 16
        %v4296 = vrot.slane %v4294, 5
        %v4297 = vsel %vm240, %v4292, %v4296
        %v4299 = vshrl.u32 %v4124, 16
        %v4301 = vrot.slane %v4299, 4
        %v4302 = vshll.u32 %v4124, 16
        %v4304 = vrot.slane %v4302, 5
        %v4305 = vor.u32 %v4301, %v4304
        %v4306 = vrot.slane %v4305, 4
        %v4308 = vshll.u32 %v4125, 16
        %v4310 = vrot.slane %v4308, 5
        %v4311 = vsel %vm240, %v4306, %v4310
        %v4312 = vshrl.u32 %v4125, 16
        %v4314 = vrot.slane %v4312, 4
        %v4315 = vor.u32 %v4314, %v4310
        %v4316 = vrot.slane %v4315, 4
        %v4318 = vshll.u32 %v4126, 16
        %v4320 = vrot.slane %v4318, 5
        %v4321 = vsel %vm240, %v4316, %v4320
        %v4323 = vshrl.u32 %v4127, 16
        %v4325 = vrot.slane %v4323, 4
        %v4326 = vshll.u32 %v4127, 16
        %v4328 = vrot.slane %v4326, 5
        %v4329 = vor.u32 %v4325, %v4328
        %v4330 = vrot.slane %v4329, 4
        %v4332 = vshll.u32 %v4128, 16
        %v4334 = vrot.slane %v4332, 5
        %v4335 = vsel %vm240, %v4330, %v4334
        %v4336 = vshrl.u32 %v4128, 16
        %v4338 = vrot.slane %v4336, 4
        %v4339 = vor.u32 %v4338, %v4334
        %v4340 = vrot.slane %v4339, 4
        %v4342 = vshll.u32 %v4129, 16
        %v4344 = vrot.slane %v4342, 5
        %v4345 = vsel %vm240, %v4340, %v4344
        %v4347 = vshrl.u32 %v4130, 16
        %v4349 = vrot.slane %v4347, 4
        %v4350 = vshll.u32 %v4130, 16
        %v4352 = vrot.slane %v4350, 5
        %v4353 = vor.u32 %v4349, %v4352
        %v4354 = vrot.slane %v4353, 4
        %v4356 = vshll.u32 %v4131, 16
        %v4358 = vrot.slane %v4356, 5
        %v4359 = vsel %vm240, %v4354, %v4358
        %v4360 = vshrl.u32 %v4131, 16
        %v4362 = vrot.slane %v4360, 4
        %v4363 = vor.u32 %v4362, %v4358
        %v4364 = vrot.slane %v4363, 4
        %v4366 = vshll.u32 %v4132, 16
        %v4368 = vrot.slane %v4366, 5
        %v4369 = vsel %vm240, %v4364, %v4368
        %v4371 = vshrl.u32 %v4133, 16
        %v4373 = vrot.slane %v4371, 4
        %v4374 = vshll.u32 %v4133, 16
        %v4376 = vrot.slane %v4374, 5
        %v4377 = vor.u32 %v4373, %v4376
        %v4378 = vrot.slane %v4377, 4
        %v4380 = vshll.u32 %v4134, 16
        %v4382 = vrot.slane %v4380, 5
        %v4383 = vsel %vm240, %v4378, %v4382
        %v4384 = vshrl.u32 %v4134, 16
        %v4386 = vrot.slane %v4384, 4
        %v4387 = vor.u32 %v4386, %v4382
        %v4388 = vrot.slane %v4387, 4
        %v4390 = vshll.u32 %v4135, 16
        %v4392 = vrot.slane %v4390, 5
        %v4393 = vsel %vm240, %v4388, %v4392
        %v4395 = vshrl.u32 %v4136, 16
        %v4397 = vrot.slane %v4395, 4
        %v4398 = vshll.u32 %v4136, 16
        %v4400 = vrot.slane %v4398, 5
        %v4401 = vor.u32 %v4397, %v4400
        %v4402 = vrot.slane %v4401, 4
        %v4404 = vshll.u32 %v4137, 16
        %v4406 = vrot.slane %v4404, 5
        %v4407 = vsel %vm240, %v4402, %v4406
        %v4408 = vshrl.u32 %v4137, 16
        %v4410 = vrot.slane %v4408, 4
        %v4411 = vor.u32 %v4410, %v4406
        %v4412 = vrot.slane %v4411, 4
        %v4414 = vshll.u32 %v4138, 16
        %v4416 = vrot.slane %v4414, 5
        %v4417 = vsel %vm240, %v4412, %v4416
        %v4419 = vshrl.u32 %v4139, 16
        %v4421 = vrot.slane %v4419, 4
        %v4422 = vshll.u32 %v4139, 16
        %v4424 = vrot.slane %v4422, 5
        %v4425 = vor.u32 %v4421, %v4424
        %v4426 = vrot.slane %v4425, 4
        %v4428 = vshll.u32 %v4140, 16
        %v4430 = vrot.slane %v4428, 5
        %v4431 = vsel %vm240, %v4426, %v4430
        %v4432 = vshrl.u32 %v4140, 16
        %v4434 = vrot.slane %v4432, 4
        %v4435 = vor.u32 %v4434, %v4430
        %v4436 = vrot.slane %v4435, 4
        %v4438 = vshll.u32 %v4141, 16
        %v4440 = vrot.slane %v4438, 5
        %v4441 = vsel %vm240, %v4436, %v4440
        %v4443 = vshrl.u32 %v4142, 16
        %v4445 = vrot.slane %v4443, 4
        %v4446 = vshll.u32 %v4142, 16
        %v4448 = vrot.slane %v4446, 5
        %v4449 = vor.u32 %v4445, %v4448
        %v4450 = vrot.slane %v4449, 4
        %v4452 = vshll.u32 %v4143, 16
        %v4454 = vrot.slane %v4452, 5
        %v4455 = vsel %vm240, %v4450, %v4454
        %v4456 = vshrl.u32 %v4143, 16
        %v4458 = vrot.slane %v4456, 4
        %v4459 = vor.u32 %v4458, %v4454
        %v4460 = vrot.slane %v4459, 4
        %v4462 = vshll.u32 %v4144, 16
        %v4464 = vrot.slane %v4462, 5
        %v4465 = vsel %vm240, %v4460, %v4464
        %v4467 = vshrl.u32 %v4145, 16
        %v4469 = vrot.slane %v4467, 4
        %v4470 = vshll.u32 %v4145, 16
        %v4472 = vrot.slane %v4470, 5
        %v4473 = vor.u32 %v4469, %v4472
        %v4474 = vrot.slane %v4473, 4
        %v4476 = vshll.u32 %v4146, 16
        %v4478 = vrot.slane %v4476, 5
        %v4479 = vsel %vm240, %v4474, %v4478
        %v4480 = vshrl.u32 %v4146, 16
        %v4482 = vrot.slane %v4480, 4
        %v4483 = vor.u32 %v4482, %v4478
        %v4484 = vrot.slane %v4483, 4
        %v4486 = vshll.u32 %v4147, 16
        %v4488 = vrot.slane %v4486, 5
        %v4489 = vsel %vm240, %v4484, %v4488
        %v4491 = vshrl.u32 %v4148, 16
        %v4493 = vrot.slane %v4491, 4
        %v4494 = vshll.u32 %v4148, 16
        %v4496 = vrot.slane %v4494, 5
        %v4497 = vor.u32 %v4493, %v4496
        %v4498 = vrot.slane %v4497, 4
        %v4500 = vshll.u32 %v4149, 16
        %v4502 = vrot.slane %v4500, 5
        %v4503 = vsel %vm240, %v4498, %v4502
        %v4504 = vshrl.u32 %v4149, 16
        %v4506 = vrot.slane %v4504, 4
        %v4507 = vor.u32 %v4506, %v4502
        %v4508 = vrot.slane %v4507, 4
        %v4510 = vshll.u32 %v4150, 16
        %v4512 = vrot.slane %v4510, 5
        %v4513 = vsel %vm240, %v4508, %v4512
        %v4515 = vshrl.u32 %v4151, 16
        %v4517 = vrot.slane %v4515, 4
        %v4518 = vshll.u32 %v4151, 16
        %v4520 = vrot.slane %v4518, 5
        %v4521 = vor.u32 %v4517, %v4520
        %v4522 = vrot.slane %v4521, 4
        %v4524 = vshll.u32 %v4152, 16
        %v4526 = vrot.slane %v4524, 5
        %v4527 = vsel %vm240, %v4522, %v4526
        %v4528 = vshrl.u32 %v4152, 16
        %v4530 = vrot.slane %v4528, 4
        %v4531 = vor.u32 %v4530, %v4526
        %v4532 = vrot.slane %v4531, 4
        %v4534 = vshll.u32 %v4153, 16
        %v4536 = vrot.slane %v4534, 5
        %v4537 = vsel %vm240, %v4532, %v4536
        %s4538 = scalar_lea.vmem %s1, 28
        %v4539 = vld [vmem:[%s4538] sm:$0xf]
        %v4540 = vunpack.c.l.b16 %v4167
        %v4541 = vunpack.c.l.b16 %v4177
        %v4542 = vunpack.c.l.b16 %v4191
        %v4543 = vunpack.c.l.b16 %v4201
        %v4544 = vunpack.c.l.b16 %v4215
        %v4545 = vunpack.c.l.b16 %v4225
        %v4546 = vunpack.c.l.b16 %v4239
        %v4547 = vunpack.c.l.b16 %v4249
        %v4548 = vunpack.c.l.b16 %v4263
        %v4549 = vunpack.c.l.b16 %v4273
        %v4550 = vunpack.c.l.b16 %v4287
        %v4551 = vunpack.c.l.b16 %v4297
        %v4552 = vunpack.c.l.b16 %v4311
        %v4553 = vunpack.c.l.b16 %v4321
        %v4554 = vunpack.c.l.b16 %v4335
        %v4555 = vunpack.c.l.b16 %v4345
        %v4556 = vunpack.c.l.b16 %v4359
        %v4557 = vunpack.c.l.b16 %v4369
        %v4558 = vunpack.c.l.b16 %v4383
        %v4559 = vunpack.c.l.b16 %v4393
        %v4560 = vunpack.c.l.b16 %v4407
        %v4561 = vunpack.c.l.b16 %v4417
        %v4562 = vunpack.c.l.b16 %v4431
        %v4563 = vunpack.c.l.b16 %v4441
        %v4564 = vunpack.c.l.b16 %v4455
        %v4565 = vunpack.c.l.b16 %v4465
        %v4566 = vunpack.c.l.b16 %v4479
        %v4567 = vunpack.c.l.b16 %v4489
        %v4568 = vunpack.c.l.b16 %v4503
        %v4569 = vunpack.c.l.b16 %v4513
        %v4570 = vunpack.c.l.b16 %v4527
        %v4571 = vunpack.c.l.b16 %v4537
        %v4572 = vpack.c.b16 %v4541, %v4540
        %v4573 = vpack.c.b16 %v4543, %v4542
        %v4574 = vpack.c.b16 %v4545, %v4544
        %v4575 = vpack.c.b16 %v4547, %v4546
        %v4576 = vpack.c.b16 %v4549, %v4548
        %v4577 = vpack.c.b16 %v4551, %v4550
        %v4578 = vpack.c.b16 %v4553, %v4552
        %v4579 = vpack.c.b16 %v4555, %v4554
        %v4580 = vpack.c.b16 %v4557, %v4556
        %v4581 = vpack.c.b16 %v4559, %v4558
        %v4582 = vpack.c.b16 %v4561, %v4560
        %v4583 = vpack.c.b16 %v4563, %v4562
        %v4584 = vpack.c.b16 %v4565, %v4564
        %v4585 = vpack.c.b16 %v4567, %v4566
        %v4586 = vpack.c.b16 %v4569, %v4568
        %v4587 = vpack.c.b16 %v4571, %v4570
        %v4590 = vunpack.c.l.s4 1983009808
        %v4591 = vunpack.c.0.s8 %v4590
        %v4592 = vlaneseq
        %v4593 = vshrl.u32 %v4592, 7
        %v4594 = vsub.s32 %v4591, %v4593
        %v4595 = vrot.slane %v4539, %v4594
        %v4596 = vcombine.high %v4595, %v4595
        %v4598 = vsel %vm684, %v4572, 0
        %v4601 = vsel %vm684, %v4573, 0
        %v4604 = vsel %vm684, %v4574, 0
        %v4607 = vsel %vm684, %v4575, 0
        %v4610 = vsel %vm684, %v4576, 0
        %v4613 = vsel %vm684, %v4577, 0
        %v4616 = vsel %vm684, %v4578, 0
        %v4619 = vsel %vm684, %v4579, 0
        %v4622 = vsel %vm684, %v4580, 0
        %v4625 = vsel %vm684, %v4581, 0
        %v4628 = vsel %vm684, %v4582, 0
        %v4631 = vsel %vm684, %v4583, 0
        %v4634 = vsel %vm684, %v4584, 0
        %v4637 = vsel %vm684, %v4585, 0
        %v4640 = vsel %vm684, %v4586, 0
        %v4643 = vsel %vm684, %v4587, 0
        %v4646 = vsel %vm733, %v4595, 0
        %v4649 = vsel %vm733, %v4596, 0
        %4651 = vmatprep.subr.bf16.mxu0 0
        %4652 = vmatpush1.bf16.msra.mxu0 0
        %4653 = vmatprep.subr.bf16.mxu0 0
        %4654 = vmatpush1.bf16.msra.mxu0 0
        %4655 = vmatprep.subr.bf16.mxu0 0
        %4656 = vmatpush1.bf16.msra.mxu0 0
        %4657 = vmatprep.subr.bf16.mxu0 0
        %4658 = vmatpush1.bf16.msra.mxu0 0
        %4659 = vmatprep.subr.bf16.mxu0 0
        %4660 = vmatpush1.bf16.msra.mxu0 0
        %4661 = vmatprep.subr.bf16.mxu0 0
        %4662 = vmatpush1.bf16.msra.mxu0 0
        %4663 = vmatprep.subr.bf16.mxu0 0
        %4664 = vmatpush1.bf16.msra.mxu0 0
        %4665 = vmatprep.subr.bf16.mxu0 %v4649
        %4666 = vmatpush1.bf16.msra.mxu0 %v4646
        %4667 = vmatprep.subr.bf16.mxu0 0
        %4668 = vmatpush2.bf16.msra.mxu0 0
        %4669 = vmatprep.subr.bf16.mxu0 0
        %4670 = vmatpush2.bf16.msra.mxu0 0
        %4671 = vmatprep.subr.bf16.mxu0 0
        %4672 = vmatpush2.bf16.msra.mxu0 0
        %4673 = vmatprep.subr.bf16.mxu0 0
        %4674 = vmatpush2.bf16.msra.mxu0 0
        %4675 = vmatprep.subr.bf16.mxu0 0
        %4676 = vmatpush2.bf16.msra.mxu0 0
        %4677 = vmatprep.subr.bf16.mxu0 0
        %4678 = vmatpush2.bf16.msra.mxu0 0
        %4679 = vmatprep.subr.bf16.mxu0 0
        %4680 = vmatpush2.bf16.msra.mxu0 0
        %4681 = vmatprep.subr.bf16.mxu0 0
        %4682 = vmatpush2.bf16.msra.mxu0 0
        %4683 = vmatprep.mubr.bf16.mxu0 0
        %4684 = vmatmul.mubr.bf16.gmra.mxu0 %v4598
        %v4685 = vpop.f32.mrf.mxu0
        %v4686 = vadd.f32 0.0, %v4685
        %v4687 = vpop.f32.mrf.mxu0
        %v4688 = vadd.f32 0.0, %v4687
        %v4689 = vpop.f32.mrf.mxu0
        %v4690 = vadd.f32 0.0, %v4689
        %v4691 = vpop.f32.mrf.mxu0
        %v4692 = vadd.f32 0.0, %v4691
        %4693 = vmatprep.mubr.bf16.mxu0 0
        %4694 = vmatmul.mubr.bf16.gmra.mxu0 %v4601
        %v4695 = vpop.f32.mrf.mxu0
        %v4696 = vadd.f32 0.0, %v4695
        %v4697 = vpop.f32.mrf.mxu0
        %v4698 = vadd.f32 0.0, %v4697
        %v4699 = vpop.f32.mrf.mxu0
        %v4700 = vadd.f32 0.0, %v4699
        %v4701 = vpop.f32.mrf.mxu0
        %v4702 = vadd.f32 0.0, %v4701
        %4703 = vmatprep.mubr.bf16.mxu0 0
        %4704 = vmatmul.mubr.bf16.gmra.mxu0 %v4604
        %v4705 = vpop.f32.mrf.mxu0
        %v4706 = vadd.f32 0.0, %v4705
        %v4707 = vpop.f32.mrf.mxu0
        %v4708 = vadd.f32 0.0, %v4707
        %v4709 = vpop.f32.mrf.mxu0
        %v4710 = vadd.f32 0.0, %v4709
        %v4711 = vpop.f32.mrf.mxu0
        %v4712 = vadd.f32 0.0, %v4711
        %4713 = vmatprep.mubr.bf16.mxu0 0
        %4714 = vmatmul.mubr.bf16.gmra.mxu0 %v4607
        %v4715 = vpop.f32.mrf.mxu0
        %v4716 = vadd.f32 0.0, %v4715
        %v4717 = vpop.f32.mrf.mxu0
        %v4718 = vadd.f32 0.0, %v4717
        %v4719 = vpop.f32.mrf.mxu0
        %v4720 = vadd.f32 0.0, %v4719
        %v4721 = vpop.f32.mrf.mxu0
        %v4722 = vadd.f32 0.0, %v4721
        %4723 = vmatprep.mubr.bf16.mxu0 0
        %4724 = vmatmul.mubr.bf16.gmra.mxu0 %v4610
        %v4725 = vpop.f32.mrf.mxu0
        %v4726 = vadd.f32 0.0, %v4725
        %v4727 = vpop.f32.mrf.mxu0
        %v4728 = vadd.f32 0.0, %v4727
        %v4729 = vpop.f32.mrf.mxu0
        %v4730 = vadd.f32 0.0, %v4729
        %v4731 = vpop.f32.mrf.mxu0
        %v4732 = vadd.f32 0.0, %v4731
        %4733 = vmatprep.mubr.bf16.mxu0 0
        %4734 = vmatmul.mubr.bf16.gmra.mxu0 %v4613
        %v4735 = vpop.f32.mrf.mxu0
        %v4736 = vadd.f32 0.0, %v4735
        %v4737 = vpop.f32.mrf.mxu0
        %v4738 = vadd.f32 0.0, %v4737
        %v4739 = vpop.f32.mrf.mxu0
        %v4740 = vadd.f32 0.0, %v4739
        %v4741 = vpop.f32.mrf.mxu0
        %v4742 = vadd.f32 0.0, %v4741
        %4743 = vmatprep.mubr.bf16.mxu0 0
        %4744 = vmatmul.mubr.bf16.gmra.mxu0 %v4616
        %v4745 = vpop.f32.mrf.mxu0
        %v4746 = vadd.f32 0.0, %v4745
        %v4747 = vpop.f32.mrf.mxu0
        %v4748 = vadd.f32 0.0, %v4747
        %v4749 = vpop.f32.mrf.mxu0
        %v4750 = vadd.f32 0.0, %v4749
        %v4751 = vpop.f32.mrf.mxu0
        %v4752 = vadd.f32 0.0, %v4751
        %4753 = vmatprep.mubr.bf16.mxu0 0
        %4754 = vmatmul.mubr.bf16.gmra.mxu0 %v4619
        %v4755 = vpop.f32.mrf.mxu0
        %v4756 = vadd.f32 0.0, %v4755
        %v4757 = vpop.f32.mrf.mxu0
        %v4758 = vadd.f32 0.0, %v4757
        %v4759 = vpop.f32.mrf.mxu0
        %v4760 = vadd.f32 0.0, %v4759
        %v4761 = vpop.f32.mrf.mxu0
        %v4762 = vadd.f32 0.0, %v4761
        %4763 = vmatprep.mubr.bf16.mxu0 0
        %4764 = vmatmul.mubr.bf16.gmra.mxu0 %v4622
        %v4765 = vpop.f32.mrf.mxu0
        %v4766 = vadd.f32 0.0, %v4765
        %v4767 = vpop.f32.mrf.mxu0
        %v4768 = vadd.f32 0.0, %v4767
        %v4769 = vpop.f32.mrf.mxu0
        %v4770 = vadd.f32 0.0, %v4769
        %v4771 = vpop.f32.mrf.mxu0
        %v4772 = vadd.f32 0.0, %v4771
        %4773 = vmatprep.mubr.bf16.mxu0 0
        %4774 = vmatmul.mubr.bf16.gmra.mxu0 %v4625
        %v4775 = vpop.f32.mrf.mxu0
        %v4776 = vadd.f32 0.0, %v4775
        %v4777 = vpop.f32.mrf.mxu0
        %v4778 = vadd.f32 0.0, %v4777
        %v4779 = vpop.f32.mrf.mxu0
        %v4780 = vadd.f32 0.0, %v4779
        %v4781 = vpop.f32.mrf.mxu0
        %v4782 = vadd.f32 0.0, %v4781
        %4783 = vmatprep.mubr.bf16.mxu0 0
        %4784 = vmatmul.mubr.bf16.gmra.mxu0 %v4628
        %v4785 = vpop.f32.mrf.mxu0
        %v4786 = vadd.f32 0.0, %v4785
        %v4787 = vpop.f32.mrf.mxu0
        %v4788 = vadd.f32 0.0, %v4787
        %v4789 = vpop.f32.mrf.mxu0
        %v4790 = vadd.f32 0.0, %v4789
        %v4791 = vpop.f32.mrf.mxu0
        %v4792 = vadd.f32 0.0, %v4791
        %4793 = vmatprep.mubr.bf16.mxu0 0
        %4794 = vmatmul.mubr.bf16.gmra.mxu0 %v4631
        %v4795 = vpop.f32.mrf.mxu0
        %v4796 = vadd.f32 0.0, %v4795
        %v4797 = vpop.f32.mrf.mxu0
        %v4798 = vadd.f32 0.0, %v4797
        %v4799 = vpop.f32.mrf.mxu0
        %v4800 = vadd.f32 0.0, %v4799
        %v4801 = vpop.f32.mrf.mxu0
        %v4802 = vadd.f32 0.0, %v4801
        %4803 = vmatprep.mubr.bf16.mxu0 0
        %4804 = vmatmul.mubr.bf16.gmra.mxu0 %v4634
        %v4805 = vpop.f32.mrf.mxu0
        %v4806 = vadd.f32 0.0, %v4805
        %v4807 = vpop.f32.mrf.mxu0
        %v4808 = vadd.f32 0.0, %v4807
        %v4809 = vpop.f32.mrf.mxu0
        %v4810 = vadd.f32 0.0, %v4809
        %v4811 = vpop.f32.mrf.mxu0
        %v4812 = vadd.f32 0.0, %v4811
        %4813 = vmatprep.mubr.bf16.mxu0 0
        %4814 = vmatmul.mubr.bf16.gmra.mxu0 %v4637
        %v4815 = vpop.f32.mrf.mxu0
        %v4816 = vadd.f32 0.0, %v4815
        %v4817 = vpop.f32.mrf.mxu0
        %v4818 = vadd.f32 0.0, %v4817
        %v4819 = vpop.f32.mrf.mxu0
        %v4820 = vadd.f32 0.0, %v4819
        %v4821 = vpop.f32.mrf.mxu0
        %v4822 = vadd.f32 0.0, %v4821
        %4823 = vmatprep.mubr.bf16.mxu0 0
        %4824 = vmatmul.mubr.bf16.gmra.mxu0 %v4640
        %v4825 = vpop.f32.mrf.mxu0
        %v4826 = vadd.f32 0.0, %v4825
        %v4827 = vpop.f32.mrf.mxu0
        %v4828 = vadd.f32 0.0, %v4827
        %v4829 = vpop.f32.mrf.mxu0
        %v4830 = vadd.f32 0.0, %v4829
        %v4831 = vpop.f32.mrf.mxu0
        %v4832 = vadd.f32 0.0, %v4831
        %4833 = vmatprep.mubr.bf16.mxu0 0
        %4834 = vmatmul.mubr.bf16.gmra.mxu0 %v4643
        %v4835 = vpop.f32.mrf.mxu0
        %v4836 = vadd.f32 0.0, %v4835
        %v4837 = vpop.f32.mrf.mxu0
        %v4838 = vadd.f32 0.0, %v4837
        %v4839 = vpop.f32.mrf.mxu0
        %v4840 = vadd.f32 0.0, %v4839
        %v4841 = vpop.f32.mrf.mxu0
        %v4842 = vadd.f32 0.0, %v4841
        %4843 = vdwg.mxu0
        %v4844 = vadd.f32 %v4042, %v4686
        %v4845 = vadd.f32 %v4043, %v4688
        %v4846 = vadd.f32 %v4044, %v4690
        %v4847 = vadd.f32 %v4045, %v4692
        %v4848 = vadd.f32 %v4046, %v4696
        %v4849 = vadd.f32 %v4047, %v4698
        %v4850 = vadd.f32 %v4048, %v4700
        %v4851 = vadd.f32 %v4049, %v4702
        %v4852 = vadd.f32 %v4050, %v4706
        %v4853 = vadd.f32 %v4051, %v4708
        %v4854 = vadd.f32 %v4052, %v4710
        %v4855 = vadd.f32 %v4053, %v4712
        %v4856 = vadd.f32 %v4054, %v4716
        %v4857 = vadd.f32 %v4055, %v4718
        %v4858 = vadd.f32 %v4056, %v4720
        %v4859 = vadd.f32 %v4057, %v4722
        %v4860 = vadd.f32 %v4058, %v4726
        %v4861 = vadd.f32 %v4059, %v4728
        %v4862 = vadd.f32 %v4060, %v4730
        %v4863 = vadd.f32 %v4061, %v4732
        %v4864 = vadd.f32 %v4062, %v4736
        %v4865 = vadd.f32 %v4063, %v4738
        %v4866 = vadd.f32 %v4064, %v4740
        %v4867 = vadd.f32 %v4065, %v4742
        %v4868 = vadd.f32 %v4066, %v4746
        %v4869 = vadd.f32 %v4067, %v4748
        %v4870 = vadd.f32 %v4068, %v4750
        %v4871 = vadd.f32 %v4069, %v4752
        %v4872 = vadd.f32 %v4070, %v4756
        %v4873 = vadd.f32 %v4071, %v4758
        %v4874 = vadd.f32 %v4072, %v4760
        %v4875 = vadd.f32 %v4073, %v4762
        %v4876 = vadd.f32 %v4074, %v4766
        %v4877 = vadd.f32 %v4075, %v4768
        %v4878 = vadd.f32 %v4076, %v4770
        %v4879 = vadd.f32 %v4077, %v4772
        %v4880 = vadd.f32 %v4078, %v4776
        %v4881 = vadd.f32 %v4079, %v4778
        %v4882 = vadd.f32 %v4080, %v4780
        %v4883 = vadd.f32 %v4081, %v4782
        %v4884 = vadd.f32 %v4082, %v4786
        %v4885 = vadd.f32 %v4083, %v4788
        %v4886 = vadd.f32 %v4084, %v4790
        %v4887 = vadd.f32 %v4085, %v4792
        %v4888 = vadd.f32 %v4086, %v4796
        %v4889 = vadd.f32 %v4087, %v4798
        %v4890 = vadd.f32 %v4088, %v4800
        %v4891 = vadd.f32 %v4089, %v4802
        %v4892 = vadd.f32 %v4090, %v4806
        %v4893 = vadd.f32 %v4091, %v4808
        %v4894 = vadd.f32 %v4092, %v4810
        %v4895 = vadd.f32 %v4093, %v4812
        %v4896 = vadd.f32 %v4094, %v4816
        %v4897 = vadd.f32 %v4095, %v4818
        %v4898 = vadd.f32 %v4096, %v4820
        %v4899 = vadd.f32 %v4097, %v4822
        %v4900 = vadd.f32 %v4098, %v4826
        %v4901 = vadd.f32 %v4099, %v4828
        %v4902 = vadd.f32 %v4100, %v4830
        %v4903 = vadd.f32 %v4101, %v4832
        %v4904 = vadd.f32 %v4102, %v4836
        %v4905 = vadd.f32 %v4103, %v4838
        %v4906 = vadd.f32 %v4104, %v4840
        %v4907 = vadd.f32 %v4105, %v4842
        %v4908 = vld [vmem:[%s3671] sm:$0xe]
        %v4909 = vld [vmem:[%s3671 + $0x4] sm:$0xf]
        %v4910 = vld [vmem:[%s3671 + $0x8] sm:$0x1]
        %v4911 = vld [vmem:[%s3671 + $0xc] sm:$0xe]
        %v4912 = vld [vmem:[%s3671 + $0x10] sm:$0xf]
        %v4913 = vld [vmem:[%s3671 + $0x14] sm:$0x1]
        %v4914 = vld [vmem:[%s3671 + $0x18] sm:$0xe]
        %v4915 = vld [vmem:[%s3671 + $0x1c] sm:$0xf]
        %v4916 = vld [vmem:[%s3671 + $0x20] sm:$0x1]
        %v4917 = vld [vmem:[%s3671 + $0x24] sm:$0xe]
        %v4918 = vld [vmem:[%s3671 + $0x28] sm:$0xf]
        %v4919 = vld [vmem:[%s3671 + $0x2c] sm:$0x1]
        %v4920 = vld [vmem:[%s3671 + $0x30] sm:$0xe]
        %v4921 = vld [vmem:[%s3671 + $0x34] sm:$0xf]
        %v4922 = vld [vmem:[%s3671 + $0x38] sm:$0x1]
        %v4923 = vld [vmem:[%s3671 + $0x3c] sm:$0xe]
        %v4924 = vld [vmem:[%s3671 + $0x40] sm:$0xf]
        %v4925 = vld [vmem:[%s3671 + $0x44] sm:$0x1]
        %v4926 = vld [vmem:[%s3671 + $0x48] sm:$0xe]
        %v4927 = vld [vmem:[%s3671 + $0x4c] sm:$0xf]
        %v4928 = vld [vmem:[%s3671 + $0x50] sm:$0x1]
        %v4929 = vld [vmem:[%s3671 + $0x54] sm:$0xe]
        %v4930 = vld [vmem:[%s3671 + $0x58] sm:$0xf]
        %v4931 = vld [vmem:[%s3671 + $0x5c] sm:$0x1]
        %v4932 = vld [vmem:[%s3671 + $0x60] sm:$0xe]
        %v4933 = vld [vmem:[%s3671 + $0x64] sm:$0xf]
        %v4934 = vld [vmem:[%s3671 + $0x68] sm:$0x1]
        %v4935 = vld [vmem:[%s3671 + $0x6c] sm:$0xe]
        %v4936 = vld [vmem:[%s3671 + $0x70] sm:$0xf]
        %v4937 = vld [vmem:[%s3671 + $0x74] sm:$0x1]
        %v4938 = vld [vmem:[%s3671 + $0x78] sm:$0xe]
        %v4939 = vld [vmem:[%s3671 + $0x7c] sm:$0xf]
        %v4940 = vld [vmem:[%s3671 + $0x80] sm:$0x1]
        %v4941 = vld [vmem:[%s3671 + $0x84] sm:$0xe]
        %v4942 = vld [vmem:[%s3671 + $0x88] sm:$0xf]
        %v4943 = vld [vmem:[%s3671 + $0x8c] sm:$0x1]
        %v4944 = vld [vmem:[%s3671 + $0x90] sm:$0xe]
        %v4945 = vld [vmem:[%s3671 + $0x94] sm:$0xf]
        %v4946 = vld [vmem:[%s3671 + $0x98] sm:$0x1]
        %v4947 = vld [vmem:[%s3671 + $0x9c] sm:$0xe]
        %v4948 = vld [vmem:[%s3671 + $0xa0] sm:$0xf]
        %v4949 = vld [vmem:[%s3671 + $0xa4] sm:$0x1]
        %v4950 = vld [vmem:[%s3671 + $0xa8] sm:$0xe]
        %v4951 = vld [vmem:[%s3671 + $0xac] sm:$0xf]
        %v4952 = vld [vmem:[%s3671 + $0xb0] sm:$0x1]
        %v4953 = vld [vmem:[%s3671 + $0xb4] sm:$0xe]
        %v4954 = vld [vmem:[%s3671 + $0xb8] sm:$0xf]
        %v4955 = vld [vmem:[%s3671 + $0xbc] sm:$0x1]
        %v5004 = vrot.slane %v4908, 5
        %v5005 = vrot.slane %v5004, 4
        %v5006 = vrot.slane %v4909, 5
        %v5007 = vsel %vm1367, %v5005, %v5006
        %v5008 = vrot.slane %v5006, 4
        %v5009 = vrot.slane %v4910, 5
        %v5010 = vsel %vm1367, %v5008, %v5009
        %v5011 = vrot.slane %v4911, 5
        %v5012 = vrot.slane %v5011, 4
        %v5013 = vrot.slane %v4912, 5
        %v5014 = vsel %vm1367, %v5012, %v5013
        %v5015 = vrot.slane %v5013, 4
        %v5016 = vrot.slane %v4913, 5
        %v5017 = vsel %vm1367, %v5015, %v5016
        %v5018 = vrot.slane %v4914, 5
        %v5019 = vrot.slane %v5018, 4
        %v5020 = vrot.slane %v4915, 5
        %v5021 = vsel %vm1367, %v5019, %v5020
        %v5022 = vrot.slane %v5020, 4
        %v5023 = vrot.slane %v4916, 5
        %v5024 = vsel %vm1367, %v5022, %v5023
        %v5025 = vrot.slane %v4917, 5
        %v5026 = vrot.slane %v5025, 4
        %v5027 = vrot.slane %v4918, 5
        %v5028 = vsel %vm1367, %v5026, %v5027
        %v5029 = vrot.slane %v5027, 4
        %v5030 = vrot.slane %v4919, 5
        %v5031 = vsel %vm1367, %v5029, %v5030
        %v5032 = vrot.slane %v4920, 5
        %v5033 = vrot.slane %v5032, 4
        %v5034 = vrot.slane %v4921, 5
        %v5035 = vsel %vm1367, %v5033, %v5034
        %v5036 = vrot.slane %v5034, 4
        %v5037 = vrot.slane %v4922, 5
        %v5038 = vsel %vm1367, %v5036, %v5037
        %v5039 = vrot.slane %v4923, 5
        %v5040 = vrot.slane %v5039, 4
        %v5041 = vrot.slane %v4924, 5
        %v5042 = vsel %vm1367, %v5040, %v5041
        %v5043 = vrot.slane %v5041, 4
        %v5044 = vrot.slane %v4925, 5
        %v5045 = vsel %vm1367, %v5043, %v5044
        %v5046 = vrot.slane %v4926, 5
        %v5047 = vrot.slane %v5046, 4
        %v5048 = vrot.slane %v4927, 5
        %v5049 = vsel %vm1367, %v5047, %v5048
        %v5050 = vrot.slane %v5048, 4
        %v5051 = vrot.slane %v4928, 5
        %v5052 = vsel %vm1367, %v5050, %v5051
        %v5053 = vrot.slane %v4929, 5
        %v5054 = vrot.slane %v5053, 4
        %v5055 = vrot.slane %v4930, 5
        %v5056 = vsel %vm1367, %v5054, %v5055
        %v5057 = vrot.slane %v5055, 4
        %v5058 = vrot.slane %v4931, 5
        %v5059 = vsel %vm1367, %v5057, %v5058
        %v5060 = vrot.slane %v4932, 5
        %v5061 = vrot.slane %v5060, 4
        %v5062 = vrot.slane %v4933, 5
        %v5063 = vsel %vm1367, %v5061, %v5062
        %v5064 = vrot.slane %v5062, 4
        %v5065 = vrot.slane %v4934, 5
        %v5066 = vsel %vm1367, %v5064, %v5065
        %v5067 = vrot.slane %v4935, 5
        %v5068 = vrot.slane %v5067, 4
        %v5069 = vrot.slane %v4936, 5
        %v5070 = vsel %vm1367, %v5068, %v5069
        %v5071 = vrot.slane %v5069, 4
        %v5072 = vrot.slane %v4937, 5
        %v5073 = vsel %vm1367, %v5071, %v5072
        %v5074 = vrot.slane %v4938, 5
        %v5075 = vrot.slane %v5074, 4
        %v5076 = vrot.slane %v4939, 5
        %v5077 = vsel %vm1367, %v5075, %v5076
        %v5078 = vrot.slane %v5076, 4
        %v5079 = vrot.slane %v4940, 5
        %v5080 = vsel %vm1367, %v5078, %v5079
        %v5081 = vrot.slane %v4941, 5
        %v5082 = vrot.slane %v5081, 4
        %v5083 = vrot.slane %v4942, 5
        %v5084 = vsel %vm1367, %v5082, %v5083
        %v5085 = vrot.slane %v5083, 4
        %v5086 = vrot.slane %v4943, 5
        %v5087 = vsel %vm1367, %v5085, %v5086
        %v5088 = vrot.slane %v4944, 5
        %v5089 = vrot.slane %v5088, 4
        %v5090 = vrot.slane %v4945, 5
        %v5091 = vsel %vm1367, %v5089, %v5090
        %v5092 = vrot.slane %v5090, 4
        %v5093 = vrot.slane %v4946, 5
        %v5094 = vsel %vm1367, %v5092, %v5093
        %v5095 = vrot.slane %v4947, 5
        %v5096 = vrot.slane %v5095, 4
        %v5097 = vrot.slane %v4948, 5
        %v5098 = vsel %vm1367, %v5096, %v5097
        %v5099 = vrot.slane %v5097, 4
        %v5100 = vrot.slane %v4949, 5
        %v5101 = vsel %vm1367, %v5099, %v5100
        %v5102 = vrot.slane %v4950, 5
        %v5103 = vrot.slane %v5102, 4
        %v5104 = vrot.slane %v4951, 5
        %v5105 = vsel %vm1367, %v5103, %v5104
        %v5106 = vrot.slane %v5104, 4
        %v5107 = vrot.slane %v4952, 5
        %v5108 = vsel %vm1367, %v5106, %v5107
        %v5109 = vrot.slane %v4953, 5
        %v5110 = vrot.slane %v5109, 4
        %v5111 = vrot.slane %v4954, 5
        %v5112 = vsel %vm1367, %v5110, %v5111
        %v5113 = vrot.slane %v5111, 4
        %v5114 = vrot.slane %v4955, 5
        %v5115 = vsel %vm1367, %v5113, %v5114
        %s5116 = scalar_lea.vmem %s1, 32
        %v5117 = vld [vmem:[%s5116] sm:$0xf]
        %v5118 = vunpack.c.l.b16 %v5007
        %v5119 = vunpack.c.l.b16 %v5010
        %v5120 = vunpack.c.l.b16 %v5014
        %v5121 = vunpack.c.l.b16 %v5017
        %v5122 = vunpack.c.l.b16 %v5021
        %v5123 = vunpack.c.l.b16 %v5024
        %v5124 = vunpack.c.l.b16 %v5028
        %v5125 = vunpack.c.l.b16 %v5031
        %v5126 = vunpack.c.l.b16 %v5035
        %v5127 = vunpack.c.l.b16 %v5038
        %v5128 = vunpack.c.l.b16 %v5042
        %v5129 = vunpack.c.l.b16 %v5045
        %v5130 = vunpack.c.l.b16 %v5049
        %v5131 = vunpack.c.l.b16 %v5052
        %v5132 = vunpack.c.l.b16 %v5056
        %v5133 = vunpack.c.l.b16 %v5059
        %v5134 = vunpack.c.l.b16 %v5063
        %v5135 = vunpack.c.l.b16 %v5066
        %v5136 = vunpack.c.l.b16 %v5070
        %v5137 = vunpack.c.l.b16 %v5073
        %v5138 = vunpack.c.l.b16 %v5077
        %v5139 = vunpack.c.l.b16 %v5080
        %v5140 = vunpack.c.l.b16 %v5084
        %v5141 = vunpack.c.l.b16 %v5087
        %v5142 = vunpack.c.l.b16 %v5091
        %v5143 = vunpack.c.l.b16 %v5094
        %v5144 = vunpack.c.l.b16 %v5098
        %v5145 = vunpack.c.l.b16 %v5101
        %v5146 = vunpack.c.l.b16 %v5105
        %v5147 = vunpack.c.l.b16 %v5108
        %v5148 = vunpack.c.l.b16 %v5112
        %v5149 = vunpack.c.l.b16 %v5115
        %v5150 = vpack.c.b16 %v5119, %v5118
        %v5151 = vpack.c.b16 %v5121, %v5120
        %v5152 = vpack.c.b16 %v5123, %v5122
        %v5153 = vpack.c.b16 %v5125, %v5124
        %v5154 = vpack.c.b16 %v5127, %v5126
        %v5155 = vpack.c.b16 %v5129, %v5128
        %v5156 = vpack.c.b16 %v5131, %v5130
        %v5157 = vpack.c.b16 %v5133, %v5132
        %v5158 = vpack.c.b16 %v5135, %v5134
        %v5159 = vpack.c.b16 %v5137, %v5136
        %v5160 = vpack.c.b16 %v5139, %v5138
        %v5161 = vpack.c.b16 %v5141, %v5140
        %v5162 = vpack.c.b16 %v5143, %v5142
        %v5163 = vpack.c.b16 %v5145, %v5144
        %v5164 = vpack.c.b16 %v5147, %v5146
        %v5165 = vpack.c.b16 %v5149, %v5148
        %v5168 = vunpack.c.l.s4 1983009808
        %v5169 = vunpack.c.0.s8 %v5168
        %v5170 = vlaneseq
        %v5171 = vshrl.u32 %v5170, 7
        %v5172 = vsub.s32 %v5169, %v5171
        %v5173 = vrot.slane %v5117, %v5172
        %v5174 = vcombine.high %v5173, %v5173
        %v5176 = vsel %vm684, %v5150, 0
        %v5179 = vsel %vm684, %v5151, 0
        %v5182 = vsel %vm684, %v5152, 0
        %v5185 = vsel %vm684, %v5153, 0
        %v5188 = vsel %vm684, %v5154, 0
        %v5191 = vsel %vm684, %v5155, 0
        %v5194 = vsel %vm684, %v5156, 0
        %v5197 = vsel %vm684, %v5157, 0
        %v5200 = vsel %vm684, %v5158, 0
        %v5203 = vsel %vm684, %v5159, 0
        %v5206 = vsel %vm684, %v5160, 0
        %v5209 = vsel %vm684, %v5161, 0
        %v5212 = vsel %vm684, %v5162, 0
        %v5215 = vsel %vm684, %v5163, 0
        %v5218 = vsel %vm684, %v5164, 0
        %v5221 = vsel %vm684, %v5165, 0
        %v5224 = vsel %vm733, %v5173, 0
        %v5227 = vsel %vm733, %v5174, 0
        %5229 = vmatprep.subr.bf16.mxu0 0
        %5230 = vmatpush1.bf16.msra.mxu0 0
        %5231 = vmatprep.subr.bf16.mxu0 0
        %5232 = vmatpush1.bf16.msra.mxu0 0
        %5233 = vmatprep.subr.bf16.mxu0 0
        %5234 = vmatpush1.bf16.msra.mxu0 0
        %5235 = vmatprep.subr.bf16.mxu0 0
        %5236 = vmatpush1.bf16.msra.mxu0 0
        %5237 = vmatprep.subr.bf16.mxu0 0
        %5238 = vmatpush1.bf16.msra.mxu0 0
        %5239 = vmatprep.subr.bf16.mxu0 0
        %5240 = vmatpush1.bf16.msra.mxu0 0
        %5241 = vmatprep.subr.bf16.mxu0 0
        %5242 = vmatpush1.bf16.msra.mxu0 0
        %5243 = vmatprep.subr.bf16.mxu0 %v5227
        %5244 = vmatpush1.bf16.msra.mxu0 %v5224
        %5245 = vmatprep.subr.bf16.mxu0 0
        %5246 = vmatpush2.bf16.msra.mxu0 0
        %5247 = vmatprep.subr.bf16.mxu0 0
        %5248 = vmatpush2.bf16.msra.mxu0 0
        %5249 = vmatprep.subr.bf16.mxu0 0
        %5250 = vmatpush2.bf16.msra.mxu0 0
        %5251 = vmatprep.subr.bf16.mxu0 0
        %5252 = vmatpush2.bf16.msra.mxu0 0
        %5253 = vmatprep.subr.bf16.mxu0 0
        %5254 = vmatpush2.bf16.msra.mxu0 0
        %5255 = vmatprep.subr.bf16.mxu0 0
        %5256 = vmatpush2.bf16.msra.mxu0 0
        %5257 = vmatprep.subr.bf16.mxu0 0
        %5258 = vmatpush2.bf16.msra.mxu0 0
        %5259 = vmatprep.subr.bf16.mxu0 0
        %5260 = vmatpush2.bf16.msra.mxu0 0
        %5261 = vmatprep.mubr.bf16.mxu0 0
        %5262 = vmatmul.mubr.bf16.gmra.mxu0 %v5176
        %v5263 = vpop.f32.mrf.mxu0
        %v5264 = vadd.f32 0.0, %v5263
        %v5265 = vpop.f32.mrf.mxu0
        %v5266 = vadd.f32 0.0, %v5265
        %v5267 = vpop.f32.mrf.mxu0
        %v5268 = vadd.f32 0.0, %v5267
        %v5269 = vpop.f32.mrf.mxu0
        %v5270 = vadd.f32 0.0, %v5269
        %5271 = vmatprep.mubr.bf16.mxu0 0
        %5272 = vmatmul.mubr.bf16.gmra.mxu0 %v5179
        %v5273 = vpop.f32.mrf.mxu0
        %v5274 = vadd.f32 0.0, %v5273
        %v5275 = vpop.f32.mrf.mxu0
        %v5276 = vadd.f32 0.0, %v5275
        %v5277 = vpop.f32.mrf.mxu0
        %v5278 = vadd.f32 0.0, %v5277
        %v5279 = vpop.f32.mrf.mxu0
        %v5280 = vadd.f32 0.0, %v5279
        %5281 = vmatprep.mubr.bf16.mxu0 0
        %5282 = vmatmul.mubr.bf16.gmra.mxu0 %v5182
        %v5283 = vpop.f32.mrf.mxu0
        %v5284 = vadd.f32 0.0, %v5283
        %v5285 = vpop.f32.mrf.mxu0
        %v5286 = vadd.f32 0.0, %v5285
        %v5287 = vpop.f32.mrf.mxu0
        %v5288 = vadd.f32 0.0, %v5287
        %v5289 = vpop.f32.mrf.mxu0
        %v5290 = vadd.f32 0.0, %v5289
        %5291 = vmatprep.mubr.bf16.mxu0 0
        %5292 = vmatmul.mubr.bf16.gmra.mxu0 %v5185
        %v5293 = vpop.f32.mrf.mxu0
        %v5294 = vadd.f32 0.0, %v5293
        %v5295 = vpop.f32.mrf.mxu0
        %v5296 = vadd.f32 0.0, %v5295
        %v5297 = vpop.f32.mrf.mxu0
        %v5298 = vadd.f32 0.0, %v5297
        %v5299 = vpop.f32.mrf.mxu0
        %v5300 = vadd.f32 0.0, %v5299
        %5301 = vmatprep.mubr.bf16.mxu0 0
        %5302 = vmatmul.mubr.bf16.gmra.mxu0 %v5188
        %v5303 = vpop.f32.mrf.mxu0
        %v5304 = vadd.f32 0.0, %v5303
        %v5305 = vpop.f32.mrf.mxu0
        %v5306 = vadd.f32 0.0, %v5305
        %v5307 = vpop.f32.mrf.mxu0
        %v5308 = vadd.f32 0.0, %v5307
        %v5309 = vpop.f32.mrf.mxu0
        %v5310 = vadd.f32 0.0, %v5309
        %5311 = vmatprep.mubr.bf16.mxu0 0
        %5312 = vmatmul.mubr.bf16.gmra.mxu0 %v5191
        %v5313 = vpop.f32.mrf.mxu0
        %v5314 = vadd.f32 0.0, %v5313
        %v5315 = vpop.f32.mrf.mxu0
        %v5316 = vadd.f32 0.0, %v5315
        %v5317 = vpop.f32.mrf.mxu0
        %v5318 = vadd.f32 0.0, %v5317
        %v5319 = vpop.f32.mrf.mxu0
        %v5320 = vadd.f32 0.0, %v5319
        %5321 = vmatprep.mubr.bf16.mxu0 0
        %5322 = vmatmul.mubr.bf16.gmra.mxu0 %v5194
        %v5323 = vpop.f32.mrf.mxu0
        %v5324 = vadd.f32 0.0, %v5323
        %v5325 = vpop.f32.mrf.mxu0
        %v5326 = vadd.f32 0.0, %v5325
        %v5327 = vpop.f32.mrf.mxu0
        %v5328 = vadd.f32 0.0, %v5327
        %v5329 = vpop.f32.mrf.mxu0
        %v5330 = vadd.f32 0.0, %v5329
        %5331 = vmatprep.mubr.bf16.mxu0 0
        %5332 = vmatmul.mubr.bf16.gmra.mxu0 %v5197
        %v5333 = vpop.f32.mrf.mxu0
        %v5334 = vadd.f32 0.0, %v5333
        %v5335 = vpop.f32.mrf.mxu0
        %v5336 = vadd.f32 0.0, %v5335
        %v5337 = vpop.f32.mrf.mxu0
        %v5338 = vadd.f32 0.0, %v5337
        %v5339 = vpop.f32.mrf.mxu0
        %v5340 = vadd.f32 0.0, %v5339
        %5341 = vmatprep.mubr.bf16.mxu0 0
        %5342 = vmatmul.mubr.bf16.gmra.mxu0 %v5200
        %v5343 = vpop.f32.mrf.mxu0
        %v5344 = vadd.f32 0.0, %v5343
        %v5345 = vpop.f32.mrf.mxu0
        %v5346 = vadd.f32 0.0, %v5345
        %v5347 = vpop.f32.mrf.mxu0
        %v5348 = vadd.f32 0.0, %v5347
        %v5349 = vpop.f32.mrf.mxu0
        %v5350 = vadd.f32 0.0, %v5349
        %5351 = vmatprep.mubr.bf16.mxu0 0
        %5352 = vmatmul.mubr.bf16.gmra.mxu0 %v5203
        %v5353 = vpop.f32.mrf.mxu0
        %v5354 = vadd.f32 0.0, %v5353
        %v5355 = vpop.f32.mrf.mxu0
        %v5356 = vadd.f32 0.0, %v5355
        %v5357 = vpop.f32.mrf.mxu0
        %v5358 = vadd.f32 0.0, %v5357
        %v5359 = vpop.f32.mrf.mxu0
        %v5360 = vadd.f32 0.0, %v5359
        %5361 = vmatprep.mubr.bf16.mxu0 0
        %5362 = vmatmul.mubr.bf16.gmra.mxu0 %v5206
        %v5363 = vpop.f32.mrf.mxu0
        %v5364 = vadd.f32 0.0, %v5363
        %v5365 = vpop.f32.mrf.mxu0
        %v5366 = vadd.f32 0.0, %v5365
        %v5367 = vpop.f32.mrf.mxu0
        %v5368 = vadd.f32 0.0, %v5367
        %v5369 = vpop.f32.mrf.mxu0
        %v5370 = vadd.f32 0.0, %v5369
        %5371 = vmatprep.mubr.bf16.mxu0 0
        %5372 = vmatmul.mubr.bf16.gmra.mxu0 %v5209
        %v5373 = vpop.f32.mrf.mxu0
        %v5374 = vadd.f32 0.0, %v5373
        %v5375 = vpop.f32.mrf.mxu0
        %v5376 = vadd.f32 0.0, %v5375
        %v5377 = vpop.f32.mrf.mxu0
        %v5378 = vadd.f32 0.0, %v5377
        %v5379 = vpop.f32.mrf.mxu0
        %v5380 = vadd.f32 0.0, %v5379
        %5381 = vmatprep.mubr.bf16.mxu0 0
        %5382 = vmatmul.mubr.bf16.gmra.mxu0 %v5212
        %v5383 = vpop.f32.mrf.mxu0
        %v5384 = vadd.f32 0.0, %v5383
        %v5385 = vpop.f32.mrf.mxu0
        %v5386 = vadd.f32 0.0, %v5385
        %v5387 = vpop.f32.mrf.mxu0
        %v5388 = vadd.f32 0.0, %v5387
        %v5389 = vpop.f32.mrf.mxu0
        %v5390 = vadd.f32 0.0, %v5389
        %5391 = vmatprep.mubr.bf16.mxu0 0
        %5392 = vmatmul.mubr.bf16.gmra.mxu0 %v5215
        %v5393 = vpop.f32.mrf.mxu0
        %v5394 = vadd.f32 0.0, %v5393
        %v5395 = vpop.f32.mrf.mxu0
        %v5396 = vadd.f32 0.0, %v5395
        %v5397 = vpop.f32.mrf.mxu0
        %v5398 = vadd.f32 0.0, %v5397
        %v5399 = vpop.f32.mrf.mxu0
        %v5400 = vadd.f32 0.0, %v5399
        %5401 = vmatprep.mubr.bf16.mxu0 0
        %5402 = vmatmul.mubr.bf16.gmra.mxu0 %v5218
        %v5403 = vpop.f32.mrf.mxu0
        %v5404 = vadd.f32 0.0, %v5403
        %v5405 = vpop.f32.mrf.mxu0
        %v5406 = vadd.f32 0.0, %v5405
        %v5407 = vpop.f32.mrf.mxu0
        %v5408 = vadd.f32 0.0, %v5407
        %v5409 = vpop.f32.mrf.mxu0
        %v5410 = vadd.f32 0.0, %v5409
        %5411 = vmatprep.mubr.bf16.mxu0 0
        %5412 = vmatmul.mubr.bf16.gmra.mxu0 %v5221
        %v5413 = vpop.f32.mrf.mxu0
        %v5414 = vadd.f32 0.0, %v5413
        %v5415 = vpop.f32.mrf.mxu0
        %v5416 = vadd.f32 0.0, %v5415
        %v5417 = vpop.f32.mrf.mxu0
        %v5418 = vadd.f32 0.0, %v5417
        %v5419 = vpop.f32.mrf.mxu0
        %v5420 = vadd.f32 0.0, %v5419
        %5421 = vdwg.mxu0
        %v5422 = vadd.f32 %v4844, %v5264
        %v5423 = vadd.f32 %v4845, %v5266
        %v5424 = vadd.f32 %v4846, %v5268
        %v5425 = vadd.f32 %v4847, %v5270
        %v5426 = vadd.f32 %v4848, %v5274
        %v5427 = vadd.f32 %v4849, %v5276
        %v5428 = vadd.f32 %v4850, %v5278
        %v5429 = vadd.f32 %v4851, %v5280
        %v5430 = vadd.f32 %v4852, %v5284
        %v5431 = vadd.f32 %v4853, %v5286
        %v5432 = vadd.f32 %v4854, %v5288
        %v5433 = vadd.f32 %v4855, %v5290
        %v5434 = vadd.f32 %v4856, %v5294
        %v5435 = vadd.f32 %v4857, %v5296
        %v5436 = vadd.f32 %v4858, %v5298
        %v5437 = vadd.f32 %v4859, %v5300
        %v5438 = vadd.f32 %v4860, %v5304
        %v5439 = vadd.f32 %v4861, %v5306
        %v5440 = vadd.f32 %v4862, %v5308
        %v5441 = vadd.f32 %v4863, %v5310
        %v5442 = vadd.f32 %v4864, %v5314
        %v5443 = vadd.f32 %v4865, %v5316
        %v5444 = vadd.f32 %v4866, %v5318
        %v5445 = vadd.f32 %v4867, %v5320
        %v5446 = vadd.f32 %v4868, %v5324
        %v5447 = vadd.f32 %v4869, %v5326
        %v5448 = vadd.f32 %v4870, %v5328
        %v5449 = vadd.f32 %v4871, %v5330
        %v5450 = vadd.f32 %v4872, %v5334
        %v5451 = vadd.f32 %v4873, %v5336
        %v5452 = vadd.f32 %v4874, %v5338
        %v5453 = vadd.f32 %v4875, %v5340
        %v5454 = vadd.f32 %v4876, %v5344
        %v5455 = vadd.f32 %v4877, %v5346
        %v5456 = vadd.f32 %v4878, %v5348
        %v5457 = vadd.f32 %v4879, %v5350
        %v5458 = vadd.f32 %v4880, %v5354
        %v5459 = vadd.f32 %v4881, %v5356
        %v5460 = vadd.f32 %v4882, %v5358
        %v5461 = vadd.f32 %v4883, %v5360
        %v5462 = vadd.f32 %v4884, %v5364
        %v5463 = vadd.f32 %v4885, %v5366
        %v5464 = vadd.f32 %v4886, %v5368
        %v5465 = vadd.f32 %v4887, %v5370
        %v5466 = vadd.f32 %v4888, %v5374
        %v5467 = vadd.f32 %v4889, %v5376
        %v5468 = vadd.f32 %v4890, %v5378
        %v5469 = vadd.f32 %v4891, %v5380
        %v5470 = vadd.f32 %v4892, %v5384
        %v5471 = vadd.f32 %v4893, %v5386
        %v5472 = vadd.f32 %v4894, %v5388
        %v5473 = vadd.f32 %v4895, %v5390
        %v5474 = vadd.f32 %v4896, %v5394
        %v5475 = vadd.f32 %v4897, %v5396
        %v5476 = vadd.f32 %v4898, %v5398
        %v5477 = vadd.f32 %v4899, %v5400
        %v5478 = vadd.f32 %v4900, %v5404
        %v5479 = vadd.f32 %v4901, %v5406
        %v5480 = vadd.f32 %v4902, %v5408
        %v5481 = vadd.f32 %v4903, %v5410
        %v5482 = vadd.f32 %v4904, %v5414
        %v5483 = vadd.f32 %v4905, %v5416
        %v5484 = vadd.f32 %v4906, %v5418
        %v5485 = vadd.f32 %v4907, %v5420
        %v5486 = vld [vmem:[%s2] sm:$0x3]
        %v5488 = vlaneseq
        %v5489 = vshrl.u32 %v5488, 7
        %v5490 = vsub.s32 0, %v5489
        %v5491 = vrot.slane %v5486, %v5490
        %v5492 = vlaneseq
        %v5493 = vshrl.u32 %v5492, 7
        %v5494 = vsub.s32 1, %v5493
        %v5495 = vrot.slane %v5486, %v5494
        %v5498 = vadd.f32 %v5422, %v5491
        %v5499 = vadd.f32 %v5423, %v5495
        %v5500 = vadd.f32 %v5424, %v5491
        %v5501 = vadd.f32 %v5425, %v5495
        %v5502 = vadd.f32 %v5426, %v5491
        %v5503 = vadd.f32 %v5427, %v5495
        %v5504 = vadd.f32 %v5428, %v5491
        %v5505 = vadd.f32 %v5429, %v5495
        %v5506 = vadd.f32 %v5430, %v5491
        %v5507 = vadd.f32 %v5431, %v5495
        %v5508 = vadd.f32 %v5432, %v5491
        %v5509 = vadd.f32 %v5433, %v5495
        %v5510 = vadd.f32 %v5434, %v5491
        %v5511 = vadd.f32 %v5435, %v5495
        %v5512 = vadd.f32 %v5436, %v5491
        %v5513 = vadd.f32 %v5437, %v5495
        %v5514 = vadd.f32 %v5438, %v5491
        %v5515 = vadd.f32 %v5439, %v5495
        %v5516 = vadd.f32 %v5440, %v5491
        %v5517 = vadd.f32 %v5441, %v5495
        %v5518 = vadd.f32 %v5442, %v5491
        %v5519 = vadd.f32 %v5443, %v5495
        %v5520 = vadd.f32 %v5444, %v5491
        %v5521 = vadd.f32 %v5445, %v5495
        %v5522 = vadd.f32 %v5446, %v5491
        %v5523 = vadd.f32 %v5447, %v5495
        %v5524 = vadd.f32 %v5448, %v5491
        %v5525 = vadd.f32 %v5449, %v5495
        %v5526 = vadd.f32 %v5450, %v5491
        %v5527 = vadd.f32 %v5451, %v5495
        %v5528 = vadd.f32 %v5452, %v5491
        %v5529 = vadd.f32 %v5453, %v5495
        %v5530 = vadd.f32 %v5454, %v5491
        %v5531 = vadd.f32 %v5455, %v5495
        %v5532 = vadd.f32 %v5456, %v5491
        %v5533 = vadd.f32 %v5457, %v5495
        %v5534 = vadd.f32 %v5458, %v5491
        %v5535 = vadd.f32 %v5459, %v5495
        %v5536 = vadd.f32 %v5460, %v5491
        %v5537 = vadd.f32 %v5461, %v5495
        %v5538 = vadd.f32 %v5462, %v5491
        %v5539 = vadd.f32 %v5463, %v5495
        %v5540 = vadd.f32 %v5464, %v5491
        %v5541 = vadd.f32 %v5465, %v5495
        %v5542 = vadd.f32 %v5466, %v5491
        %v5543 = vadd.f32 %v5467, %v5495
        %v5544 = vadd.f32 %v5468, %v5491
        %v5545 = vadd.f32 %v5469, %v5495
        %v5546 = vadd.f32 %v5470, %v5491
        %v5547 = vadd.f32 %v5471, %v5495
        %v5548 = vadd.f32 %v5472, %v5491
        %v5549 = vadd.f32 %v5473, %v5495
        %v5550 = vadd.f32 %v5474, %v5491
        %v5551 = vadd.f32 %v5475, %v5495
        %v5552 = vadd.f32 %v5476, %v5491
        %v5553 = vadd.f32 %v5477, %v5495
        %v5554 = vadd.f32 %v5478, %v5491
        %v5555 = vadd.f32 %v5479, %v5495
        %v5556 = vadd.f32 %v5480, %v5491
        %v5557 = vadd.f32 %v5481, %v5495
        %v5558 = vadd.f32 %v5482, %v5491
        %v5559 = vadd.f32 %v5483, %v5495
        %v5560 = vadd.f32 %v5484, %v5491
        %v5561 = vadd.f32 %v5485, %v5495
        %v5562 = vxor.u32 %v5499, 2147483648
        %v5563 = vxor.u32 %v5501, 2147483648
        %v5564 = vxor.u32 %v5503, 2147483648
        %v5565 = vxor.u32 %v5505, 2147483648
        %v5566 = vxor.u32 %v5507, 2147483648
        %v5567 = vxor.u32 %v5509, 2147483648
        %v5568 = vxor.u32 %v5511, 2147483648
        %v5569 = vxor.u32 %v5513, 2147483648
        %v5570 = vxor.u32 %v5515, 2147483648
        %v5571 = vxor.u32 %v5517, 2147483648
        %v5572 = vxor.u32 %v5519, 2147483648
        %v5573 = vxor.u32 %v5521, 2147483648
        %v5574 = vxor.u32 %v5523, 2147483648
        %v5575 = vxor.u32 %v5525, 2147483648
        %v5576 = vxor.u32 %v5527, 2147483648
        %v5577 = vxor.u32 %v5529, 2147483648
        %v5578 = vxor.u32 %v5531, 2147483648
        %v5579 = vxor.u32 %v5533, 2147483648
        %v5580 = vxor.u32 %v5535, 2147483648
        %v5581 = vxor.u32 %v5537, 2147483648
        %v5582 = vxor.u32 %v5539, 2147483648
        %v5583 = vxor.u32 %v5541, 2147483648
        %v5584 = vxor.u32 %v5543, 2147483648
        %v5585 = vxor.u32 %v5545, 2147483648
        %v5586 = vxor.u32 %v5547, 2147483648
        %v5587 = vxor.u32 %v5549, 2147483648
        %v5588 = vxor.u32 %v5551, 2147483648
        %v5589 = vxor.u32 %v5553, 2147483648
        %v5590 = vxor.u32 %v5555, 2147483648
        %v5591 = vxor.u32 %v5557, 2147483648
        %v5592 = vxor.u32 %v5559, 2147483648
        %v5593 = vxor.u32 %v5561, 2147483648
        %v5594 = vmul.f32 %v5562, 1.442695
        %v5595 = vpow.pop %v5594
        %v5596 = vmul.f32 %v5563, 1.442695
        %v5597 = vpow.pop %v5596
        %v5598 = vmul.f32 %v5564, 1.442695
        %v5599 = vpow.pop %v5598
        %v5600 = vmul.f32 %v5565, 1.442695
        %v5601 = vpow.pop %v5600
        %v5602 = vmul.f32 %v5566, 1.442695
        %v5603 = vpow.pop %v5602
        %v5604 = vmul.f32 %v5567, 1.442695
        %v5605 = vpow.pop %v5604
        %v5606 = vmul.f32 %v5568, 1.442695
        %v5607 = vpow.pop %v5606
        %v5608 = vmul.f32 %v5569, 1.442695
        %v5609 = vpow.pop %v5608
        %v5610 = vmul.f32 %v5570, 1.442695
        %v5611 = vpow.pop %v5610
        %v5612 = vmul.f32 %v5571, 1.442695
        %v5613 = vpow.pop %v5612
        %v5614 = vmul.f32 %v5572, 1.442695
        %v5615 = vpow.pop %v5614
        %v5616 = vmul.f32 %v5573, 1.442695
        %v5617 = vpow.pop %v5616
        %v5618 = vmul.f32 %v5574, 1.442695
        %v5619 = vpow.pop %v5618
        %v5620 = vmul.f32 %v5575, 1.442695
        %v5621 = vpow.pop %v5620
        %v5622 = vmul.f32 %v5576, 1.442695
        %v5623 = vpow.pop %v5622
        %v5624 = vmul.f32 %v5577, 1.442695
        %v5625 = vpow.pop %v5624
        %v5626 = vmul.f32 %v5578, 1.442695
        %v5627 = vpow.pop %v5626
        %v5628 = vmul.f32 %v5579, 1.442695
        %v5629 = vpow.pop %v5628
        %v5630 = vmul.f32 %v5580, 1.442695
        %v5631 = vpow.pop %v5630
        %v5632 = vmul.f32 %v5581, 1.442695
        %v5633 = vpow.pop %v5632
        %v5634 = vmul.f32 %v5582, 1.442695
        %v5635 = vpow.pop %v5634
        %v5636 = vmul.f32 %v5583, 1.442695
        %v5637 = vpow.pop %v5636
        %v5638 = vmul.f32 %v5584, 1.442695
        %v5639 = vpow.pop %v5638
        %v5640 = vmul.f32 %v5585, 1.442695
        %v5641 = vpow.pop %v5640
        %v5642 = vmul.f32 %v5586, 1.442695
        %v5643 = vpow.pop %v5642
        %v5644 = vmul.f32 %v5587, 1.442695
        %v5645 = vpow.pop %v5644
        %v5646 = vmul.f32 %v5588, 1.442695
        %v5647 = vpow.pop %v5646
        %v5648 = vmul.f32 %v5589, 1.442695
        %v5649 = vpow.pop %v5648
        %v5650 = vmul.f32 %v5590, 1.442695
        %v5651 = vpow.pop %v5650
        %v5652 = vmul.f32 %v5591, 1.442695
        %v5653 = vpow.pop %v5652
        %v5654 = vmul.f32 %v5592, 1.442695
        %v5655 = vpow.pop %v5654
        %v5656 = vmul.f32 %v5593, 1.442695
        %v5657 = vpow.pop %v5656
        %v5658 = vadd.f32 %v5595, 1.0
        %v5659 = vadd.f32 %v5597, 1.0
        %v5660 = vadd.f32 %v5599, 1.0
        %v5661 = vadd.f32 %v5601, 1.0
        %v5662 = vadd.f32 %v5603, 1.0
        %v5663 = vadd.f32 %v5605, 1.0
        %v5664 = vadd.f32 %v5607, 1.0
        %v5665 = vadd.f32 %v5609, 1.0
        %v5666 = vadd.f32 %v5611, 1.0
        %v5667 = vadd.f32 %v5613, 1.0
        %v5668 = vadd.f32 %v5615, 1.0
        %v5669 = vadd.f32 %v5617, 1.0
        %v5670 = vadd.f32 %v5619, 1.0
        %v5671 = vadd.f32 %v5621, 1.0
        %v5672 = vadd.f32 %v5623, 1.0
        %v5673 = vadd.f32 %v5625, 1.0
        %v5674 = vadd.f32 %v5627, 1.0
        %v5675 = vadd.f32 %v5629, 1.0
        %v5676 = vadd.f32 %v5631, 1.0
        %v5677 = vadd.f32 %v5633, 1.0
        %v5678 = vadd.f32 %v5635, 1.0
        %v5679 = vadd.f32 %v5637, 1.0
        %v5680 = vadd.f32 %v5639, 1.0
        %v5681 = vadd.f32 %v5641, 1.0
        %v5682 = vadd.f32 %v5643, 1.0
        %v5683 = vadd.f32 %v5645, 1.0
        %v5684 = vadd.f32 %v5647, 1.0
        %v5685 = vadd.f32 %v5649, 1.0
        %v5686 = vadd.f32 %v5651, 1.0
        %v5687 = vadd.f32 %v5653, 1.0
        %v5688 = vadd.f32 %v5655, 1.0
        %v5689 = vadd.f32 %v5657, 1.0
        %v5690 = vrcp.pop %v5658
        %v5691 = vmul.f32 1.0, %v5690
        %v5692 = vrcp.pop %v5659
        %v5693 = vmul.f32 1.0, %v5692
        %v5694 = vrcp.pop %v5660
        %v5695 = vmul.f32 1.0, %v5694
        %v5696 = vrcp.pop %v5661
        %v5697 = vmul.f32 1.0, %v5696
        %v5698 = vrcp.pop %v5662
        %v5699 = vmul.f32 1.0, %v5698
        %v5700 = vrcp.pop %v5663
        %v5701 = vmul.f32 1.0, %v5700
        %v5702 = vrcp.pop %v5664
        %v5703 = vmul.f32 1.0, %v5702
        %v5704 = vrcp.pop %v5665
        %v5705 = vmul.f32 1.0, %v5704
        %v5706 = vrcp.pop %v5666
        %v5707 = vmul.f32 1.0, %v5706
        %v5708 = vrcp.pop %v5667
        %v5709 = vmul.f32 1.0, %v5708
        %v5710 = vrcp.pop %v5668
        %v5711 = vmul.f32 1.0, %v5710
        %v5712 = vrcp.pop %v5669
        %v5713 = vmul.f32 1.0, %v5712
        %v5714 = vrcp.pop %v5670
        %v5715 = vmul.f32 1.0, %v5714
        %v5716 = vrcp.pop %v5671
        %v5717 = vmul.f32 1.0, %v5716
        %v5718 = vrcp.pop %v5672
        %v5719 = vmul.f32 1.0, %v5718
        %v5720 = vrcp.pop %v5673
        %v5721 = vmul.f32 1.0, %v5720
        %v5722 = vrcp.pop %v5674
        %v5723 = vmul.f32 1.0, %v5722
        %v5724 = vrcp.pop %v5675
        %v5725 = vmul.f32 1.0, %v5724
        %v5726 = vrcp.pop %v5676
        %v5727 = vmul.f32 1.0, %v5726
        %v5728 = vrcp.pop %v5677
        %v5729 = vmul.f32 1.0, %v5728
        %v5730 = vrcp.pop %v5678
        %v5731 = vmul.f32 1.0, %v5730
        %v5732 = vrcp.pop %v5679
        %v5733 = vmul.f32 1.0, %v5732
        %v5734 = vrcp.pop %v5680
        %v5735 = vmul.f32 1.0, %v5734
        %v5736 = vrcp.pop %v5681
        %v5737 = vmul.f32 1.0, %v5736
        %v5738 = vrcp.pop %v5682
        %v5739 = vmul.f32 1.0, %v5738
        %v5740 = vrcp.pop %v5683
        %v5741 = vmul.f32 1.0, %v5740
        %v5742 = vrcp.pop %v5684
        %v5743 = vmul.f32 1.0, %v5742
        %v5744 = vrcp.pop %v5685
        %v5745 = vmul.f32 1.0, %v5744
        %v5746 = vrcp.pop %v5686
        %v5747 = vmul.f32 1.0, %v5746
        %v5748 = vrcp.pop %v5687
        %v5749 = vmul.f32 1.0, %v5748
        %v5750 = vrcp.pop %v5688
        %v5751 = vmul.f32 1.0, %v5750
        %v5752 = vrcp.pop %v5689
        %v5753 = vmul.f32 1.0, %v5752
        %v5754 = vmul.f32 %v5498, %v5691
        %v5755 = vmul.f32 %v5500, %v5693
        %v5756 = vmul.f32 %v5502, %v5695
        %v5757 = vmul.f32 %v5504, %v5697
        %v5758 = vmul.f32 %v5506, %v5699
        %v5759 = vmul.f32 %v5508, %v5701
        %v5760 = vmul.f32 %v5510, %v5703
        %v5761 = vmul.f32 %v5512, %v5705
        %v5762 = vmul.f32 %v5514, %v5707
        %v5763 = vmul.f32 %v5516, %v5709
        %v5764 = vmul.f32 %v5518, %v5711
        %v5765 = vmul.f32 %v5520, %v5713
        %v5766 = vmul.f32 %v5522, %v5715
        %v5767 = vmul.f32 %v5524, %v5717
        %v5768 = vmul.f32 %v5526, %v5719
        %v5769 = vmul.f32 %v5528, %v5721
        %v5770 = vmul.f32 %v5530, %v5723
        %v5771 = vmul.f32 %v5532, %v5725
        %v5772 = vmul.f32 %v5534, %v5727
        %v5773 = vmul.f32 %v5536, %v5729
        %v5774 = vmul.f32 %v5538, %v5731
        %v5775 = vmul.f32 %v5540, %v5733
        %v5776 = vmul.f32 %v5542, %v5735
        %v5777 = vmul.f32 %v5544, %v5737
        %v5778 = vmul.f32 %v5546, %v5739
        %v5779 = vmul.f32 %v5548, %v5741
        %v5780 = vmul.f32 %v5550, %v5743
        %v5781 = vmul.f32 %v5552, %v5745
        %v5782 = vmul.f32 %v5554, %v5747
        %v5783 = vmul.f32 %v5556, %v5749
        %v5784 = vmul.f32 %v5558, %v5751
        %v5785 = vmul.f32 %v5560, %v5753
        %5786 = vst [vmem:[%s177] sm:$0xff] %v5754
        %5787 = vst [vmem:[%s177 + $0x8] sm:$0xff] %v5755
        %5788 = vst [vmem:[%s177 + $0x10] sm:$0xff] %v5756
        %5789 = vst [vmem:[%s177 + $0x18] sm:$0xff] %v5757
        %5790 = vst [vmem:[%s177 + $0x20] sm:$0xff] %v5758
        %5791 = vst [vmem:[%s177 + $0x28] sm:$0xff] %v5759
        %5792 = vst [vmem:[%s177 + $0x30] sm:$0xff] %v5760
        %5793 = vst [vmem:[%s177 + $0x38] sm:$0xff] %v5761
        %5794 = vst [vmem:[%s177 + $0x40] sm:$0xff] %v5762
        %5795 = vst [vmem:[%s177 + $0x48] sm:$0xff] %v5763
        %5796 = vst [vmem:[%s177 + $0x50] sm:$0xff] %v5764
        %5797 = vst [vmem:[%s177 + $0x58] sm:$0xff] %v5765
        %5798 = vst [vmem:[%s177 + $0x60] sm:$0xff] %v5766
        %5799 = vst [vmem:[%s177 + $0x68] sm:$0xff] %v5767
        %5800 = vst [vmem:[%s177 + $0x70] sm:$0xff] %v5768
        %5801 = vst [vmem:[%s177 + $0x78] sm:$0xff] %v5769
        %5802 = vst [vmem:[%s177 + $0x80] sm:$0xff] %v5770
        %5803 = vst [vmem:[%s177 + $0x88] sm:$0xff] %v5771
        %5804 = vst [vmem:[%s177 + $0x90] sm:$0xff] %v5772
        %5805 = vst [vmem:[%s177 + $0x98] sm:$0xff] %v5773
        %5806 = vst [vmem:[%s177 + $0xa0] sm:$0xff] %v5774
        %5807 = vst [vmem:[%s177 + $0xa8] sm:$0xff] %v5775
        %5808 = vst [vmem:[%s177 + $0xb0] sm:$0xff] %v5776
        %5809 = vst [vmem:[%s177 + $0xb8] sm:$0xff] %v5777
        %5810 = vst [vmem:[%s177 + $0xc0] sm:$0xff] %v5778
        %5811 = vst [vmem:[%s177 + $0xc8] sm:$0xff] %v5779
        %5812 = vst [vmem:[%s177 + $0xd0] sm:$0xff] %v5780
        %5813 = vst [vmem:[%s177 + $0xd8] sm:$0xff] %v5781
        %5814 = vst [vmem:[%s177 + $0xe0] sm:$0xff] %v5782
        %5815 = vst [vmem:[%s177 + $0xe8] sm:$0xff] %v5783
        %5816 = vst [vmem:[%s177 + $0xf0] sm:$0xff] %v5784
        %5817 = vst [vmem:[%s177 + $0xf8] sm:$0xff] %v5785
        %s5818 = sand.u32 %s107, 1
        %s5819 = scalar_lea.sflag [#allocation3], %s5818
        %s5820 = sand.u32 %s107, 1
        %s5821 = smul.addr %s5820, 256
        %s5822 = scalar_lea.vmem [#allocation2], %s5821
        // Predicated region
        $region33: #{tpu_custom_call.1} parent=31 // pred_check
          %p5823 = pneg %p117
        $region34: #{tpu_custom_call.1} parent=31 // pred_check_branch
          %5825 = sbr.rel (%p5823) target = $region36
        $region35: #{tpu_custom_call.1} parent=31 // pred_region
          %s5826 = smul.u32 16, %s22
          %s5828 = ssub.s32 4096, 4096
          %5829 = vsyncadd %s5819, %s5828
          %s5830 = smul.addr %s5826, 2
          %s5831 = smul.addr %s21, 32
          %s5832 = sadd.s32 %s5830, %s5831
          %s5833 = smul.addr %s5832, 128
          %s5834 = scalar_lea.hbm %s3, %s5833
          %s5835 = sshll.u32 %s5822, 4
          %s5836 = int_to_ptr.vmem [resolvable:$true] %s5835
          %5841 = dma.vmem_to_hbm [thread:$0]  %s5836, 4096, %s5834, %s5819, 128, 128, 8
        $region36: #{tpu_custom_call.1} parent=31 // pred_fallthru
          _
      $region32: #{tpu_custom_call.1} parent=5 // pred_fallthru
        _
      %p5842 = scmp.le.s32.totalorder 2, %s12
      // Predicated region
      $region37: #{tpu_custom_call.1} parent=5 // pred_check
        %p5843 = pneg %p5842
      $region38: #{tpu_custom_call.1} parent=5 // pred_check_branch
        %5845 = sbr.rel (%p5843) target = $region40
      $region39: #{tpu_custom_call.1} parent=5 // pred_region
        %s5846 = ssub.s32 %s12, 2
        // Predicated region
        $region41: #{tpu_custom_call.1} parent=39 // pred_check
          %p5847 = pneg %p123
        $region42: #{tpu_custom_call.1} parent=39 // pred_check_branch
          %5849 = sbr.rel (%p5847) target = $region44
        $region43: #{tpu_custom_call.1} parent=39 // pred_region
          %s5850 = sand.u32 %s108, 1
          %s5851 = scalar_lea.sflag [#allocation3], %s5850
          %s5852 = sand.u32 %s108, 1
          %s5853 = smul.addr %s5852, 256
          %s5854 = scalar_lea.vmem [#allocation2], %s5853
          %5855 = dma.done %s5851, 4096
        $region44: #{tpu_custom_call.1} parent=39 // pred_fallthru
          _
      $region40: #{tpu_custom_call.1} parent=5 // pred_fallthru
        _
    $region6: #{tpu_custom_call.1} parent=1 // loop_footer
      %s16 = sadd.s32 1, %s12
    $region7: #{tpu_custom_call.1} parent=1 // loop_footer_branch
      %11 = sbr.rel target = $region3
    $region8: #{tpu_custom_call.1} parent=1 // loop_exit
      _
    %5856 = vsyncpa [#allocation3], 1
    %s5857 = scalar_lea.sflag [#allocation3], 1
    %5858 = vsyncpa %s5857, 1

</llo_original>
